<compile_context>
chip_gen: v7x
topology: tpu7x:2x2x1
jax: 0.10.0
libtpu: 0.0.40
codegen_flags: <defaults>
</compile_context>

<pallas_src>
import jax
import jax.numpy as jnp
import numpy as np
from jax.experimental import pallas as pl
from jax.experimental.pallas import tpu as pltpu

Z_DIM = 16      # latent size
H_DIM2 = 64     # fc4/fc6 hidden size (declared in __init__, unused in forward)
X_DIM = 784
B_TILE = 4      # images packed per grid step (rows stacked along the MXU M dimension)
BATCH = 8       # demo batch -> grid of 2 parallel steps

_LANE = 256         # padded lane width of all intermediate activations
_CONST_LANE = 224   # lane carrying the 1.0 constant used for bias folding


# ---------------------------------------------------------------------------
# Fused decoder kernel (one grid step = B_TILE batch elements)
# ---------------------------------------------------------------------------
def _decoder_kernel(z_ref, fcw_ref, a1_ref, p1_ref, a2_ref, p2_ref, a3_ref,
                    o_ref, sh1_ref, sh2_ref, sh3_ref):
    f32 = jnp.float32
    bf16 = jnp.bfloat16

    # --- Linear(z_dim, 32*7*7) (+bias, folded) + ReLU, emitted as NHWC image rows.
    # z block: (1, B*7, 128); lanes y*16..y*16+15 hold z for image-row y, lane 112+y = 1.0.
    img = jnp.dot(z_ref[0], fcw_ref[...], preferred_element_type=f32)   # (B*7, 256)
    img = jnp.maximum(img, 0.0)            # lane 224 stays 1.0, lanes 225.. stay 0.0

    def up_block(x, a_ref, p_ref, sh_ref, h_in):
        # ConvTranspose2d(k=3, s=2, p=1, op=1) + ReLU on batch-stacked rows (B*h_in, 256).
        m = B_TILE * h_in
        sh_ref[0:m, :] = x                  # scratch round-trip = row shift (off the MXU)
        l1 = sh_ref[1:m + 1, :]             # row r+1 view (last row of each image is junk)
        r = jax.lax.broadcasted_iota(jnp.int32, (m, _LANE), 0)
        mask = r != (h_in - 1)
        for b in range(1, B_TILE):
            mask = mask & (r != (b * h_in + h_in - 1))
        l1 = jnp.where(mask, l1, 0.0)       # zero the shifted row at every image boundary
        l0b = x.astype(bf16)
        l1b = l1.astype(bf16)
        # Row-pair matrices: layer bias + constant-lane propagation folded into a_ref[0, :].
        ev = (jnp.dot(l0b, a_ref[0, 0], preferred_element_type=f32) +
              jnp.dot(l1b, a_ref[1, 0], preferred_element_type=f32))
        od = (jnp.dot(l0b, a_ref[0, 1], preferred_element_type=f32) +
              jnp.dot(l1b, a_ref[1, 1], preferred_element_type=f32))
        ev = jnp.maximum(ev, 0.0).astype(bf16)
        od = jnp.maximum(od, 0.0).astype(bf16)
        # Even/odd output-row interleave as block-diagonal 0/1 matmuls (exact in bf16).
        return (jnp.dot(p_ref[0], ev, preferred_element_type=f32) +
                jnp.dot(p_ref[1], od, preferred_element_type=f32))

    img = up_block(img, a1_ref, p1_ref, sh1_ref, 7)     # (B*14, 256) == 14x14x16 rows
    img = up_block(img, a2_ref, p2_ref, sh2_ref, 14)    # (B*28, 256) == 28x28x8 rows

    # --- ConvTranspose2d(8, 1, k=3, stride=1, padding=1) + Tanh, fused into one wide dot.
    m3 = B_TILE * 28
    t = jnp.dot(img.astype(bf16), a3_ref[...], preferred_element_type=f32)   # (B*28, 384)
    sh3_ref[1:m3 + 1, :] = t
    prv = sh3_ref[0:m3, 0:128]            # t[r-1] tap block (first row of each image junk)
    nxt = sh3_ref[2:m3 + 2, 256:384]      # t[r+1] tap block (last row of each image junk)
    r = jax.lax.broadcasted_iota(jnp.int32, (m3, 128), 0)
    mp = r != 0
    mn = r != 27
    for b in range(1, B_TILE):
        mp = mp & (r != b * 28)
        mn = mn & (r != b * 28 + 27)
    out = jnp.where(mp, prv, 0.0) + t[:, 128:256] + jnp.where(mn, nxt, 0.0)
    o_ref[0] = jnp.tanh(out)              # lanes 0..27 = image row, lanes 28..127 = 0


def _const_index_map(ndim):
    zeros = (0,) * ndim
    return lambda i: zeros


def decoder_forward(z, p):
    """z is a tuple/list; z[0] is the latent tensor (matches `z[0].view(-1, z_dim)`)."""
    z0 = jnp.asarray(z[0], jnp.float32).reshape(-1, Z_DIM)
    n = z0.shape[0]
    nsteps = max(1, pl.cdiv(n, B_TILE))
    n_pad = nsteps * B_TILE
    if n_pad != n:
        z0 = jnp.pad(z0, ((0, n_pad - n), (0, 0)))

    # Pre-expand z to its block-diagonal (7, 128) row form (+ the 1.0 bias column) in XLA.
    zbd = jnp.einsum("bk,ykc->byc", z0, p["z_expand"],
                     precision=jax.lax.Precision.HIGHEST) + p["z_const"][None]
    zbd = zbd.reshape(nsteps, B_TILE * 7, 128).astype(jnp.bfloat16)

    weights = (p["fc_w"], p["a1"], p["p1"], p["a2"], p["p2"], p["a3"])
    weight_specs = [pl.BlockSpec(tuple(w.shape), _const_index_map(w.ndim)) for w in weights]

    out = pl.pallas_call(
        _decoder_kernel,
        out_shape=jax.ShapeDtypeStruct((nsteps, B_TILE * 28, 128), jnp.float32),
        grid=(nsteps,),
        in_specs=[pl.BlockSpec((1, B_TILE * 7, 128), lambda i: (i, 0, 0))] + weight_specs,
        out_specs=pl.BlockSpec((1, B_TILE * 28, 128), lambda i: (i, 0, 0)),
        scratch_shapes=[
            pltpu.VMEM((B_TILE * 7 + 8, _LANE), jnp.float32),
            pltpu.VMEM((B_TILE * 14 + 8, _LANE), jnp.float32),
            pltpu.VMEM((B_TILE * 28 + 8, 384), jnp.float32),
        ],
        compiler_params=pltpu.CompilerParams(dimension_semantics=("parallel",)),
    )(zbd, *weights)

    out = out.reshape(n_pad, 28, 128)[:n, :, :28]
    # Matches torch's h.view(-1, 1, 28, 28).
    return out.reshape(n, 1, 28, 28)


# ---------------------------------------------------------------------------
# Host-side construction of the derived (kernel-friendly) parameters
# ---------------------------------------------------------------------------
def _deconv_nobias(x_nchw, wt, stride, pad, opad):
    # ConvTranspose2d(k=3) as a dilated conv with the flipped / channel-swapped kernel.
    w = jnp.flip(wt, axis=(2, 3)).transpose(1, 0, 2, 3)              # (Cout, Cin, 3, 3)
    lo = 2 - pad
    hi = lo + opad
    return jax.lax.conv_general_dilated(
        x_nchw, w, window_strides=(1, 1), padding=[(lo, hi), (lo, hi)],
        lhs_dilation=(stride, stride),
        dimension_numbers=("NCHW", "OIHW", "NCHW"),
        precision=jax.lax.Precision.HIGHEST)


def _rowpair_matrix(wt, w_in):
    # Dense matrix of ConvTranspose2d(stride=2, pad=1, out_pad=1) restricted to one output
    # row-pair: maps [x[m]; x[m+1]] (NHWC row-major) -> [y[2m]; y[2m+1]].  Exact (built by
    # pushing basis vectors through the reference deconv).
    cin, cout = wt.shape[0], wt.shape[1]
    k = 2 * w_in * cin
    nh = 2 * w_in * cout

    def f(e):
        x = e.reshape(2, w_in, cin).transpose(2, 0, 1)[None]         # (1, Cin, 2, W)
        y = _deconv_nobias(x, wt, 2, 1, 1)                           # (1, Cout, 4, 2W)
        return y[0, :, :2, :].transpose(1, 2, 0).reshape(-1)

    a = jax.vmap(f)(jnp.eye(k, dtype=jnp.float32))
    # -> [input row-of-pair, output half (even/odd), K, N]
    return a.reshape(2, w_in * cin, 2, nh).transpose(0, 2, 1, 3)


def _lastconv_matrix(wt, w_in):
    # Dense matrix of ConvTranspose2d(stride=1, pad=1) for one output row:
    # maps [x[r-1]; x[r]; x[r+1]] -> y[r].
    cin, cout = wt.shape[0], wt.shape[1]
    k = 3 * w_in * cin

    def f(e):
        x = e.reshape(3, w_in, cin).transpose(2, 0, 1)[None]         # (1, Cin, 3, W)
        y = _deconv_nobias(x, wt, 1, 1, 0)                           # (1, Cout, 3, W)
        return y[0, :, 1, :].transpose(1, 0).reshape(-1)

    a = jax.vmap(f)(jnp.eye(k, dtype=jnp.float32))
    return a.reshape(3, w_in * cin, w_in * cout)


def _pad_rowpair(a, bias, w_out):
    # (2,2,224,224) -> (2,2,256,256) with the layer bias folded into row 224 of the l0 half
    # and a 1.0 at [224,224] so the constant lane survives into the next layer.
    a = np.asarray(a, np.float32)
    out = np.zeros((2, 2, _LANE, _LANE), np.float32)
    out[:, :, :224, :224] = a
    bt = np.tile(np.asarray(bias, np.float32), w_out)                # NHWC-tiled bias (224,)
    out[0, :, _CONST_LANE, :224] = bt
    out[0, :, _CONST_LANE, _CONST_LANE] = 1.0
    return out


def _pad_lastconv(a3, b3):
    # (3,224,28) taps packed into lane-tile-aligned 128-wide blocks of one (256,384) matrix;
    # the bias rides on the (never-masked) centre block via the constant lane.
    a3 = np.asarray(a3, np.float32)
    out = np.zeros((_LANE, 384), np.float32)
    out[:224, 0:28] = a3[0]          # x[r-1] -> y[r]
    out[:224, 128:156] = a3[1]       # x[r]   -> y[r]
    out[:224, 256:284] = a3[2]       # x[r+1] -> y[r]
    out[_CONST_LANE, 128:156] = float(np.asarray(b3)[0])
    return out


def _interleave_mats(h, b_tile):
    # Block-diagonal 0/1 matrices interleaving even/odd output rows per image in a batch tile.
    rows, cols = 2 * h * b_tile, h * b_tile
    pe = np.zeros((rows, cols), np.float32)
    po = np.zeros((rows, cols), np.float32)
    for b in range(b_tile):
        for m in range(h):
            pe[b * 2 * h + 2 * m, b * h + m] = 1.0
            po[b * 2 * h + 2 * m + 1, b * h + m] = 1.0
    return np.stack([pe, po])


def init_params(key):
    ks = jax.random.split(key, 12)

    def u(k, shape, fan_in):
        bound = 1.0 / np.sqrt(fan_in)
        return jax.random.uniform(k, shape, jnp.float32, -bound, bound)

    p = {}
    # nn.Linear(z_dim, 32*7*7): weight (1568, z_dim), bias (1568,)
    p["w_fc"] = u(ks[0], (32 * 7 * 7, Z_DIM), Z_DIM)
    p["b_fc"] = u(ks[1], (32 * 7 * 7,), Z_DIM)
    # nn.ConvTranspose2d weights have torch shape (Cin, Cout, kH, kW)
    p["wt1"] = u(ks[2], (32, 16, 3, 3), 32 * 9)
    p["b1"] = u(ks[3], (16,), 32 * 9)
    p["wt2"] = u(ks[4], (16, 8, 3, 3), 16 * 9)
    p["b2"] = u(ks[5], (8,), 16 * 9)
    p["wt3"] = u(ks[6], (8, 1, 3, 3), 8 * 9)
    p["b3"] = u(ks[7], (1,), 8 * 9)
    # fc4 / fc6 are declared in the PyTorch __init__ but never used in forward().
    p["w_fc4"] = u(ks[8], (H_DIM2, Z_DIM), Z_DIM)
    p["b_fc4"] = u(ks[9], (H_DIM2,), Z_DIM)
    p["w_fc6"] = u(ks[10], (X_DIM, H_DIM2), H_DIM2)
    p["b_fc6"] = u(ks[11], (X_DIM,), H_DIM2)

    # ----- derived, kernel-friendly parameters (exact f32 assembly, cast to bf16) -----
    # fc folded so its output is NHWC image rows (7, 224); bias rows + constant column
    # appended so the whole Linear(+bias) is a single bf16 MXU dot.
    fcw = np.zeros((128, 256), np.float32)
    fcw[:112, :224] = np.asarray(
        p["w_fc"].T.reshape(Z_DIM, 32, 7, 7).transpose(2, 0, 3, 1).reshape(7 * Z_DIM, 7 * 32))
    fcw[112:119, :224] = np.asarray(p["b_fc"]).reshape(32, 7, 7).transpose(1, 2, 0).reshape(7, 224)
    fcw[112:119, _CONST_LANE] = 1.0
    p["fc_w"] = jnp.asarray(fcw, jnp.bfloat16)

    # z -> block-diagonal (7, 128) expansion, done in the XLA wrapper with these constants.
    ze = np.zeros((7, Z_DIM, 128), np.float32)
    zc = np.zeros((7, 128), np.float32)
    for y in range(7):
        ze[y, np.arange(Z_DIM), y * Z_DIM + np.arange(Z_DIM)] = 1.0
        zc[y, 112 + y] = 1.0
    p["z_expand"] = jnp.asarray(ze)
    p["z_const"] = jnp.asarray(zc)

    # Transposed-conv row-pair matrices (zero-free subpixel form), padded 224->256 with the
    # layer bias + constant propagation folded in, bf16 for the MXU.
    p["a1"] = jnp.asarray(_pad_rowpair(_rowpair_matrix(p["wt1"], 7), p["b1"], 14), jnp.bfloat16)
    p["a2"] = jnp.asarray(_pad_rowpair(_rowpair_matrix(p["wt2"], 14), p["b2"], 28), jnp.bfloat16)
    p["a3"] = jnp.asarray(_pad_lastconv(_lastconv_matrix(p["wt3"], 28), p["b3"]), jnp.bfloat16)

    # Block-diagonal even/odd row-interleave matrices for a B_TILE batch tile (0/1, exact).
    p["p1"] = jnp.asarray(_interleave_mats(7, B_TILE), jnp.bfloat16)
    p["p2"] = jnp.asarray(_interleave_mats(14, B_TILE), jnp.bfloat16)
    return p


# ---------------------------------------------------------------------------
# Pure-JAX/XLA reference (NCHW, mirrors the PyTorch ops) for validation
# ---------------------------------------------------------------------------
def reference_forward(z, p):
    z0 = jnp.asarray(z[0], jnp.float32).reshape(-1, Z_DIM)
    h = jnp.dot(z0, p["w_fc"].T, precision=jax.lax.Precision.HIGHEST) + p["b_fc"]
    h = jnp.maximum(h.reshape(-1, 32, 7, 7), 0.0)
    h = jnp.maximum(_deconv_nobias(h, p["wt1"], 2, 1, 1)
                    + p["b1"].reshape(1, -1, 1, 1), 0.0)
    h = jnp.maximum(_deconv_nobias(h, p["wt2"], 2, 1, 1)
                    + p["b2"].reshape(1, -1, 1, 1), 0.0)
    h = jnp.tanh(_deconv_nobias(h, p["wt3"], 1, 1, 0)
                 + p["b3"].reshape(1, -1, 1, 1))
    return h.reshape(-1, 1, 28, 28)


if __name__ == "__main__":
    key = jax.random.PRNGKey(0)
    pkey, zkey = jax.random.split(key)
    params = init_params(pkey)
    # PyTorch forward does `z[0].view(-1, z_dim)`, so pass z as a tuple.
    z = (jax.random.normal(zkey, (BATCH, Z_DIM), jnp.float32),)

    out = jax.block_until_ready(decoder_forward(z, params))
    assert out.shape == (BATCH, 1, 28, 28), out.shape

    ref = jax.block_until_ready(reference_forward(z, params))
    # All MXU operands (weights, biases, activations) are bf16 with f32 accumulation; the
    # reference runs in f32 HIGHEST, hence the bf16-quantization tolerance.
    np.testing.assert_allclose(np.asarray(out), np.asarray(ref), rtol=2e-2, atol=3e-2)

    print("KERNEL_OK")
</pallas_src>

<mosaic_0001>
module attributes {stable_mosaic.version = 11 : i64} {
  func.func @_decoder_kernel(%arg0: i32, %arg1: memref<1x28x128xbf16, #tpu.memory_space<vmem>>, %arg2: memref<128x256xbf16, #tpu.memory_space<vmem>>, %arg3: memref<2x2x256x256xbf16, #tpu.memory_space<vmem>>, %arg4: memref<2x56x28xbf16, #tpu.memory_space<vmem>>, %arg5: memref<2x2x256x256xbf16, #tpu.memory_space<vmem>>, %arg6: memref<2x112x56xbf16, #tpu.memory_space<vmem>>, %arg7: memref<256x384xbf16, #tpu.memory_space<vmem>>, %arg8: memref<1x112x128xf32, #tpu.memory_space<vmem>>, %arg9: memref<36x256xf32, #tpu.memory_space<vmem>>, %arg10: memref<64x256xf32, #tpu.memory_space<vmem>>, %arg11: memref<120x384xf32, #tpu.memory_space<vmem>>) attributes {dimension_semantics = [#tpu.dimension_semantics<parallel>], iteration_bounds = array<i64: 2>, scalar_prefetch = 0 : i64, scratch_operands = 3 : i64, tpu.core_type = #tpu.core_type<tc>, window_params = [{transform_indices = @transform_0, window_bounds = array<i64: 1, 28, 128>}, {pipeline_mode = #tpu.pipeline_mode<synchronous>, transform_indices = @transform_1, window_bounds = array<i64: 128, 256>}, {pipeline_mode = #tpu.pipeline_mode<synchronous>, transform_indices = @transform_2, window_bounds = array<i64: 2, 2, 256, 256>}, {pipeline_mode = #tpu.pipeline_mode<synchronous>, transform_indices = @transform_3, window_bounds = array<i64: 2, 56, 28>}, {pipeline_mode = #tpu.pipeline_mode<synchronous>, transform_indices = @transform_4, window_bounds = array<i64: 2, 2, 256, 256>}, {pipeline_mode = #tpu.pipeline_mode<synchronous>, transform_indices = @transform_5, window_bounds = array<i64: 2, 112, 56>}, {pipeline_mode = #tpu.pipeline_mode<synchronous>, transform_indices = @transform_6, window_bounds = array<i64: 256, 384>}, {transform_indices = @transform_7, window_bounds = array<i64: 1, 112, 128>}]} {
    %c0 = arith.constant 0 : index
    %c0_0 = arith.constant 0 : index
    %c0_1 = arith.constant 0 : index
    %0 = vector.load %arg1[%c0, %c0_0, %c0_1] : memref<1x28x128xbf16, #tpu.memory_space<vmem>>, vector<1x28x128xbf16>
    %1 = vector.shape_cast %0 : vector<1x28x128xbf16> to vector<28x128xbf16>
    %c0_2 = arith.constant 0 : index
    %c0_3 = arith.constant 0 : index
    %2 = vector.load %arg2[%c0_2, %c0_3] : memref<128x256xbf16, #tpu.memory_space<vmem>>, vector<128x256xbf16>
    %cst = arith.constant dense<0.000000e+00> : vector<28x256xf32>
    %3 = tpu.matmul %1, %2, %cst {dimension_numbers = #tpu.dot_dimension_numbers<[1], [0], [0], [1], [0, 0, 1, 1], [], []>} : vector<28x128xbf16>, vector<128x256xbf16>, vector<28x256xf32> -> vector<28x256xf32>
    %cst_4 = arith.constant 0.000000e+00 : f32
    %4 = vector.broadcast %cst_4 : f32 to vector<28x256xf32>
    %5 = arith.maximumf %3, %4 : vector<28x256xf32>
    %c0_5 = arith.constant 0 : index
    %c0_6 = arith.constant 0 : index
    %6 = vector.load %arg9[%c0_5, %c0_6] : memref<36x256xf32, #tpu.memory_space<vmem>>, vector<28x256xf32>
    tpu.vector_store %arg9[%c0_5, %c0_6], %5 {strides = array<i32>} : memref<36x256xf32, #tpu.memory_space<vmem>>, vector<28x256xf32>,
    %c1 = arith.constant 1 : index
    %c0_7 = arith.constant 0 : index
    %7 = vector.load %arg9[%c1, %c0_7] : memref<36x256xf32, #tpu.memory_space<vmem>>, vector<28x256xf32>
    %8 = tpu.iota {dimensions = array<i32: 0>} : vector<28x256xi32>
    %c6_i32 = arith.constant 6 : i32
    %9 = vector.broadcast %c6_i32 : i32 to vector<28x256xi32>
    %10 = arith.cmpi ne, %8, %9 : vector<28x256xi32>
    %c13_i32 = arith.constant 13 : i32
    %11 = vector.broadcast %c13_i32 : i32 to vector<28x256xi32>
    %12 = arith.cmpi ne, %8, %11 : vector<28x256xi32>
    %13 = arith.andi %10, %12 : vector<28x256xi1>
    %c20_i32 = arith.constant 20 : i32
    %14 = vector.broadcast %c20_i32 : i32 to vector<28x256xi32>
    %15 = arith.cmpi ne, %8, %14 : vector<28x256xi32>
    %16 = arith.andi %13, %15 : vector<28x256xi1>
    %c27_i32 = arith.constant 27 : i32
    %17 = vector.broadcast %c27_i32 : i32 to vector<28x256xi32>
    %18 = arith.cmpi ne, %8, %17 : vector<28x256xi32>
    %19 = arith.andi %16, %18 : vector<28x256xi1>
    %cst_8 = arith.constant 0.000000e+00 : f32
    %20 = vector.broadcast %cst_8 : f32 to vector<28x256xf32>
    %21 = arith.select %19, %7, %20 : vector<28x256xi1>, vector<28x256xf32>
    %22 = arith.truncf %5 : vector<28x256xf32> to vector<28x256xbf16>
    %23 = arith.truncf %21 : vector<28x256xf32> to vector<28x256xbf16>
    %c0_9 = arith.constant 0 : index
    %c0_10 = arith.constant 0 : index
    %c0_11 = arith.constant 0 : index
    %c0_12 = arith.constant 0 : index
    %24 = vector.load %arg3[%c0_9, %c0_10, %c0_11, %c0_12] : memref<2x2x256x256xbf16, #tpu.memory_space<vmem>>, vector<1x1x256x256xbf16>
    %25 = vector.shape_cast %24 : vector<1x1x256x256xbf16> to vector<256x256xbf16>
    %cst_13 = arith.constant dense<0.000000e+00> : vector<28x256xf32>
    %26 = tpu.matmul %22, %25, %cst_13 {dimension_numbers = #tpu.dot_dimension_numbers<[1], [0], [0], [1], [0, 0, 1, 1], [], []>} : vector<28x256xbf16>, vector<256x256xbf16>, vector<28x256xf32> -> vector<28x256xf32>
    %c1_14 = arith.constant 1 : index
    %c0_15 = arith.constant 0 : index
    %c0_16 = arith.constant 0 : index
    %c0_17 = arith.constant 0 : index
    %27 = vector.load %arg3[%c1_14, %c0_15, %c0_16, %c0_17] : memref<2x2x256x256xbf16, #tpu.memory_space<vmem>>, vector<1x1x256x256xbf16>
    %28 = vector.shape_cast %27 : vector<1x1x256x256xbf16> to vector<256x256xbf16>
    %cst_18 = arith.constant dense<0.000000e+00> : vector<28x256xf32>
    %29 = tpu.matmul %23, %28, %cst_18 {dimension_numbers = #tpu.dot_dimension_numbers<[1], [0], [0], [1], [0, 0, 1, 1], [], []>} : vector<28x256xbf16>, vector<256x256xbf16>, vector<28x256xf32> -> vector<28x256xf32>
    %30 = arith.addf %26, %29 : vector<28x256xf32>
    %c0_19 = arith.constant 0 : index
    %c1_20 = arith.constant 1 : index
    %c0_21 = arith.constant 0 : index
    %c0_22 = arith.constant 0 : index
    %31 = vector.load %arg3[%c0_19, %c1_20, %c0_21, %c0_22] : memref<2x2x256x256xbf16, #tpu.memory_space<vmem>>, vector<1x1x256x256xbf16>
    %32 = vector.shape_cast %31 : vector<1x1x256x256xbf16> to vector<256x256xbf16>
    %cst_23 = arith.constant dense<0.000000e+00> : vector<28x256xf32>
    %33 = tpu.matmul %22, %32, %cst_23 {dimension_numbers = #tpu.dot_dimension_numbers<[1], [0], [0], [1], [0, 0, 1, 1], [], []>} : vector<28x256xbf16>, vector<256x256xbf16>, vector<28x256xf32> -> vector<28x256xf32>
    %c1_24 = arith.constant 1 : index
    %c1_25 = arith.constant 1 : index
    %c0_26 = arith.constant 0 : index
    %c0_27 = arith.constant 0 : index
    %34 = vector.load %arg3[%c1_24, %c1_25, %c0_26, %c0_27] : memref<2x2x256x256xbf16, #tpu.memory_space<vmem>>, vector<1x1x256x256xbf16>
    %35 = vector.shape_cast %34 : vector<1x1x256x256xbf16> to vector<256x256xbf16>
    %cst_28 = arith.constant dense<0.000000e+00> : vector<28x256xf32>
    %36 = tpu.matmul %23, %35, %cst_28 {dimension_numbers = #tpu.dot_dimension_numbers<[1], [0], [0], [1], [0, 0, 1, 1], [], []>} : vector<28x256xbf16>, vector<256x256xbf16>, vector<28x256xf32> -> vector<28x256xf32>
    %37 = arith.addf %33, %36 : vector<28x256xf32>
    %cst_29 = arith.constant 0.000000e+00 : f32
    %38 = vector.broadcast %cst_29 : f32 to vector<28x256xf32>
    %39 = arith.maximumf %30, %38 : vector<28x256xf32>
    %40 = arith.truncf %39 : vector<28x256xf32> to vector<28x256xbf16>
    %cst_30 = arith.constant 0.000000e+00 : f32
    %41 = vector.broadcast %cst_30 : f32 to vector<28x256xf32>
    %42 = arith.maximumf %37, %41 : vector<28x256xf32>
    %43 = arith.truncf %42 : vector<28x256xf32> to vector<28x256xbf16>
    %c0_31 = arith.constant 0 : index
    %c0_32 = arith.constant 0 : index
    %c0_33 = arith.constant 0 : index
    %44 = vector.load %arg4[%c0_31, %c0_32, %c0_33] : memref<2x56x28xbf16, #tpu.memory_space<vmem>>, vector<1x56x28xbf16>
    %45 = vector.shape_cast %44 : vector<1x56x28xbf16> to vector<56x28xbf16>
    %cst_34 = arith.constant dense<0.000000e+00> : vector<56x256xf32>
    %46 = tpu.matmul %45, %40, %cst_34 {dimension_numbers = #tpu.dot_dimension_numbers<[1], [0], [0], [1], [0, 0, 1, 1], [], []>} : vector<56x28xbf16>, vector<28x256xbf16>, vector<56x256xf32> -> vector<56x256xf32>
    %c1_35 = arith.constant 1 : index
    %c0_36 = arith.constant 0 : index
    %c0_37 = arith.constant 0 : index
    %47 = vector.load %arg4[%c1_35, %c0_36, %c0_37] : memref<2x56x28xbf16, #tpu.memory_space<vmem>>, vector<1x56x28xbf16>
    %48 = vector.shape_cast %47 : vector<1x56x28xbf16> to vector<56x28xbf16>
    %cst_38 = arith.constant dense<0.000000e+00> : vector<56x256xf32>
    %49 = tpu.matmul %48, %43, %cst_38 {dimension_numbers = #tpu.dot_dimension_numbers<[1], [0], [0], [1], [0, 0, 1, 1], [], []>} : vector<56x28xbf16>, vector<28x256xbf16>, vector<56x256xf32> -> vector<56x256xf32>
    %50 = arith.addf %46, %49 : vector<56x256xf32>
    %c0_39 = arith.constant 0 : index
    %c0_40 = arith.constant 0 : index
    %51 = vector.load %arg10[%c0_39, %c0_40] : memref<64x256xf32, #tpu.memory_space<vmem>>, vector<56x256xf32>
    tpu.vector_store %arg10[%c0_39, %c0_40], %50 {strides = array<i32>} : memref<64x256xf32, #tpu.memory_space<vmem>>, vector<56x256xf32>,
    %c1_41 = arith.constant 1 : index
    %c0_42 = arith.constant 0 : index
    %52 = vector.load %arg10[%c1_41, %c0_42] : memref<64x256xf32, #tpu.memory_space<vmem>>, vector<56x256xf32>
    %53 = tpu.iota {dimensions = array<i32: 0>} : vector<56x256xi32>
    %c13_i32_43 = arith.constant 13 : i32
    %54 = vector.broadcast %c13_i32_43 : i32 to vector<56x256xi32>
    %55 = arith.cmpi ne, %53, %54 : vector<56x256xi32>
    %c27_i32_44 = arith.constant 27 : i32
    %56 = vector.broadcast %c27_i32_44 : i32 to vector<56x256xi32>
    %57 = arith.cmpi ne, %53, %56 : vector<56x256xi32>
    %58 = arith.andi %55, %57 : vector<56x256xi1>
    %c41_i32 = arith.constant 41 : i32
    %59 = vector.broadcast %c41_i32 : i32 to vector<56x256xi32>
    %60 = arith.cmpi ne, %53, %59 : vector<56x256xi32>
    %61 = arith.andi %58, %60 : vector<56x256xi1>
    %c55_i32 = arith.constant 55 : i32
    %62 = vector.broadcast %c55_i32 : i32 to vector<56x256xi32>
    %63 = arith.cmpi ne, %53, %62 : vector<56x256xi32>
    %64 = arith.andi %61, %63 : vector<56x256xi1>
    %cst_45 = arith.constant 0.000000e+00 : f32
    %65 = vector.broadcast %cst_45 : f32 to vector<56x256xf32>
    %66 = arith.select %64, %52, %65 : vector<56x256xi1>, vector<56x256xf32>
    %67 = arith.truncf %50 : vector<56x256xf32> to vector<56x256xbf16>
    %68 = arith.truncf %66 : vector<56x256xf32> to vector<56x256xbf16>
    %c0_46 = arith.constant 0 : index
    %c0_47 = arith.constant 0 : index
    %c0_48 = arith.constant 0 : index
    %c0_49 = arith.constant 0 : index
    %69 = vector.load %arg5[%c0_46, %c0_47, %c0_48, %c0_49] : memref<2x2x256x256xbf16, #tpu.memory_space<vmem>>, vector<1x1x256x256xbf16>
    %70 = vector.shape_cast %69 : vector<1x1x256x256xbf16> to vector<256x256xbf16>
    %cst_50 = arith.constant dense<0.000000e+00> : vector<56x256xf32>
    %71 = tpu.matmul %67, %70, %cst_50 {dimension_numbers = #tpu.dot_dimension_numbers<[1], [0], [0], [1], [0, 0, 1, 1], [], []>} : vector<56x256xbf16>, vector<256x256xbf16>, vector<56x256xf32> -> vector<56x256xf32>
    %c1_51 = arith.constant 1 : index
    %c0_52 = arith.constant 0 : index
    %c0_53 = arith.constant 0 : index
    %c0_54 = arith.constant 0 : index
    %72 = vector.load %arg5[%c1_51, %c0_52, %c0_53, %c0_54] : memref<2x2x256x256xbf16, #tpu.memory_space<vmem>>, vector<1x1x256x256xbf16>
    %73 = vector.shape_cast %72 : vector<1x1x256x256xbf16> to vector<256x256xbf16>
    %cst_55 = arith.constant dense<0.000000e+00> : vector<56x256xf32>
    %74 = tpu.matmul %68, %73, %cst_55 {dimension_numbers = #tpu.dot_dimension_numbers<[1], [0], [0], [1], [0, 0, 1, 1], [], []>} : vector<56x256xbf16>, vector<256x256xbf16>, vector<56x256xf32> -> vector<56x256xf32>
    %75 = arith.addf %71, %74 : vector<56x256xf32>
    %c0_56 = arith.constant 0 : index
    %c1_57 = arith.constant 1 : index
    %c0_58 = arith.constant 0 : index
    %c0_59 = arith.constant 0 : index
    %76 = vector.load %arg5[%c0_56, %c1_57, %c0_58, %c0_59] : memref<2x2x256x256xbf16, #tpu.memory_space<vmem>>, vector<1x1x256x256xbf16>
    %77 = vector.shape_cast %76 : vector<1x1x256x256xbf16> to vector<256x256xbf16>
    %cst_60 = arith.constant dense<0.000000e+00> : vector<56x256xf32>
    %78 = tpu.matmul %67, %77, %cst_60 {dimension_numbers = #tpu.dot_dimension_numbers<[1], [0], [0], [1], [0, 0, 1, 1], [], []>} : vector<56x256xbf16>, vector<256x256xbf16>, vector<56x256xf32> -> vector<56x256xf32>
    %c1_61 = arith.constant 1 : index
    %c1_62 = arith.constant 1 : index
    %c0_63 = arith.constant 0 : index
    %c0_64 = arith.constant 0 : index
    %79 = vector.load %arg5[%c1_61, %c1_62, %c0_63, %c0_64] : memref<2x2x256x256xbf16, #tpu.memory_space<vmem>>, vector<1x1x256x256xbf16>
    %80 = vector.shape_cast %79 : vector<1x1x256x256xbf16> to vector<256x256xbf16>
    %cst_65 = arith.constant dense<0.000000e+00> : vector<56x256xf32>
    %81 = tpu.matmul %68, %80, %cst_65 {dimension_numbers = #tpu.dot_dimension_numbers<[1], [0], [0], [1], [0, 0, 1, 1], [], []>} : vector<56x256xbf16>, vector<256x256xbf16>, vector<56x256xf32> -> vector<56x256xf32>
    %82 = arith.addf %78, %81 : vector<56x256xf32>
    %cst_66 = arith.constant 0.000000e+00 : f32
    %83 = vector.broadcast %cst_66 : f32 to vector<56x256xf32>
    %84 = arith.maximumf %75, %83 : vector<56x256xf32>
    %85 = arith.truncf %84 : vector<56x256xf32> to vector<56x256xbf16>
    %cst_67 = arith.constant 0.000000e+00 : f32
    %86 = vector.broadcast %cst_67 : f32 to vector<56x256xf32>
    %87 = arith.maximumf %82, %86 : vector<56x256xf32>
    %88 = arith.truncf %87 : vector<56x256xf32> to vector<56x256xbf16>
    %c0_68 = arith.constant 0 : index
    %c0_69 = arith.constant 0 : index
    %c0_70 = arith.constant 0 : index
    %89 = vector.load %arg6[%c0_68, %c0_69, %c0_70] : memref<2x112x56xbf16, #tpu.memory_space<vmem>>, vector<1x112x56xbf16>
    %90 = vector.shape_cast %89 : vector<1x112x56xbf16> to vector<112x56xbf16>
    %cst_71 = arith.constant dense<0.000000e+00> : vector<112x256xf32>
    %91 = tpu.matmul %90, %85, %cst_71 {dimension_numbers = #tpu.dot_dimension_numbers<[1], [0], [0], [1], [0, 0, 1, 1], [], []>} : vector<112x56xbf16>, vector<56x256xbf16>, vector<112x256xf32> -> vector<112x256xf32>
    %c1_72 = arith.constant 1 : index
    %c0_73 = arith.constant 0 : index
    %c0_74 = arith.constant 0 : index
    %92 = vector.load %arg6[%c1_72, %c0_73, %c0_74] : memref<2x112x56xbf16, #tpu.memory_space<vmem>>, vector<1x112x56xbf16>
    %93 = vector.shape_cast %92 : vector<1x112x56xbf16> to vector<112x56xbf16>
    %cst_75 = arith.constant dense<0.000000e+00> : vector<112x256xf32>
    %94 = tpu.matmul %93, %88, %cst_75 {dimension_numbers = #tpu.dot_dimension_numbers<[1], [0], [0], [1], [0, 0, 1, 1], [], []>} : vector<112x56xbf16>, vector<56x256xbf16>, vector<112x256xf32> -> vector<112x256xf32>
    %95 = arith.addf %91, %94 : vector<112x256xf32>
    %96 = arith.truncf %95 : vector<112x256xf32> to vector<112x256xbf16>
    %c0_76 = arith.constant 0 : index
    %c0_77 = arith.constant 0 : index
    %97 = vector.load %arg7[%c0_76, %c0_77] : memref<256x384xbf16, #tpu.memory_space<vmem>>, vector<256x384xbf16>
    %cst_78 = arith.constant dense<0.000000e+00> : vector<112x384xf32>
    %98 = tpu.matmul %96, %97, %cst_78 {dimension_numbers = #tpu.dot_dimension_numbers<[1], [0], [0], [1], [0, 0, 1, 1], [], []>} : vector<112x256xbf16>, vector<256x384xbf16>, vector<112x384xf32> -> vector<112x384xf32>
    %c1_79 = arith.constant 1 : index
    %c0_80 = arith.constant 0 : index
    %99 = vector.load %arg11[%c1_79, %c0_80] : memref<120x384xf32, #tpu.memory_space<vmem>>, vector<112x384xf32>
    tpu.vector_store %arg11[%c1_79, %c0_80], %98 {strides = array<i32>} : memref<120x384xf32, #tpu.memory_space<vmem>>, vector<112x384xf32>,
    %c0_81 = arith.constant 0 : index
    %c0_82 = arith.constant 0 : index
    %100 = vector.load %arg11[%c0_81, %c0_82] : memref<120x384xf32, #tpu.memory_space<vmem>>, vector<112x128xf32>
    %c2 = arith.constant 2 : index
    %c256 = arith.constant 256 : index
    %101 = vector.load %arg11[%c2, %c256] : memref<120x384xf32, #tpu.memory_space<vmem>>, vector<112x128xf32>
    %102 = tpu.iota {dimensions = array<i32: 0>} : vector<112x128xi32>
    %c0_i32 = arith.constant 0 : i32
    %103 = vector.broadcast %c0_i32 : i32 to vector<112x128xi32>
    %104 = arith.cmpi ne, %102, %103 : vector<112x128xi32>
    %c27_i32_83 = arith.constant 27 : i32
    %105 = vector.broadcast %c27_i32_83 : i32 to vector<112x128xi32>
    %106 = arith.cmpi ne, %102, %105 : vector<112x128xi32>
    %c28_i32 = arith.constant 28 : i32
    %107 = vector.broadcast %c28_i32 : i32 to vector<112x128xi32>
    %108 = arith.cmpi ne, %102, %107 : vector<112x128xi32>
    %109 = arith.andi %104, %108 : vector<112x128xi1>
    %c55_i32_84 = arith.constant 55 : i32
    %110 = vector.broadcast %c55_i32_84 : i32 to vector<112x128xi32>
    %111 = arith.cmpi ne, %102, %110 : vector<112x128xi32>
    %112 = arith.andi %106, %111 : vector<112x128xi1>
    %c56_i32 = arith.constant 56 : i32
    %113 = vector.broadcast %c56_i32 : i32 to vector<112x128xi32>
    %114 = arith.cmpi ne, %102, %113 : vector<112x128xi32>
    %115 = arith.andi %109, %114 : vector<112x128xi1>
    %c83_i32 = arith.constant 83 : i32
    %116 = vector.broadcast %c83_i32 : i32 to vector<112x128xi32>
    %117 = arith.cmpi ne, %102, %116 : vector<112x128xi32>
    %118 = arith.andi %112, %117 : vector<112x128xi1>
    %c84_i32 = arith.constant 84 : i32
    %119 = vector.broadcast %c84_i32 : i32 to vector<112x128xi32>
    %120 = arith.cmpi ne, %102, %119 : vector<112x128xi32>
    %121 = arith.andi %115, %120 : vector<112x128xi1>
    %c111_i32 = arith.constant 111 : i32
    %122 = vector.broadcast %c111_i32 : i32 to vector<112x128xi32>
    %123 = arith.cmpi ne, %102, %122 : vector<112x128xi32>
    %124 = arith.andi %118, %123 : vector<112x128xi1>
    %cst_85 = arith.constant 0.000000e+00 : f32
    %125 = vector.broadcast %cst_85 : f32 to vector<112x128xf32>
    %126 = arith.select %121, %100, %125 : vector<112x128xi1>, vector<112x128xf32>
    %127 = vector.extract_strided_slice %98 {offsets = [0, 128], sizes = [112, 128], strides = [1, 1]} : vector<112x384xf32> to vector<112x128xf32>
    %128 = arith.addf %126, %127 : vector<112x128xf32>
    %cst_86 = arith.constant 0.000000e+00 : f32
    %129 = vector.broadcast %cst_86 : f32 to vector<112x128xf32>
    %130 = arith.select %124, %101, %129 : vector<112x128xi1>, vector<112x128xf32>
    %131 = arith.addf %128, %130 : vector<112x128xf32>
    %132 = math.tanh %131 : vector<112x128xf32>
    %c0_87 = arith.constant 0 : index
    %c0_88 = arith.constant 0 : index
    %c0_89 = arith.constant 0 : index
    %133 = vector.load %arg8[%c0_87, %c0_88, %c0_89] : memref<1x112x128xf32, #tpu.memory_space<vmem>>, vector<1x112x128xf32>
    %134 = vector.shape_cast %133 : vector<1x112x128xf32> to vector<112x128xf32>
    %135 = vector.shape_cast %132 : vector<112x128xf32> to vector<1x112x128xf32>
    tpu.vector_store %arg8[%c0_87, %c0_88, %c0_89], %135 {strides = array<i32>} : memref<1x112x128xf32, #tpu.memory_space<vmem>>, vector<1x112x128xf32>,
    return
  }
  func.func @transform_0(%arg0: i32) -> (i32, i32, i32) {
    %c0_i32 = arith.constant 0 : i32
    %c0_i32_0 = arith.constant 0 : i32
    %c0_i32_1 = arith.constant 0 : i32
    return %arg0, %c0_i32, %c0_i32_0 : i32, i32, i32
  }
  func.func @transform_1(%arg0: i32) -> (i32, i32) {
    %c0_i32 = arith.constant 0 : i32
    %c0_i32_0 = arith.constant 0 : i32
    %c0_i32_1 = arith.constant 0 : i32
    return %c0_i32, %c0_i32_0 : i32, i32
  }
  func.func @transform_2(%arg0: i32) -> (i32, i32, i32, i32) {
    %c0_i32 = arith.constant 0 : i32
    %c0_i32_0 = arith.constant 0 : i32
    %c0_i32_1 = arith.constant 0 : i32
    %c0_i32_2 = arith.constant 0 : i32
    %c0_i32_3 = arith.constant 0 : i32
    return %c0_i32, %c0_i32_0, %c0_i32_1, %c0_i32_2 : i32, i32, i32, i32
  }
  func.func @transform_3(%arg0: i32) -> (i32, i32, i32) {
    %c0_i32 = arith.constant 0 : i32
    %c0_i32_0 = arith.constant 0 : i32
    %c0_i32_1 = arith.constant 0 : i32
    %c0_i32_2 = arith.constant 0 : i32
    return %c0_i32, %c0_i32_0, %c0_i32_1 : i32, i32, i32
  }
  func.func @transform_4(%arg0: i32) -> (i32, i32, i32, i32) {
    %c0_i32 = arith.constant 0 : i32
    %c0_i32_0 = arith.constant 0 : i32
    %c0_i32_1 = arith.constant 0 : i32
    %c0_i32_2 = arith.constant 0 : i32
    %c0_i32_3 = arith.constant 0 : i32
    return %c0_i32, %c0_i32_0, %c0_i32_1, %c0_i32_2 : i32, i32, i32, i32
  }
  func.func @transform_5(%arg0: i32) -> (i32, i32, i32) {
    %c0_i32 = arith.constant 0 : i32
    %c0_i32_0 = arith.constant 0 : i32
    %c0_i32_1 = arith.constant 0 : i32
    %c0_i32_2 = arith.constant 0 : i32
    return %c0_i32, %c0_i32_0, %c0_i32_1 : i32, i32, i32
  }
  func.func @transform_6(%arg0: i32) -> (i32, i32) {
    %c0_i32 = arith.constant 0 : i32
    %c0_i32_0 = arith.constant 0 : i32
    %c0_i32_1 = arith.constant 0 : i32
    return %c0_i32, %c0_i32_0 : i32, i32
  }
  func.func @transform_7(%arg0: i32) -> (i32, i32, i32) {
    %c0_i32 = arith.constant 0 : i32
    %c0_i32_0 = arith.constant 0 : i32
    %c0_i32_1 = arith.constant 0 : i32
    return %arg0, %c0_i32, %c0_i32_0 : i32, i32, i32
  }
}

</mosaic_0001>

<llo_original>
// kernel: tpu_custom_call.1
$region0: #{tpu_custom_call.1}
  #allocation0 [shape = 'u32[]', space=smem, size = 0x4, offset = 0x4, fixed_abs, tag = 'smem constant byte address 0x4 - core index']
  #allocation1 [shape = 'u32[144,128]{1,0:T(1,128)}', space=vmem, size = 0x12000, scoped, tag = 'internal scratch']
  #allocation2 [shape = 'f32[36,256]{1,0:T(8,128)}', space=vmem, size = 0xa000, scoped, tag = 'scratch operand']
  #allocation3 [shape = 'f32[64,256]{1,0:T(8,128)}', space=vmem, size = 0x10000, scoped, tag = 'scratch operand']
  #allocation4 [shape = 'f32[120,384]{1,0:T(8,128)}', space=vmem, size = 0x2d000, scoped, tag = 'scratch operand']
  %s0 = inlined_call_operand.vmem [shape: bf16[2,28,128], index: 0, kind: input, shape index: {}]
  %s1 = inlined_call_operand.vmem [shape: bf16[128,256], index: 1, kind: input, shape index: {}]
  %s2 = inlined_call_operand.hbm [shape: bf16[2,2,256,256], index: 2, kind: input, shape index: {}]
  %s3 = inlined_call_operand.vmem [shape: bf16[2,56,28], index: 3, kind: input, shape index: {}]
  %s4 = inlined_call_operand.hbm [shape: bf16[2,2,256,256], index: 4, kind: input, shape index: {}]
  %s5 = inlined_call_operand.vmem [shape: bf16[2,112,56], index: 5, kind: input, shape index: {}]
  %s6 = inlined_call_operand.hbm [shape: bf16[256,384], index: 6, kind: input, shape index: {}]
  %s7 = inlined_call_operand.hbm [shape: f32[2,112,128], index: 7, kind: output, shape index: {}]
  %s8 = sld [smem:[#allocation0]]
  $region73: #{tpu_custom_call.1} parent=0
    _
  %s10 = ssub.s32 1, %s8
  %s11 = scalar_select 0, %s10, %s8
  $region1: #{tpu_custom_call.1} parent=0
    #allocation5 [shape = 'u8[524288]{0}', space=vmem, size = 0x80000, scoped, tag = 'input window, operand 2, single buffered']
    #allocation6 [shape = 's32[2]{0}', space=sflag, size = 0x8, scoped, tag = 'scoped memory for tpu_custom_call.1']
    #allocation7 [shape = 's32[2]{0}', space=sflag, size = 0x8, scoped, tag = 'scoped memory for tpu_custom_call.1']
    #allocation8 [shape = 'u8[524288]{0}', space=vmem, size = 0x80000, scoped, tag = 'input window, operand 4, single buffered']
    #allocation9 [shape = 's32[1]{0}', space=sflag, size = 0x4, scoped, tag = 'scoped memory for tpu_custom_call.1']
    #allocation10 [shape = 'u8[196608]{0}', space=vmem, size = 0x30000, scoped, tag = 'input window, operand 6, single buffered']
    #allocation11 [shape = 'u8[114688]{0}', space=vmem, size = 0x1c000, scoped, tag = 'output window, operand 0']
    %12 = vsyncpa [#allocation6], 0
    %13 = vsyncpa [#allocation9], 0
    %14 = vsyncpa [#allocation7], 0
    %s15 = scalar_lea.sflag [#allocation7], 1
    %16 = vsyncpa %s15, 0
    loop: start=0, step=1, limit=4
    $region2: #{tpu_custom_call.1} parent=1 // loop_pre_header
      _
    $region3: #{tpu_custom_call.1} parent=1 // loop_header
      %s18 = sphi 0, %s22
      %p19 = scmp.ge.s32.totalorder %s18, 4
      %s28 = sphi 0, %s30
      %s31 = sphi 0, %s28
      %s32 = sphi 0, %s31
      %s48 = sphi 0, %s32
      %s52 = sphi 0, %s52
      %s54 = sphi 0, %s52
      %s55 = sphi 0, %s54
      %s69 = sphi 0, %s55
      %s73 = sphi 0, %s73
      %s75 = sphi 0, %s73
      %s76 = sphi 0, %s75
      %s90 = sphi 0, %s76
      %s94 = sphi 0, %s94
      %s96 = sphi 0, %s94
      %s97 = sphi 0, %s96
      %s111 = sphi 0, %s97
      %s115 = sphi 0, %s115
      %s117 = sphi 0, %s115
      %s118 = sphi 0, %s117
      %s132 = sphi 0, %s118
      %s136 = sphi 0, %s136
      %s138 = sphi 0, %s136
      %s139 = sphi 0, %s138
      %s153 = sphi 0, %s139
      %s157 = sphi 0, %s157
      %s159 = sphi 0, %s157
      %s160 = sphi 0, %s159
      %s174 = sphi 0, %s160
      %s180 = sphi 0, %s182
      %s183 = sphi 0, %s180
      %s184 = sphi 0, %s183
      %s200 = sphi 0, %s184
    $region4: #{tpu_custom_call.1} parent=1 // loop_header_branch
      %21 = sbr.rel (%p19) target = $region8
    $region5: #{tpu_custom_call.1} parent=1 // loop_body
      %s23 = ssub.s32 %s18, 1
      %s24 = ssub.s32 %s18, 2
      %s25 = sadd.s32 %s18, 1
      %s26 = ssub.s32 %s18, %s25
      %p27 = scmp.eq.s32.totalorder %s26, 0
      %s29 = sadd.s32 %s28, 1
      %s30 = scalar_select %p27, %s28, %s29
      %p33 = pneg %p27
      %p34 = scmp.eq.s32.totalorder %s18, 1
      %p35 = por %p33, %p34
      %p36 = scmp.ne.s32.totalorder %s28, %s31
      %p37 = scmp.eq.s32.totalorder %s18, 0
      %p38 = por %p36, %p37
      %p39 = scmp.ne.s32.totalorder %s28, %s31
      %p40 = scmp.eq.s32.totalorder %s23, 1
      %p41 = por %p39, %p40
      %p42 = scmp.ne.s32.totalorder %s31, %s32
      %p43 = scmp.eq.s32.totalorder %s23, 0
      %p44 = por %p42, %p43
      %p45 = scmp.ne.s32.totalorder %s31, %s32
      %p46 = scmp.eq.s32.totalorder %s24, 1
      %p47 = por %p45, %p46
      %p49 = scmp.ne.s32.totalorder %s32, %s48
      %p50 = scmp.eq.s32.totalorder %s24, 0
      %p51 = por %p49, %p50
      %s53 = sadd.s32 %s52, 1
      %p56 = scmp.eq.s32.totalorder %s18, 1
      %p57 = scmp.ne.s32.totalorder %s52, %s54
      %p58 = scmp.eq.s32.totalorder %s18, 0
      %p59 = por %p57, %p58
      %p60 = scmp.ne.s32.totalorder %s52, %s54
      %p61 = scmp.eq.s32.totalorder %s23, 1
      %p62 = por %p60, %p61
      %p63 = scmp.ne.s32.totalorder %s54, %s55
      %p64 = scmp.eq.s32.totalorder %s23, 0
      %p65 = por %p63, %p64
      %p66 = scmp.ne.s32.totalorder %s54, %s55
      %p67 = scmp.eq.s32.totalorder %s24, 1
      %p68 = por %p66, %p67
      %p70 = scmp.ne.s32.totalorder %s55, %s69
      %p71 = scmp.eq.s32.totalorder %s24, 0
      %p72 = por %p70, %p71
      %s74 = sadd.s32 %s73, 1
      %p77 = scmp.eq.s32.totalorder %s18, 1
      %p78 = scmp.ne.s32.totalorder %s73, %s75
      %p79 = scmp.eq.s32.totalorder %s18, 0
      %p80 = por %p78, %p79
      %p81 = scmp.ne.s32.totalorder %s73, %s75
      %p82 = scmp.eq.s32.totalorder %s23, 1
      %p83 = por %p81, %p82
      %p84 = scmp.ne.s32.totalorder %s75, %s76
      %p85 = scmp.eq.s32.totalorder %s23, 0
      %p86 = por %p84, %p85
      %p87 = scmp.ne.s32.totalorder %s75, %s76
      %p88 = scmp.eq.s32.totalorder %s24, 1
      %p89 = por %p87, %p88
      %p91 = scmp.ne.s32.totalorder %s76, %s90
      %p92 = scmp.eq.s32.totalorder %s24, 0
      %p93 = por %p91, %p92
      %s95 = sadd.s32 %s94, 1
      %p98 = scmp.eq.s32.totalorder %s18, 1
      %p99 = scmp.ne.s32.totalorder %s94, %s96
      %p100 = scmp.eq.s32.totalorder %s18, 0
      %p101 = por %p99, %p100
      %p102 = scmp.ne.s32.totalorder %s94, %s96
      %p103 = scmp.eq.s32.totalorder %s23, 1
      %p104 = por %p102, %p103
      %p105 = scmp.ne.s32.totalorder %s96, %s97
      %p106 = scmp.eq.s32.totalorder %s23, 0
      %p107 = por %p105, %p106
      %p108 = scmp.ne.s32.totalorder %s96, %s97
      %p109 = scmp.eq.s32.totalorder %s24, 1
      %p110 = por %p108, %p109
      %p112 = scmp.ne.s32.totalorder %s97, %s111
      %p113 = scmp.eq.s32.totalorder %s24, 0
      %p114 = por %p112, %p113
      %s116 = sadd.s32 %s115, 1
      %p119 = scmp.eq.s32.totalorder %s18, 1
      %p120 = scmp.ne.s32.totalorder %s115, %s117
      %p121 = scmp.eq.s32.totalorder %s18, 0
      %p122 = por %p120, %p121
      %p123 = scmp.ne.s32.totalorder %s115, %s117
      %p124 = scmp.eq.s32.totalorder %s23, 1
      %p125 = por %p123, %p124
      %p126 = scmp.ne.s32.totalorder %s117, %s118
      %p127 = scmp.eq.s32.totalorder %s23, 0
      %p128 = por %p126, %p127
      %p129 = scmp.ne.s32.totalorder %s117, %s118
      %p130 = scmp.eq.s32.totalorder %s24, 1
      %p131 = por %p129, %p130
      %p133 = scmp.ne.s32.totalorder %s118, %s132
      %p134 = scmp.eq.s32.totalorder %s24, 0
      %p135 = por %p133, %p134
      %s137 = sadd.s32 %s136, 1
      %p140 = scmp.eq.s32.totalorder %s18, 1
      %p141 = scmp.ne.s32.totalorder %s136, %s138
      %p142 = scmp.eq.s32.totalorder %s18, 0
      %p143 = por %p141, %p142
      %p144 = scmp.ne.s32.totalorder %s136, %s138
      %p145 = scmp.eq.s32.totalorder %s23, 1
      %p146 = por %p144, %p145
      %p147 = scmp.ne.s32.totalorder %s138, %s139
      %p148 = scmp.eq.s32.totalorder %s23, 0
      %p149 = por %p147, %p148
      %p150 = scmp.ne.s32.totalorder %s138, %s139
      %p151 = scmp.eq.s32.totalorder %s24, 1
      %p152 = por %p150, %p151
      %p154 = scmp.ne.s32.totalorder %s139, %s153
      %p155 = scmp.eq.s32.totalorder %s24, 0
      %p156 = por %p154, %p155
      %s158 = sadd.s32 %s157, 1
      %p161 = scmp.eq.s32.totalorder %s18, 1
      %p162 = scmp.ne.s32.totalorder %s157, %s159
      %p163 = scmp.eq.s32.totalorder %s18, 0
      %p164 = por %p162, %p163
      %p165 = scmp.ne.s32.totalorder %s157, %s159
      %p166 = scmp.eq.s32.totalorder %s23, 1
      %p167 = por %p165, %p166
      %p168 = scmp.ne.s32.totalorder %s159, %s160
      %p169 = scmp.eq.s32.totalorder %s23, 0
      %p170 = por %p168, %p169
      %p171 = scmp.ne.s32.totalorder %s159, %s160
      %p172 = scmp.eq.s32.totalorder %s24, 1
      %p173 = por %p171, %p172
      %p175 = scmp.ne.s32.totalorder %s160, %s174
      %p176 = scmp.eq.s32.totalorder %s24, 0
      %p177 = por %p175, %p176
      %s178 = ssub.s32 %s18, %s25
      %p179 = scmp.eq.s32.totalorder %s178, 0
      %s181 = sadd.s32 %s180, 1
      %s182 = scalar_select %p179, %s180, %s181
      %p185 = pneg %p179
      %p186 = scmp.eq.s32.totalorder %s18, 1
      %p187 = por %p185, %p186
      %p188 = scmp.ne.s32.totalorder %s180, %s183
      %p189 = scmp.eq.s32.totalorder %s18, 0
      %p190 = por %p188, %p189
      %p191 = scmp.ne.s32.totalorder %s180, %s183
      %p192 = scmp.eq.s32.totalorder %s23, 1
      %p193 = por %p191, %p192
      %p194 = scmp.ne.s32.totalorder %s183, %s184
      %p195 = scmp.eq.s32.totalorder %s23, 0
      %p196 = por %p194, %p195
      %p197 = scmp.ne.s32.totalorder %s183, %s184
      %p198 = scmp.eq.s32.totalorder %s24, 1
      %p199 = por %p197, %p198
      %p201 = scmp.ne.s32.totalorder %s184, %s200
      %p202 = scmp.eq.s32.totalorder %s24, 0
      %p203 = por %p201, %p202
      %p204 = scmp.le.s32.totalorder 1, %s18
      %p205 = scmp.lt.s32.totalorder %s18, 3
      %p206 = pnand %p204, %p205
      %p207 = pneg %p206
      // Predicated region
      $region9: #{tpu_custom_call.1} parent=5 // pred_check
        _
      $region10: #{tpu_custom_call.1} parent=5 // pred_check_branch
        %209 = sbr.rel (%p206) target = $region12
      $region11: #{tpu_custom_call.1} parent=5 // pred_region
        %s210 = ssub.s32 %s18, 1
        // Predicated region
        $region13: #{tpu_custom_call.1} parent=11 // pred_check
          %p211 = pneg %p65
        $region14: #{tpu_custom_call.1} parent=11 // pred_check_branch
          %213 = sbr.rel (%p211) target = $region16
        $region15: #{tpu_custom_call.1} parent=11 // pred_region
          _
        $region16: #{tpu_custom_call.1} parent=11 // pred_fallthru
          _
        // Predicated region
        $region17: #{tpu_custom_call.1} parent=11 // pred_check
          %p214 = pneg %p86
        $region18: #{tpu_custom_call.1} parent=11 // pred_check_branch
          %216 = sbr.rel (%p214) target = $region20
        $region19: #{tpu_custom_call.1} parent=11 // pred_region
          %s218 = ssub.s32 16384, 16384
          %219 = vsyncadd [#allocation6], %s218
          %s220 = sshll.u32 [#allocation5], 4
          %s221 = int_to_ptr.vmem [resolvable:$true] %s220
          %226 = dma.hbm_to_vmem [thread:$0]  %s2, 16384, %s221, [#allocation6], 128, 128, 8
        $region20: #{tpu_custom_call.1} parent=11 // pred_fallthru
          _
        // Predicated region
        $region21: #{tpu_custom_call.1} parent=11 // pred_check
          %p227 = pneg %p107
        $region22: #{tpu_custom_call.1} parent=11 // pred_check_branch
          %229 = sbr.rel (%p227) target = $region24
        $region23: #{tpu_custom_call.1} parent=11 // pred_region
          _
        $region24: #{tpu_custom_call.1} parent=11 // pred_fallthru
          _
        // Predicated region
        $region25: #{tpu_custom_call.1} parent=11 // pred_check
          %p230 = pneg %p128
        $region26: #{tpu_custom_call.1} parent=11 // pred_check_branch
          %232 = sbr.rel (%p230) target = $region28
        $region27: #{tpu_custom_call.1} parent=11 // pred_region
          %s234 = ssub.s32 16384, 16384
          %235 = vsyncadd [#allocation9], %s234
          %s236 = sshll.u32 [#allocation8], 4
          %s237 = int_to_ptr.vmem [resolvable:$true] %s236
          %242 = dma.hbm_to_vmem [thread:$0]  %s4, 16384, %s237, [#allocation9], 128, 128, 8
        $region28: #{tpu_custom_call.1} parent=11 // pred_fallthru
          _
        // Predicated region
        $region29: #{tpu_custom_call.1} parent=11 // pred_check
          %p243 = pneg %p149
        $region30: #{tpu_custom_call.1} parent=11 // pred_check_branch
          %245 = sbr.rel (%p243) target = $region32
        $region31: #{tpu_custom_call.1} parent=11 // pred_region
          _
        $region32: #{tpu_custom_call.1} parent=11 // pred_fallthru
          _
        // Predicated region
        $region33: #{tpu_custom_call.1} parent=11 // pred_check
          %p246 = pneg %p170
        $region34: #{tpu_custom_call.1} parent=11 // pred_check_branch
          %248 = sbr.rel (%p246) target = $region36
        $region35: #{tpu_custom_call.1} parent=11 // pred_region
          %s250 = ssub.s32 6144, 6144
          %251 = vsyncadd [#allocation9], %s250
          %s252 = sshll.u32 [#allocation10], 4
          %s253 = int_to_ptr.vmem [resolvable:$true] %s252
          %258 = dma.hbm_to_vmem [thread:$0]  %s6, 6144, %s253, [#allocation9], 192, 192, 12
        $region36: #{tpu_custom_call.1} parent=11 // pred_fallthru
          _
      $region12: #{tpu_custom_call.1} parent=5 // pred_fallthru
        _
      %p259 = scmp.lt.s32.totalorder %s18, 2
      // Predicated region
      $region37: #{tpu_custom_call.1} parent=5 // pred_check
        %p260 = pneg %p259
      $region38: #{tpu_custom_call.1} parent=5 // pred_check_branch
        %262 = sbr.rel (%p260) target = $region40
      $region39: #{tpu_custom_call.1} parent=5 // pred_region
        // Predicated region
        $region41: #{tpu_custom_call.1} parent=39 // pred_check
          %p263 = pneg %p38
        $region42: #{tpu_custom_call.1} parent=39 // pred_check_branch
          %265 = sbr.rel (%p263) target = $region44
        $region43: #{tpu_custom_call.1} parent=39 // pred_region
          %p266 = scmp.lt.s32.totalorder %s18, 1
          %s267 = scalar_select %p266, %s18, 1
          %s268 = smul.addr %s267, 4
          %s269 = smul.addr %s268, 4
          %s270 = scalar_lea.vmem %s0, %s269
        $region44: #{tpu_custom_call.1} parent=39 // pred_fallthru
          _
      $region40: #{tpu_custom_call.1} parent=5 // pred_fallthru
        _
      %p271 = scmp.le.s32.totalorder 1, %s18
      %p272 = scmp.lt.s32.totalorder %s18, 3
      %p273 = pnand %p271, %p272
      %p274 = pneg %p273
      // Predicated region
      $region45: #{tpu_custom_call.1} parent=5 // pred_check
        _
      $region46: #{tpu_custom_call.1} parent=5 // pred_check_branch
        %276 = sbr.rel (%p273) target = $region48
      $region47: #{tpu_custom_call.1} parent=5 // pred_region
        %s277 = ssub.s32 %s18, 1
        // Predicated region
        $region49: #{tpu_custom_call.1} parent=47 // pred_check
          %p278 = pneg %p86
        $region50: #{tpu_custom_call.1} parent=47 // pred_check_branch
          %280 = sbr.rel (%p278) target = $region52
        $region51: #{tpu_custom_call.1} parent=47 // pred_region
          %281 = dma.done [#allocation6], 16384
        $region52: #{tpu_custom_call.1} parent=47 // pred_fallthru
          _
        // Predicated region
        $region53: #{tpu_custom_call.1} parent=47 // pred_check
          %p282 = pneg %p128
        $region54: #{tpu_custom_call.1} parent=47 // pred_check_branch
          %284 = sbr.rel (%p282) target = $region56
        $region55: #{tpu_custom_call.1} parent=47 // pred_region
          %285 = dma.done [#allocation9], 16384
        $region56: #{tpu_custom_call.1} parent=47 // pred_fallthru
          _
        // Predicated region
        $region57: #{tpu_custom_call.1} parent=47 // pred_check
          %p286 = pneg %p170
        $region58: #{tpu_custom_call.1} parent=47 // pred_check_branch
          %288 = sbr.rel (%p286) target = $region60
        $region59: #{tpu_custom_call.1} parent=47 // pred_region
          %289 = dma.done [#allocation9], 6144
        $region60: #{tpu_custom_call.1} parent=47 // pred_fallthru
          _
        %p290 = scmp.lt.s32.totalorder %s23, 1
        %s291 = scalar_select %p290, %s23, 1
        %s292 = smul.addr %s291, 4
        %s293 = smul.addr %s292, 4
        %s294 = scalar_lea.vmem %s0, %s293
        %p295 = pneg %p44
        %p296 = pneg %p41
        %p297 = pneg %p65
        %p298 = pneg %p62
        %p299 = pneg %p86
        %p300 = pneg %p83
        %p301 = pneg %p107
        %p302 = pneg %p104
        %p303 = pneg %p128
        %p304 = pneg %p125
        %p305 = pneg %p149
        %p306 = pneg %p146
        %p307 = pneg %p170
        %p308 = pneg %p167
        %p309 = pneg %p196
        %p310 = pneg %p193
        %s311 = sand.u32 %s183, 1
        %s312 = scalar_lea.sflag [#allocation7], %s311
        %s313 = sand.u32 %s183, 1
        %s314 = smul.addr %s313, 112
        %s315 = scalar_lea.vmem [#allocation11], %s314
        %p316 = scmp.lt.s32.totalorder %s23, 1
        %s317 = scalar_select %p316, %s23, 1
        %s318 = smul.addr %s317, 4
        %s319 = smul.addr %s318, 4
        %s320 = scalar_lea.vmem %s0, %s319
        %v322 = vld [vmem:[%s320] sm:$0xf]
        %v323 = vld [vmem:[%s320 + $0x4] sm:$0xf]
        %v324 = vld [vmem:[%s320 + $0x8] sm:$0xf]
        %v325 = vld [vmem:[%s320 + $0xc] sm:$0x3]
        %v326 = vld [vmem:[%s1] sm:$0xff]
        %v327 = vld [vmem:[%s1 + $0x8] sm:$0xff]
        %v328 = vld [vmem:[%s1 + $0x10] sm:$0xff]
        %v329 = vld [vmem:[%s1 + $0x18] sm:$0xff]
        %v330 = vld [vmem:[%s1 + $0x20] sm:$0xff]
        %v331 = vld [vmem:[%s1 + $0x28] sm:$0xff]
        %v332 = vld [vmem:[%s1 + $0x30] sm:$0xff]
        %v333 = vld [vmem:[%s1 + $0x38] sm:$0xff]
        %v334 = vld [vmem:[%s1 + $0x40] sm:$0xff]
        %v335 = vld [vmem:[%s1 + $0x48] sm:$0xff]
        %v336 = vld [vmem:[%s1 + $0x50] sm:$0xff]
        %v337 = vld [vmem:[%s1 + $0x58] sm:$0xff]
        %v338 = vld [vmem:[%s1 + $0x60] sm:$0xff]
        %v339 = vld [vmem:[%s1 + $0x68] sm:$0xff]
        %v340 = vld [vmem:[%s1 + $0x70] sm:$0xff]
        %v341 = vld [vmem:[%s1 + $0x78] sm:$0xff]
        %v346 = vunpack.c.l.b16 %v322
        %v347 = vunpack.c.l.b16 %v323
        %v348 = vunpack.c.l.b16 %v324
        %v349 = vunpack.c.l.b16 %v325
        %v350 = vpack.c.b16 %v347, %v346
        %v351 = vpack.c.b16 %v349, %v348
        %v370 = vunpack.c.l.b16 %v326
        %v371 = vunpack.c.h.b16 %v326
        %v372 = vunpack.c.l.b16 %v327
        %v373 = vunpack.c.h.b16 %v327
        %v374 = vunpack.c.l.b16 %v328
        %v375 = vunpack.c.h.b16 %v328
        %v376 = vunpack.c.l.b16 %v329
        %v377 = vunpack.c.h.b16 %v329
        %v378 = vunpack.c.l.b16 %v330
        %v379 = vunpack.c.h.b16 %v330
        %v380 = vunpack.c.l.b16 %v331
        %v381 = vunpack.c.h.b16 %v331
        %v382 = vunpack.c.l.b16 %v332
        %v383 = vunpack.c.h.b16 %v332
        %v384 = vunpack.c.l.b16 %v333
        %v385 = vunpack.c.h.b16 %v333
        %v386 = vunpack.c.l.b16 %v334
        %v387 = vunpack.c.h.b16 %v334
        %v388 = vunpack.c.l.b16 %v335
        %v389 = vunpack.c.h.b16 %v335
        %v390 = vunpack.c.l.b16 %v336
        %v391 = vunpack.c.h.b16 %v336
        %v392 = vunpack.c.l.b16 %v337
        %v393 = vunpack.c.h.b16 %v337
        %v394 = vunpack.c.l.b16 %v338
        %v395 = vunpack.c.h.b16 %v338
        %v396 = vunpack.c.l.b16 %v339
        %v397 = vunpack.c.h.b16 %v339
        %v398 = vunpack.c.l.b16 %v340
        %v399 = vunpack.c.h.b16 %v340
        %v400 = vunpack.c.l.b16 %v341
        %v401 = vunpack.c.h.b16 %v341
        %v402 = vpack.c.b16 %v372, %v370
        %v403 = vpack.c.b16 %v373, %v371
        %v404 = vpack.c.b16 %v376, %v374
        %v405 = vpack.c.b16 %v377, %v375
        %v406 = vpack.c.b16 %v380, %v378
        %v407 = vpack.c.b16 %v381, %v379
        %v408 = vpack.c.b16 %v384, %v382
        %v409 = vpack.c.b16 %v385, %v383
        %v410 = vpack.c.b16 %v388, %v386
        %v411 = vpack.c.b16 %v389, %v387
        %v412 = vpack.c.b16 %v392, %v390
        %v413 = vpack.c.b16 %v393, %v391
        %v414 = vpack.c.b16 %v396, %v394
        %v415 = vpack.c.b16 %v397, %v395
        %v416 = vpack.c.b16 %v400, %v398
        %v417 = vpack.c.b16 %v401, %v399
        %434 = vmatprep.subr.bf16.mxu0 %v403
        %435 = vmatpush1.bf16.msra.mxu0 %v402
        %436 = vmatprep.subr.bf16.mxu0 %v405
        %437 = vmatpush1.bf16.msra.mxu0 %v404
        %438 = vmatprep.subr.bf16.mxu0 %v407
        %439 = vmatpush1.bf16.msra.mxu0 %v406
        %440 = vmatprep.subr.bf16.mxu0 %v409
        %441 = vmatpush1.bf16.msra.mxu0 %v408
        %442 = vmatprep.subr.bf16.mxu0 %v411
        %443 = vmatpush1.bf16.msra.mxu0 %v410
        %444 = vmatprep.subr.bf16.mxu0 %v413
        %445 = vmatpush1.bf16.msra.mxu0 %v412
        %446 = vmatprep.subr.bf16.mxu0 %v415
        %447 = vmatpush1.bf16.msra.mxu0 %v414
        %448 = vmatprep.subr.bf16.mxu0 %v417
        %449 = vmatpush1.bf16.msra.mxu0 %v416
        %450 = vmatprep.subr.bf16.mxu0 0
        %451 = vmatpush1.bf16.msra.mxu0 0
        %452 = vmatprep.subr.bf16.mxu0 0
        %453 = vmatpush1.bf16.msra.mxu0 0
        %454 = vmatprep.subr.bf16.mxu0 0
        %455 = vmatpush1.bf16.msra.mxu0 0
        %456 = vmatprep.subr.bf16.mxu0 0
        %457 = vmatpush1.bf16.msra.mxu0 0
        %458 = vmatprep.subr.bf16.mxu0 0
        %459 = vmatpush1.bf16.msra.mxu0 0
        %460 = vmatprep.subr.bf16.mxu0 0
        %461 = vmatpush1.bf16.msra.mxu0 0
        %462 = vmatprep.subr.bf16.mxu0 0
        %463 = vmatpush1.bf16.msra.mxu0 0
        %464 = vmatprep.subr.bf16.mxu0 0
        %465 = vmatpush1.bf16.msra.mxu0 0
        %466 = vmatprep.mubr.bf16.mxu0 0
        %467 = vmatmul.mubr.bf16.gmra.mrb[0].mxu0 %v350
        %v468 = vpop.f32.mrb[0].mxu0
        %v469 = vadd.f32 0.0, %v468
        %v470 = vpop.f32.mrb[0].mxu0
        %v471 = vadd.f32 0.0, %v470
        %v472 = vpop.f32.mrb[0].mxu0
        %v473 = vadd.f32 0.0, %v472
        %v474 = vpop.f32.mrb[0].mxu0
        %v475 = vadd.f32 0.0, %v474
        %476 = vmatprep.mubr.bf16.mxu0 0
        %477 = vmatmul.mubr.bf16.gmra.mrb[0].mxu0 %v351
        %v478 = vpop.f32.mrb[0].mxu0
        %v479 = vadd.f32 0.0, %v478
        %v480 = vpop.f32.mrb[0].mxu0
        %v481 = vadd.f32 0.0, %v480
        %v482 = vpop.f32.mrb[0].mxu0
        %v483 = vadd.f32 0.0, %v482
        %v484 = vpop.f32.mrb[0].mxu0
        %v485 = vadd.f32 0.0, %v484
        %486 = vdwg.mxu0
        %v487 = vmax.f32 %v469, 0.0
        %v488 = vmax.f32 %v471, 0.0
        %v489 = vmax.f32 %v473, 0.0
        %v490 = vmax.f32 %v475, 0.0
        %v491 = vmax.f32 %v479, 0.0
        %v492 = vmax.f32 %v481, 0.0
        %v493 = vmax.f32 %v483, 0.0
        %v494 = vmax.f32 %v485, 0.0
        %495 = vst [vmem:[#allocation2] sm:$0xff] %v487
        %496 = vst [vmem:[#allocation2 + $0x8] sm:$0xff] %v488
        %497 = vst [vmem:[#allocation2 + $0x10] sm:$0xff] %v489
        %498 = vst [vmem:[#allocation2 + $0x18] sm:$0xff] %v490
        %499 = vst [vmem:[#allocation2 + $0x20] sm:$0xff] %v491
        %500 = vst [vmem:[#allocation2 + $0x28] sm:$0xff] %v492
        %501 = vst [vmem:[#allocation2 + $0x30] sm:$0xf] %v493
        %502 = vst [vmem:[#allocation2 + $0x38] sm:$0xf] %v494
        %v503 = vld [vmem:[#allocation2] sm:$0xfe]
        %v504 = vld [vmem:[#allocation2 + $0x8] sm:$0xfe]
        %v505 = vld [vmem:[#allocation2 + $0x10] sm:$0xff]
        %v506 = vld [vmem:[#allocation2 + $0x18] sm:$0xff]
        %v507 = vld [vmem:[#allocation2 + $0x20] sm:$0xff]
        %v508 = vld [vmem:[#allocation2 + $0x28] sm:$0xff]
        %v509 = vld [vmem:[#allocation2 + $0x30] sm:$0x1f]
        %v510 = vld [vmem:[#allocation2 + $0x38] sm:$0x1f]
        %v511 = vlaneseq
        %v512 = vshrl.u32 %v511, 7
        %v513 = vadd.s32 %v512, 8
        %v514 = vadd.s32 %v512, 16
        %v515 = vadd.s32 %v512, 24
        %vm516 = vcmp.ne.s32.totalorder %v512, 6
        %vm517 = vcmp.ne.s32.totalorder %v513, 6
        %vm518 = vcmp.ne.s32.totalorder %v514, 6
        %vm519 = vcmp.ne.s32.totalorder %v515, 6
        %vm520 = vcmp.ne.s32.totalorder %v512, 13
        %vm521 = vcmp.ne.s32.totalorder %v513, 13
        %vm522 = vcmp.ne.s32.totalorder %v514, 13
        %vm523 = vcmp.ne.s32.totalorder %v515, 13
        %vm524 = vmand %vm516, %vm520
        %vm525 = vmand %vm517, %vm521
        %vm526 = vmand %vm518, %vm522
        %vm527 = vmand %vm519, %vm523
        %vm528 = vcmp.ne.s32.totalorder %v512, 20
        %vm529 = vcmp.ne.s32.totalorder %v513, 20
        %vm530 = vcmp.ne.s32.totalorder %v514, 20
        %vm531 = vcmp.ne.s32.totalorder %v515, 20
        %vm532 = vmand %vm524, %vm528
        %vm533 = vmand %vm525, %vm529
        %vm534 = vmand %vm526, %vm530
        %vm535 = vmand %vm527, %vm531
        %vm536 = vcmp.ne.s32.totalorder %v512, 27
        %vm537 = vcmp.ne.s32.totalorder %v513, 27
        %vm538 = vcmp.ne.s32.totalorder %v514, 27
        %vm539 = vcmp.ne.s32.totalorder %v515, 27
        %vm540 = vmand %vm532, %vm536
        %vm541 = vmand %vm533, %vm537
        %vm542 = vmand %vm534, %vm538
        %vm543 = vmand %vm535, %vm539
        %vm552 = vcmask 1046528
        %v553 = vrot.slane %v503, 1
        %v554 = vrot.slane %v505, 1
        %v555 = vsel %vm552, %v553, %v554
        %v556 = vrot.slane %v504, 1
        %v557 = vrot.slane %v506, 1
        %v558 = vsel %vm552, %v556, %v557
        %v559 = vrot.slane %v507, 1
        %v560 = vsel %vm552, %v554, %v559
        %v561 = vrot.slane %v508, 1
        %v562 = vsel %vm552, %v557, %v561
        %v563 = vrot.slane %v509, 1
        %v564 = vsel %vm552, %v559, %v563
        %v565 = vrot.slane %v510, 1
        %v566 = vsel %vm552, %v561, %v565
        %v575 = vsel %vm540, %v555, 0.0
        %v576 = vsel %vm540, %v558, 0.0
        %v577 = vsel %vm541, %v560, 0.0
        %v578 = vsel %vm541, %v562, 0.0
        %v579 = vsel %vm542, %v564, 0.0
        %v580 = vsel %vm542, %v566, 0.0
        %v581 = vsel %vm543, %v563, 0.0
        %v582 = vsel %vm543, %v565, 0.0
        %v583 = vpack.c.bf16 %v489, %v487
        %v584 = vpack.c.bf16 %v490, %v488
        %v585 = vpack.c.bf16 %v493, %v491
        %v586 = vpack.c.bf16 %v494, %v492
        %v587 = vpack.c.bf16 %v577, %v575
        %v588 = vpack.c.bf16 %v578, %v576
        %v589 = vpack.c.bf16 %v581, %v579
        %v590 = vpack.c.bf16 %v582, %v580
        %v591 = vld [vmem:[#allocation5] sm:$0xff]
        %v592 = vld [vmem:[#allocation5 + $0x8] sm:$0xff]
        %v593 = vld [vmem:[#allocation5 + $0x10] sm:$0xff]
        %v594 = vld [vmem:[#allocation5 + $0x18] sm:$0xff]
        %v595 = vld [vmem:[#allocation5 + $0x20] sm:$0xff]
        %v596 = vld [vmem:[#allocation5 + $0x28] sm:$0xff]
        %v597 = vld [vmem:[#allocation5 + $0x30] sm:$0xff]
        %v598 = vld [vmem:[#allocation5 + $0x38] sm:$0xff]
        %v599 = vld [vmem:[#allocation5 + $0x40] sm:$0xff]
        %v600 = vld [vmem:[#allocation5 + $0x48] sm:$0xff]
        %v601 = vld [vmem:[#allocation5 + $0x50] sm:$0xff]
        %v602 = vld [vmem:[#allocation5 + $0x58] sm:$0xff]
        %v603 = vld [vmem:[#allocation5 + $0x60] sm:$0xff]
        %v604 = vld [vmem:[#allocation5 + $0x68] sm:$0xff]
        %v605 = vld [vmem:[#allocation5 + $0x70] sm:$0xff]
        %v606 = vld [vmem:[#allocation5 + $0x78] sm:$0xff]
        %v607 = vld [vmem:[#allocation5 + $0x80] sm:$0xff]
        %v608 = vld [vmem:[#allocation5 + $0x88] sm:$0xff]
        %v609 = vld [vmem:[#allocation5 + $0x90] sm:$0xff]
        %v610 = vld [vmem:[#allocation5 + $0x98] sm:$0xff]
        %v611 = vld [vmem:[#allocation5 + $0xa0] sm:$0xff]
        %v612 = vld [vmem:[#allocation5 + $0xa8] sm:$0xff]
        %v613 = vld [vmem:[#allocation5 + $0xb0] sm:$0xff]
        %v614 = vld [vmem:[#allocation5 + $0xb8] sm:$0xff]
        %v615 = vld [vmem:[#allocation5 + $0xc0] sm:$0xff]
        %v616 = vld [vmem:[#allocation5 + $0xc8] sm:$0xff]
        %v617 = vld [vmem:[#allocation5 + $0xd0] sm:$0xff]
        %v618 = vld [vmem:[#allocation5 + $0xd8] sm:$0xff]
        %v619 = vld [vmem:[#allocation5 + $0xe0] sm:$0xff]
        %v620 = vld [vmem:[#allocation5 + $0xe8] sm:$0xff]
        %v621 = vld [vmem:[#allocation5 + $0xf0] sm:$0xff]
        %v622 = vld [vmem:[#allocation5 + $0xf8] sm:$0xff]
        %s623 = scalar_lea.vmem [#allocation5], 512
        %v624 = vld [vmem:[%s623] sm:$0xff]
        %v625 = vld [vmem:[%s623 + $0x8] sm:$0xff]
        %v626 = vld [vmem:[%s623 + $0x10] sm:$0xff]
        %v627 = vld [vmem:[%s623 + $0x18] sm:$0xff]
        %v628 = vld [vmem:[%s623 + $0x20] sm:$0xff]
        %v629 = vld [vmem:[%s623 + $0x28] sm:$0xff]
        %v630 = vld [vmem:[%s623 + $0x30] sm:$0xff]
        %v631 = vld [vmem:[%s623 + $0x38] sm:$0xff]
        %v632 = vld [vmem:[%s623 + $0x40] sm:$0xff]
        %v633 = vld [vmem:[%s623 + $0x48] sm:$0xff]
        %v634 = vld [vmem:[%s623 + $0x50] sm:$0xff]
        %v635 = vld [vmem:[%s623 + $0x58] sm:$0xff]
        %v636 = vld [vmem:[%s623 + $0x60] sm:$0xff]
        %v637 = vld [vmem:[%s623 + $0x68] sm:$0xff]
        %v638 = vld [vmem:[%s623 + $0x70] sm:$0xff]
        %v639 = vld [vmem:[%s623 + $0x78] sm:$0xff]
        %v640 = vld [vmem:[%s623 + $0x80] sm:$0xff]
        %v641 = vld [vmem:[%s623 + $0x88] sm:$0xff]
        %v642 = vld [vmem:[%s623 + $0x90] sm:$0xff]
        %v643 = vld [vmem:[%s623 + $0x98] sm:$0xff]
        %v644 = vld [vmem:[%s623 + $0xa0] sm:$0xff]
        %v645 = vld [vmem:[%s623 + $0xa8] sm:$0xff]
        %v646 = vld [vmem:[%s623 + $0xb0] sm:$0xff]
        %v647 = vld [vmem:[%s623 + $0xb8] sm:$0xff]
        %v648 = vld [vmem:[%s623 + $0xc0] sm:$0xff]
        %v649 = vld [vmem:[%s623 + $0xc8] sm:$0xff]
        %v650 = vld [vmem:[%s623 + $0xd0] sm:$0xff]
        %v651 = vld [vmem:[%s623 + $0xd8] sm:$0xff]
        %v652 = vld [vmem:[%s623 + $0xe0] sm:$0xff]
        %v653 = vld [vmem:[%s623 + $0xe8] sm:$0xff]
        %v654 = vld [vmem:[%s623 + $0xf0] sm:$0xff]
        %v655 = vld [vmem:[%s623 + $0xf8] sm:$0xff]
        %v688 = vunpack.c.l.b16 %v624
        %v689 = vunpack.c.h.b16 %v624
        %v690 = vunpack.c.l.b16 %v625
        %v691 = vunpack.c.h.b16 %v625
        %v692 = vunpack.c.l.b16 %v626
        %v693 = vunpack.c.h.b16 %v626
        %v694 = vunpack.c.l.b16 %v627
        %v695 = vunpack.c.h.b16 %v627
        %v696 = vunpack.c.l.b16 %v628
        %v697 = vunpack.c.h.b16 %v628
        %v698 = vunpack.c.l.b16 %v629
        %v699 = vunpack.c.h.b16 %v629
        %v700 = vunpack.c.l.b16 %v630
        %v701 = vunpack.c.h.b16 %v630
        %v702 = vunpack.c.l.b16 %v631
        %v703 = vunpack.c.h.b16 %v631
        %v704 = vunpack.c.l.b16 %v632
        %v705 = vunpack.c.h.b16 %v632
        %v706 = vunpack.c.l.b16 %v633
        %v707 = vunpack.c.h.b16 %v633
        %v708 = vunpack.c.l.b16 %v634
        %v709 = vunpack.c.h.b16 %v634
        %v710 = vunpack.c.l.b16 %v635
        %v711 = vunpack.c.h.b16 %v635
        %v712 = vunpack.c.l.b16 %v636
        %v713 = vunpack.c.h.b16 %v636
        %v714 = vunpack.c.l.b16 %v637
        %v715 = vunpack.c.h.b16 %v637
        %v716 = vunpack.c.l.b16 %v638
        %v717 = vunpack.c.h.b16 %v638
        %v718 = vunpack.c.l.b16 %v639
        %v719 = vunpack.c.h.b16 %v639
        %v720 = vunpack.c.l.b16 %v640
        %v721 = vunpack.c.h.b16 %v640
        %v722 = vunpack.c.l.b16 %v641
        %v723 = vunpack.c.h.b16 %v641
        %v724 = vunpack.c.l.b16 %v642
        %v725 = vunpack.c.h.b16 %v642
        %v726 = vunpack.c.l.b16 %v643
        %v727 = vunpack.c.h.b16 %v643
        %v728 = vunpack.c.l.b16 %v644
        %v729 = vunpack.c.h.b16 %v644
        %v730 = vunpack.c.l.b16 %v645
        %v731 = vunpack.c.h.b16 %v645
        %v732 = vunpack.c.l.b16 %v646
        %v733 = vunpack.c.h.b16 %v646
        %v734 = vunpack.c.l.b16 %v647
        %v735 = vunpack.c.h.b16 %v647
        %v736 = vunpack.c.l.b16 %v648
        %v737 = vunpack.c.h.b16 %v648
        %v738 = vunpack.c.l.b16 %v649
        %v739 = vunpack.c.h.b16 %v649
        %v740 = vunpack.c.l.b16 %v650
        %v741 = vunpack.c.h.b16 %v650
        %v742 = vunpack.c.l.b16 %v651
        %v743 = vunpack.c.h.b16 %v651
        %v744 = vunpack.c.l.b16 %v652
        %v745 = vunpack.c.h.b16 %v652
        %v746 = vunpack.c.l.b16 %v653
        %v747 = vunpack.c.h.b16 %v653
        %v748 = vunpack.c.l.b16 %v654
        %v749 = vunpack.c.h.b16 %v654
        %v750 = vunpack.c.l.b16 %v655
        %v751 = vunpack.c.h.b16 %v655
        %v752 = vpack.c.b16 %v690, %v688
        %v753 = vpack.c.b16 %v691, %v689
        %v754 = vpack.c.b16 %v694, %v692
        %v755 = vpack.c.b16 %v695, %v693
        %v756 = vpack.c.b16 %v698, %v696
        %v757 = vpack.c.b16 %v699, %v697
        %v758 = vpack.c.b16 %v702, %v700
        %v759 = vpack.c.b16 %v703, %v701
        %v760 = vpack.c.b16 %v706, %v704
        %v761 = vpack.c.b16 %v707, %v705
        %v762 = vpack.c.b16 %v710, %v708
        %v763 = vpack.c.b16 %v711, %v709
        %v764 = vpack.c.b16 %v714, %v712
        %v765 = vpack.c.b16 %v715, %v713
        %v766 = vpack.c.b16 %v718, %v716
        %v767 = vpack.c.b16 %v719, %v717
        %v768 = vpack.c.b16 %v722, %v720
        %v769 = vpack.c.b16 %v723, %v721
        %v770 = vpack.c.b16 %v726, %v724
        %v771 = vpack.c.b16 %v727, %v725
        %v772 = vpack.c.b16 %v730, %v728
        %v773 = vpack.c.b16 %v731, %v729
        %v774 = vpack.c.b16 %v734, %v732
        %v775 = vpack.c.b16 %v735, %v733
        %v776 = vpack.c.b16 %v738, %v736
        %v777 = vpack.c.b16 %v739, %v737
        %v778 = vpack.c.b16 %v742, %v740
        %v779 = vpack.c.b16 %v743, %v741
        %v780 = vpack.c.b16 %v746, %v744
        %v781 = vpack.c.b16 %v747, %v745
        %v782 = vpack.c.b16 %v750, %v748
        %v783 = vpack.c.b16 %v751, %v749
        %816 = vmatprep.subr.bf16.mxu0 %v753
        %817 = vmatpush1.bf16.msra.mxu0 %v752
        %818 = vmatprep.subr.bf16.mxu0 %v755
        %819 = vmatpush1.bf16.msra.mxu0 %v754
        %820 = vmatprep.subr.bf16.mxu0 %v757
        %821 = vmatpush1.bf16.msra.mxu0 %v756
        %822 = vmatprep.subr.bf16.mxu0 %v759
        %823 = vmatpush1.bf16.msra.mxu0 %v758
        %824 = vmatprep.subr.bf16.mxu0 %v761
        %825 = vmatpush1.bf16.msra.mxu0 %v760
        %826 = vmatprep.subr.bf16.mxu0 %v763
        %827 = vmatpush1.bf16.msra.mxu0 %v762
        %828 = vmatprep.subr.bf16.mxu0 %v765
        %829 = vmatpush1.bf16.msra.mxu0 %v764
        %830 = vmatprep.subr.bf16.mxu0 %v767
        %831 = vmatpush1.bf16.msra.mxu0 %v766
        %832 = vmatprep.subr.bf16.mxu0 %v769
        %833 = vmatpush1.bf16.msra.mxu0 %v768
        %834 = vmatprep.subr.bf16.mxu0 %v771
        %835 = vmatpush1.bf16.msra.mxu0 %v770
        %836 = vmatprep.subr.bf16.mxu0 %v773
        %837 = vmatpush1.bf16.msra.mxu0 %v772
        %838 = vmatprep.subr.bf16.mxu0 %v775
        %839 = vmatpush1.bf16.msra.mxu0 %v774
        %840 = vmatprep.subr.bf16.mxu0 %v777
        %841 = vmatpush1.bf16.msra.mxu0 %v776
        %842 = vmatprep.subr.bf16.mxu0 %v779
        %843 = vmatpush1.bf16.msra.mxu0 %v778
        %844 = vmatprep.subr.bf16.mxu0 %v781
        %845 = vmatpush1.bf16.msra.mxu0 %v780
        %846 = vmatprep.subr.bf16.mxu0 %v783
        %847 = vmatpush1.bf16.msra.mxu0 %v782
        %848 = vmatprep.mubr.bf16.mxu0 %v588
        %849 = vmatmul.mubr.bf16.gmra.mrb[0].mxu0 %v587
        %v850 = vpop.f32.mrb[0].mxu0
        %v851 = vadd.f32 0.0, %v850
        %v852 = vpop.f32.mrb[0].mxu0
        %v853 = vadd.f32 0.0, %v852
        %v854 = vpop.f32.mrb[0].mxu0
        %v855 = vadd.f32 0.0, %v854
        %v856 = vpop.f32.mrb[0].mxu0
        %v857 = vadd.f32 0.0, %v856
        %858 = vmatprep.mubr.bf16.mxu0 %v590
        %859 = vmatmul.mubr.bf16.gmra.mrb[0].mxu0 %v589
        %v860 = vpop.f32.mrb[0].mxu0
        %v861 = vadd.f32 0.0, %v860
        %v862 = vpop.f32.mrb[0].mxu0
        %v863 = vadd.f32 0.0, %v862
        %v864 = vpop.f32.mrb[0].mxu0
        %v865 = vadd.f32 0.0, %v864
        %v866 = vpop.f32.mrb[0].mxu0
        %v867 = vadd.f32 0.0, %v866
        %868 = vdwg.mxu0
        %v901 = vunpack.c.l.b16 %v591
        %v902 = vunpack.c.h.b16 %v591
        %v903 = vunpack.c.l.b16 %v592
        %v904 = vunpack.c.h.b16 %v592
        %v905 = vunpack.c.l.b16 %v593
        %v906 = vunpack.c.h.b16 %v593
        %v907 = vunpack.c.l.b16 %v594
        %v908 = vunpack.c.h.b16 %v594
        %v909 = vunpack.c.l.b16 %v595
        %v910 = vunpack.c.h.b16 %v595
        %v911 = vunpack.c.l.b16 %v596
        %v912 = vunpack.c.h.b16 %v596
        %v913 = vunpack.c.l.b16 %v597
        %v914 = vunpack.c.h.b16 %v597
        %v915 = vunpack.c.l.b16 %v598
        %v916 = vunpack.c.h.b16 %v598
        %v917 = vunpack.c.l.b16 %v599
        %v918 = vunpack.c.h.b16 %v599
        %v919 = vunpack.c.l.b16 %v600
        %v920 = vunpack.c.h.b16 %v600
        %v921 = vunpack.c.l.b16 %v601
        %v922 = vunpack.c.h.b16 %v601
        %v923 = vunpack.c.l.b16 %v602
        %v924 = vunpack.c.h.b16 %v602
        %v925 = vunpack.c.l.b16 %v603
        %v926 = vunpack.c.h.b16 %v603
        %v927 = vunpack.c.l.b16 %v604
        %v928 = vunpack.c.h.b16 %v604
        %v929 = vunpack.c.l.b16 %v605
        %v930 = vunpack.c.h.b16 %v605
        %v931 = vunpack.c.l.b16 %v606
        %v932 = vunpack.c.h.b16 %v606
        %v933 = vunpack.c.l.b16 %v607
        %v934 = vunpack.c.h.b16 %v607
        %v935 = vunpack.c.l.b16 %v608
        %v936 = vunpack.c.h.b16 %v608
        %v937 = vunpack.c.l.b16 %v609
        %v938 = vunpack.c.h.b16 %v609
        %v939 = vunpack.c.l.b16 %v610
        %v940 = vunpack.c.h.b16 %v610
        %v941 = vunpack.c.l.b16 %v611
        %v942 = vunpack.c.h.b16 %v611
        %v943 = vunpack.c.l.b16 %v612
        %v944 = vunpack.c.h.b16 %v612
        %v945 = vunpack.c.l.b16 %v613
        %v946 = vunpack.c.h.b16 %v613
        %v947 = vunpack.c.l.b16 %v614
        %v948 = vunpack.c.h.b16 %v614
        %v949 = vunpack.c.l.b16 %v615
        %v950 = vunpack.c.h.b16 %v615
        %v951 = vunpack.c.l.b16 %v616
        %v952 = vunpack.c.h.b16 %v616
        %v953 = vunpack.c.l.b16 %v617
        %v954 = vunpack.c.h.b16 %v617
        %v955 = vunpack.c.l.b16 %v618
        %v956 = vunpack.c.h.b16 %v618
        %v957 = vunpack.c.l.b16 %v619
        %v958 = vunpack.c.h.b16 %v619
        %v959 = vunpack.c.l.b16 %v620
        %v960 = vunpack.c.h.b16 %v620
        %v961 = vunpack.c.l.b16 %v621
        %v962 = vunpack.c.h.b16 %v621
        %v963 = vunpack.c.l.b16 %v622
        %v964 = vunpack.c.h.b16 %v622
        %v965 = vpack.c.b16 %v903, %v901
        %v966 = vpack.c.b16 %v904, %v902
        %v967 = vpack.c.b16 %v907, %v905
        %v968 = vpack.c.b16 %v908, %v906
        %v969 = vpack.c.b16 %v911, %v909
        %v970 = vpack.c.b16 %v912, %v910
        %v971 = vpack.c.b16 %v915, %v913
        %v972 = vpack.c.b16 %v916, %v914
        %v973 = vpack.c.b16 %v919, %v917
        %v974 = vpack.c.b16 %v920, %v918
        %v975 = vpack.c.b16 %v923, %v921
        %v976 = vpack.c.b16 %v924, %v922
        %v977 = vpack.c.b16 %v927, %v925
        %v978 = vpack.c.b16 %v928, %v926
        %v979 = vpack.c.b16 %v931, %v929
        %v980 = vpack.c.b16 %v932, %v930
        %v981 = vpack.c.b16 %v935, %v933
        %v982 = vpack.c.b16 %v936, %v934
        %v983 = vpack.c.b16 %v939, %v937
        %v984 = vpack.c.b16 %v940, %v938
        %v985 = vpack.c.b16 %v943, %v941
        %v986 = vpack.c.b16 %v944, %v942
        %v987 = vpack.c.b16 %v947, %v945
        %v988 = vpack.c.b16 %v948, %v946
        %v989 = vpack.c.b16 %v951, %v949
        %v990 = vpack.c.b16 %v952, %v950
        %v991 = vpack.c.b16 %v955, %v953
        %v992 = vpack.c.b16 %v956, %v954
        %v993 = vpack.c.b16 %v959, %v957
        %v994 = vpack.c.b16 %v960, %v958
        %v995 = vpack.c.b16 %v963, %v961
        %v996 = vpack.c.b16 %v964, %v962
        %1029 = vmatprep.subr.bf16.mxu0 %v966
        %1030 = vmatpush1.bf16.msra.mxu0 %v965
        %1031 = vmatprep.subr.bf16.mxu0 %v968
        %1032 = vmatpush1.bf16.msra.mxu0 %v967
        %1033 = vmatprep.subr.bf16.mxu0 %v970
        %1034 = vmatpush1.bf16.msra.mxu0 %v969
        %1035 = vmatprep.subr.bf16.mxu0 %v972
        %1036 = vmatpush1.bf16.msra.mxu0 %v971
        %1037 = vmatprep.subr.bf16.mxu0 %v974
        %1038 = vmatpush1.bf16.msra.mxu0 %v973
        %1039 = vmatprep.subr.bf16.mxu0 %v976
        %1040 = vmatpush1.bf16.msra.mxu0 %v975
        %1041 = vmatprep.subr.bf16.mxu0 %v978
        %1042 = vmatpush1.bf16.msra.mxu0 %v977
        %1043 = vmatprep.subr.bf16.mxu0 %v980
        %1044 = vmatpush1.bf16.msra.mxu0 %v979
        %1045 = vmatprep.subr.bf16.mxu0 %v982
        %1046 = vmatpush1.bf16.msra.mxu0 %v981
        %1047 = vmatprep.subr.bf16.mxu0 %v984
        %1048 = vmatpush1.bf16.msra.mxu0 %v983
        %1049 = vmatprep.subr.bf16.mxu0 %v986
        %1050 = vmatpush1.bf16.msra.mxu0 %v985
        %1051 = vmatprep.subr.bf16.mxu0 %v988
        %1052 = vmatpush1.bf16.msra.mxu0 %v987
        %1053 = vmatprep.subr.bf16.mxu0 %v990
        %1054 = vmatpush1.bf16.msra.mxu0 %v989
        %1055 = vmatprep.subr.bf16.mxu0 %v992
        %1056 = vmatpush1.bf16.msra.mxu0 %v991
        %1057 = vmatprep.subr.bf16.mxu0 %v994
        %1058 = vmatpush1.bf16.msra.mxu0 %v993
        %1059 = vmatprep.subr.bf16.mxu0 %v996
        %1060 = vmatpush1.bf16.msra.mxu0 %v995
        %1061 = vmatprep.mubr.bf16.mxu0 %v584
        %1062 = vmatmul.mubr.bf16.gmra.mrb[0].mxu0 %v583
        %v1063 = vpop.f32.mrb[0].mxu0
        %v1064 = vadd.f32 %v851, %v1063
        %v1065 = vpop.f32.mrb[0].mxu0
        %v1066 = vadd.f32 %v853, %v1065
        %v1067 = vpop.f32.mrb[0].mxu0
        %v1068 = vadd.f32 %v855, %v1067
        %v1069 = vpop.f32.mrb[0].mxu0
        %v1070 = vadd.f32 %v857, %v1069
        %1071 = vmatprep.mubr.bf16.mxu0 %v586
        %1072 = vmatmul.mubr.bf16.gmra.mrb[0].mxu0 %v585
        %v1073 = vpop.f32.mrb[0].mxu0
        %v1074 = vadd.f32 %v861, %v1073
        %v1075 = vpop.f32.mrb[0].mxu0
        %v1076 = vadd.f32 %v863, %v1075
        %v1077 = vpop.f32.mrb[0].mxu0
        %v1078 = vadd.f32 %v865, %v1077
        %v1079 = vpop.f32.mrb[0].mxu0
        %v1080 = vadd.f32 %v867, %v1079
        %1081 = vdwg.mxu0
        %s1082 = scalar_lea.vmem [#allocation5], 256
        %v1083 = vld [vmem:[%s1082] sm:$0xff]
        %v1084 = vld [vmem:[%s1082 + $0x8] sm:$0xff]
        %v1085 = vld [vmem:[%s1082 + $0x10] sm:$0xff]
        %v1086 = vld [vmem:[%s1082 + $0x18] sm:$0xff]
        %v1087 = vld [vmem:[%s1082 + $0x20] sm:$0xff]
        %v1088 = vld [vmem:[%s1082 + $0x28] sm:$0xff]
        %v1089 = vld [vmem:[%s1082 + $0x30] sm:$0xff]
        %v1090 = vld [vmem:[%s1082 + $0x38] sm:$0xff]
        %v1091 = vld [vmem:[%s1082 + $0x40] sm:$0xff]
        %v1092 = vld [vmem:[%s1082 + $0x48] sm:$0xff]
        %v1093 = vld [vmem:[%s1082 + $0x50] sm:$0xff]
        %v1094 = vld [vmem:[%s1082 + $0x58] sm:$0xff]
        %v1095 = vld [vmem:[%s1082 + $0x60] sm:$0xff]
        %v1096 = vld [vmem:[%s1082 + $0x68] sm:$0xff]
        %v1097 = vld [vmem:[%s1082 + $0x70] sm:$0xff]
        %v1098 = vld [vmem:[%s1082 + $0x78] sm:$0xff]
        %v1099 = vld [vmem:[%s1082 + $0x80] sm:$0xff]
        %v1100 = vld [vmem:[%s1082 + $0x88] sm:$0xff]
        %v1101 = vld [vmem:[%s1082 + $0x90] sm:$0xff]
        %v1102 = vld [vmem:[%s1082 + $0x98] sm:$0xff]
        %v1103 = vld [vmem:[%s1082 + $0xa0] sm:$0xff]
        %v1104 = vld [vmem:[%s1082 + $0xa8] sm:$0xff]
        %v1105 = vld [vmem:[%s1082 + $0xb0] sm:$0xff]
        %v1106 = vld [vmem:[%s1082 + $0xb8] sm:$0xff]
        %v1107 = vld [vmem:[%s1082 + $0xc0] sm:$0xff]
        %v1108 = vld [vmem:[%s1082 + $0xc8] sm:$0xff]
        %v1109 = vld [vmem:[%s1082 + $0xd0] sm:$0xff]
        %v1110 = vld [vmem:[%s1082 + $0xd8] sm:$0xff]
        %v1111 = vld [vmem:[%s1082 + $0xe0] sm:$0xff]
        %v1112 = vld [vmem:[%s1082 + $0xe8] sm:$0xff]
        %v1113 = vld [vmem:[%s1082 + $0xf0] sm:$0xff]
        %v1114 = vld [vmem:[%s1082 + $0xf8] sm:$0xff]
        %s1115 = scalar_lea.vmem [#allocation5], 768
        %v1116 = vld [vmem:[%s1115] sm:$0xff]
        %v1117 = vld [vmem:[%s1115 + $0x8] sm:$0xff]
        %v1118 = vld [vmem:[%s1115 + $0x10] sm:$0xff]
        %v1119 = vld [vmem:[%s1115 + $0x18] sm:$0xff]
        %v1120 = vld [vmem:[%s1115 + $0x20] sm:$0xff]
        %v1121 = vld [vmem:[%s1115 + $0x28] sm:$0xff]
        %v1122 = vld [vmem:[%s1115 + $0x30] sm:$0xff]
        %v1123 = vld [vmem:[%s1115 + $0x38] sm:$0xff]
        %v1124 = vld [vmem:[%s1115 + $0x40] sm:$0xff]
        %v1125 = vld [vmem:[%s1115 + $0x48] sm:$0xff]
        %v1126 = vld [vmem:[%s1115 + $0x50] sm:$0xff]
        %v1127 = vld [vmem:[%s1115 + $0x58] sm:$0xff]
        %v1128 = vld [vmem:[%s1115 + $0x60] sm:$0xff]
        %v1129 = vld [vmem:[%s1115 + $0x68] sm:$0xff]
        %v1130 = vld [vmem:[%s1115 + $0x70] sm:$0xff]
        %v1131 = vld [vmem:[%s1115 + $0x78] sm:$0xff]
        %v1132 = vld [vmem:[%s1115 + $0x80] sm:$0xff]
        %v1133 = vld [vmem:[%s1115 + $0x88] sm:$0xff]
        %v1134 = vld [vmem:[%s1115 + $0x90] sm:$0xff]
        %v1135 = vld [vmem:[%s1115 + $0x98] sm:$0xff]
        %v1136 = vld [vmem:[%s1115 + $0xa0] sm:$0xff]
        %v1137 = vld [vmem:[%s1115 + $0xa8] sm:$0xff]
        %v1138 = vld [vmem:[%s1115 + $0xb0] sm:$0xff]
        %v1139 = vld [vmem:[%s1115 + $0xb8] sm:$0xff]
        %v1140 = vld [vmem:[%s1115 + $0xc0] sm:$0xff]
        %v1141 = vld [vmem:[%s1115 + $0xc8] sm:$0xff]
        %v1142 = vld [vmem:[%s1115 + $0xd0] sm:$0xff]
        %v1143 = vld [vmem:[%s1115 + $0xd8] sm:$0xff]
        %v1144 = vld [vmem:[%s1115 + $0xe0] sm:$0xff]
        %v1145 = vld [vmem:[%s1115 + $0xe8] sm:$0xff]
        %v1146 = vld [vmem:[%s1115 + $0xf0] sm:$0xff]
        %v1147 = vld [vmem:[%s1115 + $0xf8] sm:$0xff]
        %v1180 = vunpack.c.l.b16 %v1116
        %v1181 = vunpack.c.h.b16 %v1116
        %v1182 = vunpack.c.l.b16 %v1117
        %v1183 = vunpack.c.h.b16 %v1117
        %v1184 = vunpack.c.l.b16 %v1118
        %v1185 = vunpack.c.h.b16 %v1118
        %v1186 = vunpack.c.l.b16 %v1119
        %v1187 = vunpack.c.h.b16 %v1119
        %v1188 = vunpack.c.l.b16 %v1120
        %v1189 = vunpack.c.h.b16 %v1120
        %v1190 = vunpack.c.l.b16 %v1121
        %v1191 = vunpack.c.h.b16 %v1121
        %v1192 = vunpack.c.l.b16 %v1122
        %v1193 = vunpack.c.h.b16 %v1122
        %v1194 = vunpack.c.l.b16 %v1123
        %v1195 = vunpack.c.h.b16 %v1123
        %v1196 = vunpack.c.l.b16 %v1124
        %v1197 = vunpack.c.h.b16 %v1124
        %v1198 = vunpack.c.l.b16 %v1125
        %v1199 = vunpack.c.h.b16 %v1125
        %v1200 = vunpack.c.l.b16 %v1126
        %v1201 = vunpack.c.h.b16 %v1126
        %v1202 = vunpack.c.l.b16 %v1127
        %v1203 = vunpack.c.h.b16 %v1127
        %v1204 = vunpack.c.l.b16 %v1128
        %v1205 = vunpack.c.h.b16 %v1128
        %v1206 = vunpack.c.l.b16 %v1129
        %v1207 = vunpack.c.h.b16 %v1129
        %v1208 = vunpack.c.l.b16 %v1130
        %v1209 = vunpack.c.h.b16 %v1130
        %v1210 = vunpack.c.l.b16 %v1131
        %v1211 = vunpack.c.h.b16 %v1131
        %v1212 = vunpack.c.l.b16 %v1132
        %v1213 = vunpack.c.h.b16 %v1132
        %v1214 = vunpack.c.l.b16 %v1133
        %v1215 = vunpack.c.h.b16 %v1133
        %v1216 = vunpack.c.l.b16 %v1134
        %v1217 = vunpack.c.h.b16 %v1134
        %v1218 = vunpack.c.l.b16 %v1135
        %v1219 = vunpack.c.h.b16 %v1135
        %v1220 = vunpack.c.l.b16 %v1136
        %v1221 = vunpack.c.h.b16 %v1136
        %v1222 = vunpack.c.l.b16 %v1137
        %v1223 = vunpack.c.h.b16 %v1137
        %v1224 = vunpack.c.l.b16 %v1138
        %v1225 = vunpack.c.h.b16 %v1138
        %v1226 = vunpack.c.l.b16 %v1139
        %v1227 = vunpack.c.h.b16 %v1139
        %v1228 = vunpack.c.l.b16 %v1140
        %v1229 = vunpack.c.h.b16 %v1140
        %v1230 = vunpack.c.l.b16 %v1141
        %v1231 = vunpack.c.h.b16 %v1141
        %v1232 = vunpack.c.l.b16 %v1142
        %v1233 = vunpack.c.h.b16 %v1142
        %v1234 = vunpack.c.l.b16 %v1143
        %v1235 = vunpack.c.h.b16 %v1143
        %v1236 = vunpack.c.l.b16 %v1144
        %v1237 = vunpack.c.h.b16 %v1144
        %v1238 = vunpack.c.l.b16 %v1145
        %v1239 = vunpack.c.h.b16 %v1145
        %v1240 = vunpack.c.l.b16 %v1146
        %v1241 = vunpack.c.h.b16 %v1146
        %v1242 = vunpack.c.l.b16 %v1147
        %v1243 = vunpack.c.h.b16 %v1147
        %v1244 = vpack.c.b16 %v1182, %v1180
        %v1245 = vpack.c.b16 %v1183, %v1181
        %v1246 = vpack.c.b16 %v1186, %v1184
        %v1247 = vpack.c.b16 %v1187, %v1185
        %v1248 = vpack.c.b16 %v1190, %v1188
        %v1249 = vpack.c.b16 %v1191, %v1189
        %v1250 = vpack.c.b16 %v1194, %v1192
        %v1251 = vpack.c.b16 %v1195, %v1193
        %v1252 = vpack.c.b16 %v1198, %v1196
        %v1253 = vpack.c.b16 %v1199, %v1197
        %v1254 = vpack.c.b16 %v1202, %v1200
        %v1255 = vpack.c.b16 %v1203, %v1201
        %v1256 = vpack.c.b16 %v1206, %v1204
        %v1257 = vpack.c.b16 %v1207, %v1205
        %v1258 = vpack.c.b16 %v1210, %v1208
        %v1259 = vpack.c.b16 %v1211, %v1209
        %v1260 = vpack.c.b16 %v1214, %v1212
        %v1261 = vpack.c.b16 %v1215, %v1213
        %v1262 = vpack.c.b16 %v1218, %v1216
        %v1263 = vpack.c.b16 %v1219, %v1217
        %v1264 = vpack.c.b16 %v1222, %v1220
        %v1265 = vpack.c.b16 %v1223, %v1221
        %v1266 = vpack.c.b16 %v1226, %v1224
        %v1267 = vpack.c.b16 %v1227, %v1225
        %v1268 = vpack.c.b16 %v1230, %v1228
        %v1269 = vpack.c.b16 %v1231, %v1229
        %v1270 = vpack.c.b16 %v1234, %v1232
        %v1271 = vpack.c.b16 %v1235, %v1233
        %v1272 = vpack.c.b16 %v1238, %v1236
        %v1273 = vpack.c.b16 %v1239, %v1237
        %v1274 = vpack.c.b16 %v1242, %v1240
        %v1275 = vpack.c.b16 %v1243, %v1241
        %1308 = vmatprep.subr.bf16.mxu0 %v1245
        %1309 = vmatpush1.bf16.msra.mxu0 %v1244
        %1310 = vmatprep.subr.bf16.mxu0 %v1247
        %1311 = vmatpush1.bf16.msra.mxu0 %v1246
        %1312 = vmatprep.subr.bf16.mxu0 %v1249
        %1313 = vmatpush1.bf16.msra.mxu0 %v1248
        %1314 = vmatprep.subr.bf16.mxu0 %v1251
        %1315 = vmatpush1.bf16.msra.mxu0 %v1250
        %1316 = vmatprep.subr.bf16.mxu0 %v1253
        %1317 = vmatpush1.bf16.msra.mxu0 %v1252
        %1318 = vmatprep.subr.bf16.mxu0 %v1255
        %1319 = vmatpush1.bf16.msra.mxu0 %v1254
        %1320 = vmatprep.subr.bf16.mxu0 %v1257
        %1321 = vmatpush1.bf16.msra.mxu0 %v1256
        %1322 = vmatprep.subr.bf16.mxu0 %v1259
        %1323 = vmatpush1.bf16.msra.mxu0 %v1258
        %1324 = vmatprep.subr.bf16.mxu0 %v1261
        %1325 = vmatpush1.bf16.msra.mxu0 %v1260
        %1326 = vmatprep.subr.bf16.mxu0 %v1263
        %1327 = vmatpush1.bf16.msra.mxu0 %v1262
        %1328 = vmatprep.subr.bf16.mxu0 %v1265
        %1329 = vmatpush1.bf16.msra.mxu0 %v1264
        %1330 = vmatprep.subr.bf16.mxu0 %v1267
        %1331 = vmatpush1.bf16.msra.mxu0 %v1266
        %1332 = vmatprep.subr.bf16.mxu0 %v1269
        %1333 = vmatpush1.bf16.msra.mxu0 %v1268
        %1334 = vmatprep.subr.bf16.mxu0 %v1271
        %1335 = vmatpush1.bf16.msra.mxu0 %v1270
        %1336 = vmatprep.subr.bf16.mxu0 %v1273
        %1337 = vmatpush1.bf16.msra.mxu0 %v1272
        %1338 = vmatprep.subr.bf16.mxu0 %v1275
        %1339 = vmatpush1.bf16.msra.mxu0 %v1274
        %1340 = vmatprep.mubr.bf16.mxu0 %v588
        %1341 = vmatmul.mubr.bf16.gmra.mrb[0].mxu0 %v587
        %v1342 = vpop.f32.mrb[0].mxu0
        %v1343 = vadd.f32 0.0, %v1342
        %v1344 = vpop.f32.mrb[0].mxu0
        %v1345 = vadd.f32 0.0, %v1344
        %v1346 = vpop.f32.mrb[0].mxu0
        %v1347 = vadd.f32 0.0, %v1346
        %v1348 = vpop.f32.mrb[0].mxu0
        %v1349 = vadd.f32 0.0, %v1348
        %1350 = vmatprep.mubr.bf16.mxu0 %v590
        %1351 = vmatmul.mubr.bf16.gmra.mrb[0].mxu0 %v589
        %v1352 = vpop.f32.mrb[0].mxu0
        %v1353 = vadd.f32 0.0, %v1352
        %v1354 = vpop.f32.mrb[0].mxu0
        %v1355 = vadd.f32 0.0, %v1354
        %v1356 = vpop.f32.mrb[0].mxu0
        %v1357 = vadd.f32 0.0, %v1356
        %v1358 = vpop.f32.mrb[0].mxu0
        %v1359 = vadd.f32 0.0, %v1358
        %1360 = vdwg.mxu0
        %v1393 = vunpack.c.l.b16 %v1083
        %v1394 = vunpack.c.h.b16 %v1083
        %v1395 = vunpack.c.l.b16 %v1084
        %v1396 = vunpack.c.h.b16 %v1084
        %v1397 = vunpack.c.l.b16 %v1085
        %v1398 = vunpack.c.h.b16 %v1085
        %v1399 = vunpack.c.l.b16 %v1086
        %v1400 = vunpack.c.h.b16 %v1086
        %v1401 = vunpack.c.l.b16 %v1087
        %v1402 = vunpack.c.h.b16 %v1087
        %v1403 = vunpack.c.l.b16 %v1088
        %v1404 = vunpack.c.h.b16 %v1088
        %v1405 = vunpack.c.l.b16 %v1089
        %v1406 = vunpack.c.h.b16 %v1089
        %v1407 = vunpack.c.l.b16 %v1090
        %v1408 = vunpack.c.h.b16 %v1090
        %v1409 = vunpack.c.l.b16 %v1091
        %v1410 = vunpack.c.h.b16 %v1091
        %v1411 = vunpack.c.l.b16 %v1092
        %v1412 = vunpack.c.h.b16 %v1092
        %v1413 = vunpack.c.l.b16 %v1093
        %v1414 = vunpack.c.h.b16 %v1093
        %v1415 = vunpack.c.l.b16 %v1094
        %v1416 = vunpack.c.h.b16 %v1094
        %v1417 = vunpack.c.l.b16 %v1095
        %v1418 = vunpack.c.h.b16 %v1095
        %v1419 = vunpack.c.l.b16 %v1096
        %v1420 = vunpack.c.h.b16 %v1096
        %v1421 = vunpack.c.l.b16 %v1097
        %v1422 = vunpack.c.h.b16 %v1097
        %v1423 = vunpack.c.l.b16 %v1098
        %v1424 = vunpack.c.h.b16 %v1098
        %v1425 = vunpack.c.l.b16 %v1099
        %v1426 = vunpack.c.h.b16 %v1099
        %v1427 = vunpack.c.l.b16 %v1100
        %v1428 = vunpack.c.h.b16 %v1100
        %v1429 = vunpack.c.l.b16 %v1101
        %v1430 = vunpack.c.h.b16 %v1101
        %v1431 = vunpack.c.l.b16 %v1102
        %v1432 = vunpack.c.h.b16 %v1102
        %v1433 = vunpack.c.l.b16 %v1103
        %v1434 = vunpack.c.h.b16 %v1103
        %v1435 = vunpack.c.l.b16 %v1104
        %v1436 = vunpack.c.h.b16 %v1104
        %v1437 = vunpack.c.l.b16 %v1105
        %v1438 = vunpack.c.h.b16 %v1105
        %v1439 = vunpack.c.l.b16 %v1106
        %v1440 = vunpack.c.h.b16 %v1106
        %v1441 = vunpack.c.l.b16 %v1107
        %v1442 = vunpack.c.h.b16 %v1107
        %v1443 = vunpack.c.l.b16 %v1108
        %v1444 = vunpack.c.h.b16 %v1108
        %v1445 = vunpack.c.l.b16 %v1109
        %v1446 = vunpack.c.h.b16 %v1109
        %v1447 = vunpack.c.l.b16 %v1110
        %v1448 = vunpack.c.h.b16 %v1110
        %v1449 = vunpack.c.l.b16 %v1111
        %v1450 = vunpack.c.h.b16 %v1111
        %v1451 = vunpack.c.l.b16 %v1112
        %v1452 = vunpack.c.h.b16 %v1112
        %v1453 = vunpack.c.l.b16 %v1113
        %v1454 = vunpack.c.h.b16 %v1113
        %v1455 = vunpack.c.l.b16 %v1114
        %v1456 = vunpack.c.h.b16 %v1114
        %v1457 = vpack.c.b16 %v1395, %v1393
        %v1458 = vpack.c.b16 %v1396, %v1394
        %v1459 = vpack.c.b16 %v1399, %v1397
        %v1460 = vpack.c.b16 %v1400, %v1398
        %v1461 = vpack.c.b16 %v1403, %v1401
        %v1462 = vpack.c.b16 %v1404, %v1402
        %v1463 = vpack.c.b16 %v1407, %v1405
        %v1464 = vpack.c.b16 %v1408, %v1406
        %v1465 = vpack.c.b16 %v1411, %v1409
        %v1466 = vpack.c.b16 %v1412, %v1410
        %v1467 = vpack.c.b16 %v1415, %v1413
        %v1468 = vpack.c.b16 %v1416, %v1414
        %v1469 = vpack.c.b16 %v1419, %v1417
        %v1470 = vpack.c.b16 %v1420, %v1418
        %v1471 = vpack.c.b16 %v1423, %v1421
        %v1472 = vpack.c.b16 %v1424, %v1422
        %v1473 = vpack.c.b16 %v1427, %v1425
        %v1474 = vpack.c.b16 %v1428, %v1426
        %v1475 = vpack.c.b16 %v1431, %v1429
        %v1476 = vpack.c.b16 %v1432, %v1430
        %v1477 = vpack.c.b16 %v1435, %v1433
        %v1478 = vpack.c.b16 %v1436, %v1434
        %v1479 = vpack.c.b16 %v1439, %v1437
        %v1480 = vpack.c.b16 %v1440, %v1438
        %v1481 = vpack.c.b16 %v1443, %v1441
        %v1482 = vpack.c.b16 %v1444, %v1442
        %v1483 = vpack.c.b16 %v1447, %v1445
        %v1484 = vpack.c.b16 %v1448, %v1446
        %v1485 = vpack.c.b16 %v1451, %v1449
        %v1486 = vpack.c.b16 %v1452, %v1450
        %v1487 = vpack.c.b16 %v1455, %v1453
        %v1488 = vpack.c.b16 %v1456, %v1454
        %1521 = vmatprep.subr.bf16.mxu0 %v1458
        %1522 = vmatpush1.bf16.msra.mxu0 %v1457
        %1523 = vmatprep.subr.bf16.mxu0 %v1460
        %1524 = vmatpush1.bf16.msra.mxu0 %v1459
        %1525 = vmatprep.subr.bf16.mxu0 %v1462
        %1526 = vmatpush1.bf16.msra.mxu0 %v1461
        %1527 = vmatprep.subr.bf16.mxu0 %v1464
        %1528 = vmatpush1.bf16.msra.mxu0 %v1463
        %1529 = vmatprep.subr.bf16.mxu0 %v1466
        %1530 = vmatpush1.bf16.msra.mxu0 %v1465
        %1531 = vmatprep.subr.bf16.mxu0 %v1468
        %1532 = vmatpush1.bf16.msra.mxu0 %v1467
        %1533 = vmatprep.subr.bf16.mxu0 %v1470
        %1534 = vmatpush1.bf16.msra.mxu0 %v1469
        %1535 = vmatprep.subr.bf16.mxu0 %v1472
        %1536 = vmatpush1.bf16.msra.mxu0 %v1471
        %1537 = vmatprep.subr.bf16.mxu0 %v1474
        %1538 = vmatpush1.bf16.msra.mxu0 %v1473
        %1539 = vmatprep.subr.bf16.mxu0 %v1476
        %1540 = vmatpush1.bf16.msra.mxu0 %v1475
        %1541 = vmatprep.subr.bf16.mxu0 %v1478
        %1542 = vmatpush1.bf16.msra.mxu0 %v1477
        %1543 = vmatprep.subr.bf16.mxu0 %v1480
        %1544 = vmatpush1.bf16.msra.mxu0 %v1479
        %1545 = vmatprep.subr.bf16.mxu0 %v1482
        %1546 = vmatpush1.bf16.msra.mxu0 %v1481
        %1547 = vmatprep.subr.bf16.mxu0 %v1484
        %1548 = vmatpush1.bf16.msra.mxu0 %v1483
        %1549 = vmatprep.subr.bf16.mxu0 %v1486
        %1550 = vmatpush1.bf16.msra.mxu0 %v1485
        %1551 = vmatprep.subr.bf16.mxu0 %v1488
        %1552 = vmatpush1.bf16.msra.mxu0 %v1487
        %1553 = vmatprep.mubr.bf16.mxu0 %v584
        %1554 = vmatmul.mubr.bf16.gmra.mrb[0].mxu0 %v583
        %v1555 = vpop.f32.mrb[0].mxu0
        %v1556 = vadd.f32 %v1343, %v1555
        %v1557 = vpop.f32.mrb[0].mxu0
        %v1558 = vadd.f32 %v1345, %v1557
        %v1559 = vpop.f32.mrb[0].mxu0
        %v1560 = vadd.f32 %v1347, %v1559
        %v1561 = vpop.f32.mrb[0].mxu0
        %v1562 = vadd.f32 %v1349, %v1561
        %1563 = vmatprep.mubr.bf16.mxu0 %v586
        %1564 = vmatmul.mubr.bf16.gmra.mrb[0].mxu0 %v585
        %v1565 = vpop.f32.mrb[0].mxu0
        %v1566 = vadd.f32 %v1353, %v1565
        %v1567 = vpop.f32.mrb[0].mxu0
        %v1568 = vadd.f32 %v1355, %v1567
        %v1569 = vpop.f32.mrb[0].mxu0
        %v1570 = vadd.f32 %v1357, %v1569
        %v1571 = vpop.f32.mrb[0].mxu0
        %v1572 = vadd.f32 %v1359, %v1571
        %1573 = vdwg.mxu0
        %v1574 = vmax.f32 %v1064, 0.0
        %v1575 = vmax.f32 %v1066, 0.0
        %v1576 = vmax.f32 %v1068, 0.0
        %v1577 = vmax.f32 %v1070, 0.0
        %v1578 = vmax.f32 %v1074, 0.0
        %v1579 = vmax.f32 %v1076, 0.0
        %v1580 = vmax.f32 %v1078, 0.0
        %v1581 = vmax.f32 %v1080, 0.0
        %v1582 = vpack.c.bf16 %v1576, %v1574
        %v1583 = vpack.c.bf16 %v1577, %v1575
        %v1584 = vpack.c.bf16 %v1580, %v1578
        %v1585 = vpack.c.bf16 %v1581, %v1579
        %v1586 = vmax.f32 %v1556, 0.0
        %v1587 = vmax.f32 %v1558, 0.0
        %v1588 = vmax.f32 %v1560, 0.0
        %v1589 = vmax.f32 %v1562, 0.0
        %v1590 = vmax.f32 %v1566, 0.0
        %v1591 = vmax.f32 %v1568, 0.0
        %v1592 = vmax.f32 %v1570, 0.0
        %v1593 = vmax.f32 %v1572, 0.0
        %v1594 = vpack.c.bf16 %v1588, %v1586
        %v1595 = vpack.c.bf16 %v1589, %v1587
        %v1596 = vpack.c.bf16 %v1592, %v1590
        %v1597 = vpack.c.bf16 %v1593, %v1591
        %v1598 = vld [vmem:[%s3] sm:$0xf]
        %v1599 = vld [vmem:[%s3 + $0x4] sm:$0xf]
        %v1600 = vld [vmem:[%s3 + $0x8] sm:$0xf]
        %v1601 = vld [vmem:[%s3 + $0xc] sm:$0xf]
        %v1602 = vld [vmem:[%s3 + $0x10] sm:$0xf]
        %v1603 = vld [vmem:[%s3 + $0x14] sm:$0xf]
        %v1604 = vld [vmem:[%s3 + $0x18] sm:$0xf]
        %s1605 = scalar_lea.vmem %s3, 28
        %v1606 = vld [vmem:[%s1605] sm:$0xf]
        %v1607 = vld [vmem:[%s1605 + $0x4] sm:$0xf]
        %v1608 = vld [vmem:[%s1605 + $0x8] sm:$0xf]
        %v1609 = vld [vmem:[%s1605 + $0xc] sm:$0xf]
        %v1610 = vld [vmem:[%s1605 + $0x10] sm:$0xf]
        %v1611 = vld [vmem:[%s1605 + $0x14] sm:$0xf]
        %v1612 = vld [vmem:[%s1605 + $0x18] sm:$0xf]
        %v1620 = vunpack.c.l.b16 %v1606
        %v1621 = vunpack.c.l.b16 %v1607
        %v1622 = vunpack.c.l.b16 %v1608
        %v1623 = vunpack.c.l.b16 %v1609
        %v1624 = vunpack.c.l.b16 %v1610
        %v1625 = vunpack.c.l.b16 %v1611
        %v1626 = vunpack.c.l.b16 %v1612
        %v1627 = vpack.c.b16 %v1621, %v1620
        %v1628 = vpack.c.b16 %v1623, %v1622
        %v1629 = vpack.c.b16 %v1625, %v1624
        %v1630 = vpack.c.b16 %v1626, %v1626
        %vm1631 = vcmask 228352
        %v1633 = vsel %vm1631, %v1627, 0
        %v1636 = vsel %vm1631, %v1628, 0
        %v1639 = vsel %vm1631, %v1629, 0
        %v1642 = vsel %vm1631, %v1630, 0
        %vm1644 = vcmask 1045504
        %v1646 = vsel %vm1644, %v1596, 0
        %v1649 = vsel %vm1644, %v1597, 0
        %1651 = vmatprep.subr.bf16.mxu0 %v1595
        %1652 = vmatpush1.bf16.msra.mxu0 %v1594
        %1653 = vmatprep.subr.bf16.mxu0 %v1649
        %1654 = vmatpush1.bf16.msra.mxu0 %v1646
        %1655 = vmatprep.subr.bf16.mxu0 0
        %1656 = vmatpush1.bf16.msra.mxu0 0
        %1657 = vmatprep.subr.bf16.mxu0 0
        %1658 = vmatpush1.bf16.msra.mxu0 0
        %1659 = vmatprep.subr.bf16.mxu0 0
        %1660 = vmatpush1.bf16.msra.mxu0 0
        %1661 = vmatprep.subr.bf16.mxu0 0
        %1662 = vmatpush1.bf16.msra.mxu0 0
        %1663 = vmatprep.subr.bf16.mxu0 0
        %1664 = vmatpush1.bf16.msra.mxu0 0
        %1665 = vmatprep.subr.bf16.mxu0 0
        %1666 = vmatpush1.bf16.msra.mxu0 0
        %1667 = vmatprep.subr.bf16.mxu0 0
        %1668 = vmatpush1.bf16.msra.mxu0 0
        %1669 = vmatprep.subr.bf16.mxu0 0
        %1670 = vmatpush1.bf16.msra.mxu0 0
        %1671 = vmatprep.subr.bf16.mxu0 0
        %1672 = vmatpush1.bf16.msra.mxu0 0
        %1673 = vmatprep.subr.bf16.mxu0 0
        %1674 = vmatpush1.bf16.msra.mxu0 0
        %1675 = vmatprep.subr.bf16.mxu0 0
        %1676 = vmatpush1.bf16.msra.mxu0 0
        %1677 = vmatprep.subr.bf16.mxu0 0
        %1678 = vmatpush1.bf16.msra.mxu0 0
        %1679 = vmatprep.subr.bf16.mxu0 0
        %1680 = vmatpush1.bf16.msra.mxu0 0
        %1681 = vmatprep.subr.bf16.mxu0 0
        %1682 = vmatpush1.bf16.msra.mxu0 0
        %1683 = vmatprep.mubr.bf16.mxu0 0
        %1684 = vmatmul.mubr.bf16.gmra.mrb[0].mxu0 %v1633
        %v1685 = vpop.f32.mrb[0].mxu0
        %v1686 = vadd.f32 0.0, %v1685
        %v1687 = vpop.f32.mrb[0].mxu0
        %v1688 = vadd.f32 0.0, %v1687
        %v1689 = vpop.f32.mrb[0].mxu0
        %v1690 = vadd.f32 0.0, %v1689
        %v1691 = vpop.f32.mrb[0].mxu0
        %v1692 = vadd.f32 0.0, %v1691
        %1693 = vmatprep.mubr.bf16.mxu0 0
        %1694 = vmatmul.mubr.bf16.gmra.mrb[0].mxu0 %v1636
        %v1695 = vpop.f32.mrb[0].mxu0
        %v1696 = vadd.f32 0.0, %v1695
        %v1697 = vpop.f32.mrb[0].mxu0
        %v1698 = vadd.f32 0.0, %v1697
        %v1699 = vpop.f32.mrb[0].mxu0
        %v1700 = vadd.f32 0.0, %v1699
        %v1701 = vpop.f32.mrb[0].mxu0
        %v1702 = vadd.f32 0.0, %v1701
        %1703 = vmatprep.mubr.bf16.mxu0 0
        %1704 = vmatmul.mubr.bf16.gmra.mrb[0].mxu0 %v1639
        %v1705 = vpop.f32.mrb[0].mxu0
        %v1706 = vadd.f32 0.0, %v1705
        %v1707 = vpop.f32.mrb[0].mxu0
        %v1708 = vadd.f32 0.0, %v1707
        %v1709 = vpop.f32.mrb[0].mxu0
        %v1710 = vadd.f32 0.0, %v1709
        %v1711 = vpop.f32.mrb[0].mxu0
        %v1712 = vadd.f32 0.0, %v1711
        %1713 = vmatprep.mubr.bf16.mxu0 0
        %1714 = vmatmul.mubr.bf16.gmra.mrb[0].mxu0 %v1642
        %v1715 = vpop.f32.mrb[0].mxu0
        %v1716 = vadd.f32 0.0, %v1715
        %v1717 = vpop.f32.mrb[0].mxu0
        %v1718 = vadd.f32 0.0, %v1717
        %v1719 = vpop.f32.mrb[0].mxu0
        %v1720 = vpop.f32.mrb[0].mxu0
        %1721 = vdwg.mxu0
        %v1729 = vunpack.c.l.b16 %v1598
        %v1730 = vunpack.c.l.b16 %v1599
        %v1731 = vunpack.c.l.b16 %v1600
        %v1732 = vunpack.c.l.b16 %v1601
        %v1733 = vunpack.c.l.b16 %v1602
        %v1734 = vunpack.c.l.b16 %v1603
        %v1735 = vunpack.c.l.b16 %v1604
        %v1736 = vpack.c.b16 %v1730, %v1729
        %v1737 = vpack.c.b16 %v1732, %v1731
        %v1738 = vpack.c.b16 %v1734, %v1733
        %v1739 = vpack.c.b16 %v1735, %v1735
        %v1741 = vsel %vm1631, %v1736, 0
        %v1744 = vsel %vm1631, %v1737, 0
        %v1747 = vsel %vm1631, %v1738, 0
        %v1750 = vsel %vm1631, %v1739, 0
        %v1753 = vsel %vm1644, %v1584, 0
        %v1756 = vsel %vm1644, %v1585, 0
        %1758 = vmatprep.subr.bf16.mxu0 %v1583
        %1759 = vmatpush1.bf16.msra.mxu0 %v1582
        %1760 = vmatprep.subr.bf16.mxu0 %v1756
        %1761 = vmatpush1.bf16.msra.mxu0 %v1753
        %1762 = vmatprep.subr.bf16.mxu0 0
        %1763 = vmatpush1.bf16.msra.mxu0 0
        %1764 = vmatprep.subr.bf16.mxu0 0
        %1765 = vmatpush1.bf16.msra.mxu0 0
        %1766 = vmatprep.subr.bf16.mxu0 0
        %1767 = vmatpush1.bf16.msra.mxu0 0
        %1768 = vmatprep.subr.bf16.mxu0 0
        %1769 = vmatpush1.bf16.msra.mxu0 0
        %1770 = vmatprep.subr.bf16.mxu0 0
        %1771 = vmatpush1.bf16.msra.mxu0 0
        %1772 = vmatprep.subr.bf16.mxu0 0
        %1773 = vmatpush1.bf16.msra.mxu0 0
        %1774 = vmatprep.subr.bf16.mxu0 0
        %1775 = vmatpush1.bf16.msra.mxu0 0
        %1776 = vmatprep.subr.bf16.mxu0 0
        %1777 = vmatpush1.bf16.msra.mxu0 0
        %1778 = vmatprep.subr.bf16.mxu0 0
        %1779 = vmatpush1.bf16.msra.mxu0 0
        %1780 = vmatprep.subr.bf16.mxu0 0
        %1781 = vmatpush1.bf16.msra.mxu0 0
        %1782 = vmatprep.subr.bf16.mxu0 0
        %1783 = vmatpush1.bf16.msra.mxu0 0
        %1784 = vmatprep.subr.bf16.mxu0 0
        %1785 = vmatpush1.bf16.msra.mxu0 0
        %1786 = vmatprep.subr.bf16.mxu0 0
        %1787 = vmatpush1.bf16.msra.mxu0 0
        %1788 = vmatprep.subr.bf16.mxu0 0
        %1789 = vmatpush1.bf16.msra.mxu0 0
        %1790 = vmatprep.mubr.bf16.mxu0 0
        %1791 = vmatmul.mubr.bf16.gmra.mrb[0].mxu0 %v1741
        %v1792 = vpop.f32.mrb[0].mxu0
        %v1793 = vadd.f32 %v1686, %v1792
        %v1794 = vpop.f32.mrb[0].mxu0
        %v1795 = vadd.f32 %v1688, %v1794
        %v1796 = vpop.f32.mrb[0].mxu0
        %v1797 = vadd.f32 %v1690, %v1796
        %v1798 = vpop.f32.mrb[0].mxu0
        %v1799 = vadd.f32 %v1692, %v1798
        %1800 = vmatprep.mubr.bf16.mxu0 0
        %1801 = vmatmul.mubr.bf16.gmra.mrb[0].mxu0 %v1744
        %v1802 = vpop.f32.mrb[0].mxu0
        %v1803 = vadd.f32 %v1696, %v1802
        %v1804 = vpop.f32.mrb[0].mxu0
        %v1805 = vadd.f32 %v1698, %v1804
        %v1806 = vpop.f32.mrb[0].mxu0
        %v1807 = vadd.f32 %v1700, %v1806
        %v1808 = vpop.f32.mrb[0].mxu0
        %v1809 = vadd.f32 %v1702, %v1808
        %1810 = vmatprep.mubr.bf16.mxu0 0
        %1811 = vmatmul.mubr.bf16.gmra.mrb[0].mxu0 %v1747
        %v1812 = vpop.f32.mrb[0].mxu0
        %v1813 = vadd.f32 %v1706, %v1812
        %v1814 = vpop.f32.mrb[0].mxu0
        %v1815 = vadd.f32 %v1708, %v1814
        %v1816 = vpop.f32.mrb[0].mxu0
        %v1817 = vadd.f32 %v1710, %v1816
        %v1818 = vpop.f32.mrb[0].mxu0
        %v1819 = vadd.f32 %v1712, %v1818
        %1820 = vmatprep.mubr.bf16.mxu0 0
        %1821 = vmatmul.mubr.bf16.gmra.mrb[0].mxu0 %v1750
        %v1822 = vpop.f32.mrb[0].mxu0
        %v1823 = vadd.f32 %v1716, %v1822
        %v1824 = vpop.f32.mrb[0].mxu0
        %v1825 = vadd.f32 %v1718, %v1824
        %v1826 = vpop.f32.mrb[0].mxu0
        %v1827 = vpop.f32.mrb[0].mxu0
        %1828 = vdwg.mxu0
        %1829 = vst [vmem:[#allocation3] sm:$0xff] %v1793
        %1830 = vst [vmem:[#allocation3 + $0x8] sm:$0xff] %v1795
        %1831 = vst [vmem:[#allocation3 + $0x10] sm:$0xff] %v1797
        %1832 = vst [vmem:[#allocation3 + $0x18] sm:$0xff] %v1799
        %1833 = vst [vmem:[#allocation3 + $0x20] sm:$0xff] %v1803
        %1834 = vst [vmem:[#allocation3 + $0x28] sm:$0xff] %v1805
        %1835 = vst [vmem:[#allocation3 + $0x30] sm:$0xff] %v1807
        %1836 = vst [vmem:[#allocation3 + $0x38] sm:$0xff] %v1809
        %1837 = vst [vmem:[#allocation3 + $0x40] sm:$0xff] %v1813
        %1838 = vst [vmem:[#allocation3 + $0x48] sm:$0xff] %v1815
        %1839 = vst [vmem:[#allocation3 + $0x50] sm:$0xff] %v1817
        %1840 = vst [vmem:[#allocation3 + $0x58] sm:$0xff] %v1819
        %1841 = vst [vmem:[#allocation3 + $0x60] sm:$0xff] %v1823
        %1842 = vst [vmem:[#allocation3 + $0x68] sm:$0xff] %v1825
        %v1843 = vld [vmem:[#allocation3] sm:$0xfe]
        %v1844 = vld [vmem:[#allocation3 + $0x8] sm:$0xfe]
        %v1845 = vld [vmem:[#allocation3 + $0x10] sm:$0xff]
        %v1846 = vld [vmem:[#allocation3 + $0x18] sm:$0xff]
        %v1847 = vld [vmem:[#allocation3 + $0x20] sm:$0xff]
        %v1848 = vld [vmem:[#allocation3 + $0x28] sm:$0xff]
        %v1849 = vld [vmem:[#allocation3 + $0x30] sm:$0xff]
        %v1850 = vld [vmem:[#allocation3 + $0x38] sm:$0xff]
        %v1851 = vld [vmem:[#allocation3 + $0x40] sm:$0xff]
        %v1852 = vld [vmem:[#allocation3 + $0x48] sm:$0xff]
        %v1853 = vld [vmem:[#allocation3 + $0x50] sm:$0xff]
        %v1854 = vld [vmem:[#allocation3 + $0x58] sm:$0xff]
        %v1855 = vld [vmem:[#allocation3 + $0x60] sm:$0xff]
        %v1856 = vld [vmem:[#allocation3 + $0x68] sm:$0xff]
        %v1857 = vld [vmem:[#allocation3 + $0x70] sm:$0x1]
        %v1858 = vld [vmem:[#allocation3 + $0x78] sm:$0x1]
        %v1859 = vadd.s32 %v512, 32
        %v1860 = vadd.s32 %v512, 40
        %v1861 = vadd.s32 %v512, 48
        %vm1862 = vcmp.ne.s32.totalorder %v1859, 13
        %vm1863 = vcmp.ne.s32.totalorder %v1860, 13
        %vm1864 = vcmp.ne.s32.totalorder %v1861, 13
        %vm1865 = vcmp.ne.s32.totalorder %v1859, 27
        %vm1866 = vcmp.ne.s32.totalorder %v1860, 27
        %vm1867 = vcmp.ne.s32.totalorder %v1861, 27
        %vm1868 = vmand %vm520, %vm536
        %vm1869 = vmand %vm521, %vm537
        %vm1870 = vmand %vm522, %vm538
        %vm1871 = vmand %vm523, %vm539
        %vm1872 = vmand %vm1862, %vm1865
        %vm1873 = vmand %vm1863, %vm1866
        %vm1874 = vmand %vm1864, %vm1867
        %vm1875 = vcmp.ne.s32.totalorder %v512, 41
        %vm1876 = vcmp.ne.s32.totalorder %v513, 41
        %vm1877 = vcmp.ne.s32.totalorder %v514, 41
        %vm1878 = vcmp.ne.s32.totalorder %v515, 41
        %vm1879 = vcmp.ne.s32.totalorder %v1859, 41
        %vm1880 = vcmp.ne.s32.totalorder %v1860, 41
        %vm1881 = vcmp.ne.s32.totalorder %v1861, 41
        %vm1882 = vmand %vm1868, %vm1875
        %vm1883 = vmand %vm1869, %vm1876
        %vm1884 = vmand %vm1870, %vm1877
        %vm1885 = vmand %vm1871, %vm1878
        %vm1886 = vmand %vm1872, %vm1879
        %vm1887 = vmand %vm1873, %vm1880
        %vm1888 = vmand %vm1874, %vm1881
        %vm1889 = vcmp.ne.s32.totalorder %v512, 55
        %vm1890 = vcmp.ne.s32.totalorder %v513, 55
        %vm1891 = vcmp.ne.s32.totalorder %v514, 55
        %vm1892 = vcmp.ne.s32.totalorder %v515, 55
        %vm1893 = vcmp.ne.s32.totalorder %v1859, 55
        %vm1894 = vcmp.ne.s32.totalorder %v1860, 55
        %vm1895 = vcmp.ne.s32.totalorder %v1861, 55
        %vm1896 = vmand %vm1882, %vm1889
        %vm1897 = vmand %vm1883, %vm1890
        %vm1898 = vmand %vm1884, %vm1891
        %vm1899 = vmand %vm1885, %vm1892
        %vm1900 = vmand %vm1886, %vm1893
        %vm1901 = vmand %vm1887, %vm1894
        %vm1902 = vmand %vm1888, %vm1895
        %v1919 = vrot.slane %v1843, 1
        %v1920 = vrot.slane %v1845, 1
        %v1921 = vsel %vm552, %v1919, %v1920
        %v1922 = vrot.slane %v1844, 1
        %v1923 = vrot.slane %v1846, 1
        %v1924 = vsel %vm552, %v1922, %v1923
        %v1925 = vrot.slane %v1847, 1
        %v1926 = vsel %vm552, %v1920, %v1925
        %v1927 = vrot.slane %v1848, 1
        %v1928 = vsel %vm552, %v1923, %v1927
        %v1929 = vrot.slane %v1849, 1
        %v1930 = vsel %vm552, %v1925, %v1929
        %v1931 = vrot.slane %v1850, 1
        %v1932 = vsel %vm552, %v1927, %v1931
        %v1933 = vrot.slane %v1851, 1
        %v1934 = vsel %vm552, %v1929, %v1933
        %v1935 = vrot.slane %v1852, 1
        %v1936 = vsel %vm552, %v1931, %v1935
        %v1937 = vrot.slane %v1853, 1
        %v1938 = vsel %vm552, %v1933, %v1937
        %v1939 = vrot.slane %v1854, 1
        %v1940 = vsel %vm552, %v1935, %v1939
        %v1941 = vrot.slane %v1855, 1
        %v1942 = vsel %vm552, %v1937, %v1941
        %v1943 = vrot.slane %v1856, 1
        %v1944 = vsel %vm552, %v1939, %v1943
        %v1945 = vrot.slane %v1857, 1
        %v1946 = vsel %vm552, %v1941, %v1945
        %v1947 = vrot.slane %v1858, 1
        %v1948 = vsel %vm552, %v1943, %v1947
        %v1963 = vsel %vm1896, %v1921, 0.0
        %v1964 = vsel %vm1896, %v1924, 0.0
        %v1965 = vsel %vm1897, %v1926, 0.0
        %v1966 = vsel %vm1897, %v1928, 0.0
        %v1967 = vsel %vm1898, %v1930, 0.0
        %v1968 = vsel %vm1898, %v1932, 0.0
        %v1969 = vsel %vm1899, %v1934, 0.0
        %v1970 = vsel %vm1899, %v1936, 0.0
        %v1971 = vsel %vm1900, %v1938, 0.0
        %v1972 = vsel %vm1900, %v1940, 0.0
        %v1973 = vsel %vm1901, %v1942, 0.0
        %v1974 = vsel %vm1901, %v1944, 0.0
        %v1975 = vsel %vm1902, %v1946, 0.0
        %v1976 = vsel %vm1902, %v1948, 0.0
        %v1977 = vpack.c.bf16 %v1797, %v1793
        %v1978 = vpack.c.bf16 %v1799, %v1795
        %v1979 = vpack.c.bf16 %v1807, %v1803
        %v1980 = vpack.c.bf16 %v1809, %v1805
        %v1981 = vpack.c.bf16 %v1817, %v1813
        %v1982 = vpack.c.bf16 %v1819, %v1815
        %v1983 = vpack.c.bf16 %v1823, %v1823
        %v1984 = vpack.c.bf16 %v1825, %v1825
        %v1985 = vpack.c.bf16 %v1965, %v1963
        %v1986 = vpack.c.bf16 %v1966, %v1964
        %v1987 = vpack.c.bf16 %v1969, %v1967
        %v1988 = vpack.c.bf16 %v1970, %v1968
        %v1989 = vpack.c.bf16 %v1973, %v1971
        %v1990 = vpack.c.bf16 %v1974, %v1972
        %v1991 = vpack.c.bf16 %v1975, %v1975
        %v1992 = vpack.c.bf16 %v1976, %v1976
        %v1993 = vld [vmem:[#allocation8] sm:$0xff]
        %v1994 = vld [vmem:[#allocation8 + $0x8] sm:$0xff]
        %v1995 = vld [vmem:[#allocation8 + $0x10] sm:$0xff]
        %v1996 = vld [vmem:[#allocation8 + $0x18] sm:$0xff]
        %v1997 = vld [vmem:[#allocation8 + $0x20] sm:$0xff]
        %v1998 = vld [vmem:[#allocation8 + $0x28] sm:$0xff]
        %v1999 = vld [vmem:[#allocation8 + $0x30] sm:$0xff]
        %v2000 = vld [vmem:[#allocation8 + $0x38] sm:$0xff]
        %v2001 = vld [vmem:[#allocation8 + $0x40] sm:$0xff]
        %v2002 = vld [vmem:[#allocation8 + $0x48] sm:$0xff]
        %v2003 = vld [vmem:[#allocation8 + $0x50] sm:$0xff]
        %v2004 = vld [vmem:[#allocation8 + $0x58] sm:$0xff]
        %v2005 = vld [vmem:[#allocation8 + $0x60] sm:$0xff]
        %v2006 = vld [vmem:[#allocation8 + $0x68] sm:$0xff]
        %v2007 = vld [vmem:[#allocation8 + $0x70] sm:$0xff]
        %v2008 = vld [vmem:[#allocation8 + $0x78] sm:$0xff]
        %v2009 = vld [vmem:[#allocation8 + $0x80] sm:$0xff]
        %v2010 = vld [vmem:[#allocation8 + $0x88] sm:$0xff]
        %v2011 = vld [vmem:[#allocation8 + $0x90] sm:$0xff]
        %v2012 = vld [vmem:[#allocation8 + $0x98] sm:$0xff]
        %v2013 = vld [vmem:[#allocation8 + $0xa0] sm:$0xff]
        %v2014 = vld [vmem:[#allocation8 + $0xa8] sm:$0xff]
        %v2015 = vld [vmem:[#allocation8 + $0xb0] sm:$0xff]
        %v2016 = vld [vmem:[#allocation8 + $0xb8] sm:$0xff]
        %v2017 = vld [vmem:[#allocation8 + $0xc0] sm:$0xff]
        %v2018 = vld [vmem:[#allocation8 + $0xc8] sm:$0xff]
        %v2019 = vld [vmem:[#allocation8 + $0xd0] sm:$0xff]
        %v2020 = vld [vmem:[#allocation8 + $0xd8] sm:$0xff]
        %v2021 = vld [vmem:[#allocation8 + $0xe0] sm:$0xff]
        %v2022 = vld [vmem:[#allocation8 + $0xe8] sm:$0xff]
        %v2023 = vld [vmem:[#allocation8 + $0xf0] sm:$0xff]
        %v2024 = vld [vmem:[#allocation8 + $0xf8] sm:$0xff]
        %s2025 = scalar_lea.vmem [#allocation8], 512
        %v2026 = vld [vmem:[%s2025] sm:$0xff]
        %v2027 = vld [vmem:[%s2025 + $0x8] sm:$0xff]
        %v2028 = vld [vmem:[%s2025 + $0x10] sm:$0xff]
        %v2029 = vld [vmem:[%s2025 + $0x18] sm:$0xff]
        %v2030 = vld [vmem:[%s2025 + $0x20] sm:$0xff]
        %v2031 = vld [vmem:[%s2025 + $0x28] sm:$0xff]
        %v2032 = vld [vmem:[%s2025 + $0x30] sm:$0xff]
        %v2033 = vld [vmem:[%s2025 + $0x38] sm:$0xff]
        %v2034 = vld [vmem:[%s2025 + $0x40] sm:$0xff]
        %v2035 = vld [vmem:[%s2025 + $0x48] sm:$0xff]
        %v2036 = vld [vmem:[%s2025 + $0x50] sm:$0xff]
        %v2037 = vld [vmem:[%s2025 + $0x58] sm:$0xff]
        %v2038 = vld [vmem:[%s2025 + $0x60] sm:$0xff]
        %v2039 = vld [vmem:[%s2025 + $0x68] sm:$0xff]
        %v2040 = vld [vmem:[%s2025 + $0x70] sm:$0xff]
        %v2041 = vld [vmem:[%s2025 + $0x78] sm:$0xff]
        %v2042 = vld [vmem:[%s2025 + $0x80] sm:$0xff]
        %v2043 = vld [vmem:[%s2025 + $0x88] sm:$0xff]
        %v2044 = vld [vmem:[%s2025 + $0x90] sm:$0xff]
        %v2045 = vld [vmem:[%s2025 + $0x98] sm:$0xff]
        %v2046 = vld [vmem:[%s2025 + $0xa0] sm:$0xff]
        %v2047 = vld [vmem:[%s2025 + $0xa8] sm:$0xff]
        %v2048 = vld [vmem:[%s2025 + $0xb0] sm:$0xff]
        %v2049 = vld [vmem:[%s2025 + $0xb8] sm:$0xff]
        %v2050 = vld [vmem:[%s2025 + $0xc0] sm:$0xff]
        %v2051 = vld [vmem:[%s2025 + $0xc8] sm:$0xff]
        %v2052 = vld [vmem:[%s2025 + $0xd0] sm:$0xff]
        %v2053 = vld [vmem:[%s2025 + $0xd8] sm:$0xff]
        %v2054 = vld [vmem:[%s2025 + $0xe0] sm:$0xff]
        %v2055 = vld [vmem:[%s2025 + $0xe8] sm:$0xff]
        %v2056 = vld [vmem:[%s2025 + $0xf0] sm:$0xff]
        %v2057 = vld [vmem:[%s2025 + $0xf8] sm:$0xff]
        %v2090 = vunpack.c.l.b16 %v2026
        %v2091 = vunpack.c.h.b16 %v2026
        %v2092 = vunpack.c.l.b16 %v2027
        %v2093 = vunpack.c.h.b16 %v2027
        %v2094 = vunpack.c.l.b16 %v2028
        %v2095 = vunpack.c.h.b16 %v2028
        %v2096 = vunpack.c.l.b16 %v2029
        %v2097 = vunpack.c.h.b16 %v2029
        %v2098 = vunpack.c.l.b16 %v2030
        %v2099 = vunpack.c.h.b16 %v2030
        %v2100 = vunpack.c.l.b16 %v2031
        %v2101 = vunpack.c.h.b16 %v2031
        %v2102 = vunpack.c.l.b16 %v2032
        %v2103 = vunpack.c.h.b16 %v2032
        %v2104 = vunpack.c.l.b16 %v2033
        %v2105 = vunpack.c.h.b16 %v2033
        %v2106 = vunpack.c.l.b16 %v2034
        %v2107 = vunpack.c.h.b16 %v2034
        %v2108 = vunpack.c.l.b16 %v2035
        %v2109 = vunpack.c.h.b16 %v2035
        %v2110 = vunpack.c.l.b16 %v2036
        %v2111 = vunpack.c.h.b16 %v2036
        %v2112 = vunpack.c.l.b16 %v2037
        %v2113 = vunpack.c.h.b16 %v2037
        %v2114 = vunpack.c.l.b16 %v2038
        %v2115 = vunpack.c.h.b16 %v2038
        %v2116 = vunpack.c.l.b16 %v2039
        %v2117 = vunpack.c.h.b16 %v2039
        %v2118 = vunpack.c.l.b16 %v2040
        %v2119 = vunpack.c.h.b16 %v2040
        %v2120 = vunpack.c.l.b16 %v2041
        %v2121 = vunpack.c.h.b16 %v2041
        %v2122 = vunpack.c.l.b16 %v2042
        %v2123 = vunpack.c.h.b16 %v2042
        %v2124 = vunpack.c.l.b16 %v2043
        %v2125 = vunpack.c.h.b16 %v2043
        %v2126 = vunpack.c.l.b16 %v2044
        %v2127 = vunpack.c.h.b16 %v2044
        %v2128 = vunpack.c.l.b16 %v2045
        %v2129 = vunpack.c.h.b16 %v2045
        %v2130 = vunpack.c.l.b16 %v2046
        %v2131 = vunpack.c.h.b16 %v2046
        %v2132 = vunpack.c.l.b16 %v2047
        %v2133 = vunpack.c.h.b16 %v2047
        %v2134 = vunpack.c.l.b16 %v2048
        %v2135 = vunpack.c.h.b16 %v2048
        %v2136 = vunpack.c.l.b16 %v2049
        %v2137 = vunpack.c.h.b16 %v2049
        %v2138 = vunpack.c.l.b16 %v2050
        %v2139 = vunpack.c.h.b16 %v2050
        %v2140 = vunpack.c.l.b16 %v2051
        %v2141 = vunpack.c.h.b16 %v2051
        %v2142 = vunpack.c.l.b16 %v2052
        %v2143 = vunpack.c.h.b16 %v2052
        %v2144 = vunpack.c.l.b16 %v2053
        %v2145 = vunpack.c.h.b16 %v2053
        %v2146 = vunpack.c.l.b16 %v2054
        %v2147 = vunpack.c.h.b16 %v2054
        %v2148 = vunpack.c.l.b16 %v2055
        %v2149 = vunpack.c.h.b16 %v2055
        %v2150 = vunpack.c.l.b16 %v2056
        %v2151 = vunpack.c.h.b16 %v2056
        %v2152 = vunpack.c.l.b16 %v2057
        %v2153 = vunpack.c.h.b16 %v2057
        %v2154 = vpack.c.b16 %v2092, %v2090
        %v2155 = vpack.c.b16 %v2093, %v2091
        %v2156 = vpack.c.b16 %v2096, %v2094
        %v2157 = vpack.c.b16 %v2097, %v2095
        %v2158 = vpack.c.b16 %v2100, %v2098
        %v2159 = vpack.c.b16 %v2101, %v2099
        %v2160 = vpack.c.b16 %v2104, %v2102
        %v2161 = vpack.c.b16 %v2105, %v2103
        %v2162 = vpack.c.b16 %v2108, %v2106
        %v2163 = vpack.c.b16 %v2109, %v2107
        %v2164 = vpack.c.b16 %v2112, %v2110
        %v2165 = vpack.c.b16 %v2113, %v2111
        %v2166 = vpack.c.b16 %v2116, %v2114
        %v2167 = vpack.c.b16 %v2117, %v2115
        %v2168 = vpack.c.b16 %v2120, %v2118
        %v2169 = vpack.c.b16 %v2121, %v2119
        %v2170 = vpack.c.b16 %v2124, %v2122
        %v2171 = vpack.c.b16 %v2125, %v2123
        %v2172 = vpack.c.b16 %v2128, %v2126
        %v2173 = vpack.c.b16 %v2129, %v2127
        %v2174 = vpack.c.b16 %v2132, %v2130
        %v2175 = vpack.c.b16 %v2133, %v2131
        %v2176 = vpack.c.b16 %v2136, %v2134
        %v2177 = vpack.c.b16 %v2137, %v2135
        %v2178 = vpack.c.b16 %v2140, %v2138
        %v2179 = vpack.c.b16 %v2141, %v2139
        %v2180 = vpack.c.b16 %v2144, %v2142
        %v2181 = vpack.c.b16 %v2145, %v2143
        %v2182 = vpack.c.b16 %v2148, %v2146
        %v2183 = vpack.c.b16 %v2149, %v2147
        %v2184 = vpack.c.b16 %v2152, %v2150
        %v2185 = vpack.c.b16 %v2153, %v2151
        %2218 = vmatprep.subr.bf16.mxu0 %v2155
        %2219 = vmatpush1.bf16.msra.mxu0 %v2154
        %2220 = vmatprep.subr.bf16.mxu0 %v2157
        %2221 = vmatpush1.bf16.msra.mxu0 %v2156
        %2222 = vmatprep.subr.bf16.mxu0 %v2159
        %2223 = vmatpush1.bf16.msra.mxu0 %v2158
        %2224 = vmatprep.subr.bf16.mxu0 %v2161
        %2225 = vmatpush1.bf16.msra.mxu0 %v2160
        %2226 = vmatprep.subr.bf16.mxu0 %v2163
        %2227 = vmatpush1.bf16.msra.mxu0 %v2162
        %2228 = vmatprep.subr.bf16.mxu0 %v2165
        %2229 = vmatpush1.bf16.msra.mxu0 %v2164
        %2230 = vmatprep.subr.bf16.mxu0 %v2167
        %2231 = vmatpush1.bf16.msra.mxu0 %v2166
        %2232 = vmatprep.subr.bf16.mxu0 %v2169
        %2233 = vmatpush1.bf16.msra.mxu0 %v2168
        %2234 = vmatprep.subr.bf16.mxu0 %v2171
        %2235 = vmatpush1.bf16.msra.mxu0 %v2170
        %2236 = vmatprep.subr.bf16.mxu0 %v2173
        %2237 = vmatpush1.bf16.msra.mxu0 %v2172
        %2238 = vmatprep.subr.bf16.mxu0 %v2175
        %2239 = vmatpush1.bf16.msra.mxu0 %v2174
        %2240 = vmatprep.subr.bf16.mxu0 %v2177
        %2241 = vmatpush1.bf16.msra.mxu0 %v2176
        %2242 = vmatprep.subr.bf16.mxu0 %v2179
        %2243 = vmatpush1.bf16.msra.mxu0 %v2178
        %2244 = vmatprep.subr.bf16.mxu0 %v2181
        %2245 = vmatpush1.bf16.msra.mxu0 %v2180
        %2246 = vmatprep.subr.bf16.mxu0 %v2183
        %2247 = vmatpush1.bf16.msra.mxu0 %v2182
        %2248 = vmatprep.subr.bf16.mxu0 %v2185
        %2249 = vmatpush1.bf16.msra.mxu0 %v2184
        %2250 = vmatprep.mubr.bf16.mxu0 %v1986
        %2251 = vmatmul.mubr.bf16.gmra.mrb[0].mxu0 %v1985
        %v2252 = vpop.f32.mrb[0].mxu0
        %v2253 = vadd.f32 0.0, %v2252
        %v2254 = vpop.f32.mrb[0].mxu0
        %v2255 = vadd.f32 0.0, %v2254
        %v2256 = vpop.f32.mrb[0].mxu0
        %v2257 = vadd.f32 0.0, %v2256
        %v2258 = vpop.f32.mrb[0].mxu0
        %v2259 = vadd.f32 0.0, %v2258
        %2260 = vmatprep.mubr.bf16.mxu0 %v1988
        %2261 = vmatmul.mubr.bf16.gmra.mrb[0].mxu0 %v1987
        %v2262 = vpop.f32.mrb[0].mxu0
        %v2263 = vadd.f32 0.0, %v2262
        %v2264 = vpop.f32.mrb[0].mxu0
        %v2265 = vadd.f32 0.0, %v2264
        %v2266 = vpop.f32.mrb[0].mxu0
        %v2267 = vadd.f32 0.0, %v2266
        %v2268 = vpop.f32.mrb[0].mxu0
        %v2269 = vadd.f32 0.0, %v2268
        %2270 = vmatprep.mubr.bf16.mxu0 %v1990
        %2271 = vmatmul.mubr.bf16.gmra.mrb[0].mxu0 %v1989
        %v2272 = vpop.f32.mrb[0].mxu0
        %v2273 = vadd.f32 0.0, %v2272
        %v2274 = vpop.f32.mrb[0].mxu0
        %v2275 = vadd.f32 0.0, %v2274
        %v2276 = vpop.f32.mrb[0].mxu0
        %v2277 = vadd.f32 0.0, %v2276
        %v2278 = vpop.f32.mrb[0].mxu0
        %v2279 = vadd.f32 0.0, %v2278
        %2280 = vmatprep.mubr.bf16.mxu0 %v1992
        %2281 = vmatmul.mubr.bf16.gmra.mrb[0].mxu0 %v1991
        %v2282 = vpop.f32.mrb[0].mxu0
        %v2283 = vadd.f32 0.0, %v2282
        %v2284 = vpop.f32.mrb[0].mxu0
        %v2285 = vadd.f32 0.0, %v2284
        %v2286 = vpop.f32.mrb[0].mxu0
        %v2287 = vpop.f32.mrb[0].mxu0
        %2288 = vdwg.mxu0
        %v2321 = vunpack.c.l.b16 %v1993
        %v2322 = vunpack.c.h.b16 %v1993
        %v2323 = vunpack.c.l.b16 %v1994
        %v2324 = vunpack.c.h.b16 %v1994
        %v2325 = vunpack.c.l.b16 %v1995
        %v2326 = vunpack.c.h.b16 %v1995
        %v2327 = vunpack.c.l.b16 %v1996
        %v2328 = vunpack.c.h.b16 %v1996
        %v2329 = vunpack.c.l.b16 %v1997
        %v2330 = vunpack.c.h.b16 %v1997
        %v2331 = vunpack.c.l.b16 %v1998
        %v2332 = vunpack.c.h.b16 %v1998
        %v2333 = vunpack.c.l.b16 %v1999
        %v2334 = vunpack.c.h.b16 %v1999
        %v2335 = vunpack.c.l.b16 %v2000
        %v2336 = vunpack.c.h.b16 %v2000
        %v2337 = vunpack.c.l.b16 %v2001
        %v2338 = vunpack.c.h.b16 %v2001
        %v2339 = vunpack.c.l.b16 %v2002
        %v2340 = vunpack.c.h.b16 %v2002
        %v2341 = vunpack.c.l.b16 %v2003
        %v2342 = vunpack.c.h.b16 %v2003
        %v2343 = vunpack.c.l.b16 %v2004
        %v2344 = vunpack.c.h.b16 %v2004
        %v2345 = vunpack.c.l.b16 %v2005
        %v2346 = vunpack.c.h.b16 %v2005
        %v2347 = vunpack.c.l.b16 %v2006
        %v2348 = vunpack.c.h.b16 %v2006
        %v2349 = vunpack.c.l.b16 %v2007
        %v2350 = vunpack.c.h.b16 %v2007
        %v2351 = vunpack.c.l.b16 %v2008
        %v2352 = vunpack.c.h.b16 %v2008
        %v2353 = vunpack.c.l.b16 %v2009
        %v2354 = vunpack.c.h.b16 %v2009
        %v2355 = vunpack.c.l.b16 %v2010
        %v2356 = vunpack.c.h.b16 %v2010
        %v2357 = vunpack.c.l.b16 %v2011
        %v2358 = vunpack.c.h.b16 %v2011
        %v2359 = vunpack.c.l.b16 %v2012
        %v2360 = vunpack.c.h.b16 %v2012
        %v2361 = vunpack.c.l.b16 %v2013
        %v2362 = vunpack.c.h.b16 %v2013
        %v2363 = vunpack.c.l.b16 %v2014
        %v2364 = vunpack.c.h.b16 %v2014
        %v2365 = vunpack.c.l.b16 %v2015
        %v2366 = vunpack.c.h.b16 %v2015
        %v2367 = vunpack.c.l.b16 %v2016
        %v2368 = vunpack.c.h.b16 %v2016
        %v2369 = vunpack.c.l.b16 %v2017
        %v2370 = vunpack.c.h.b16 %v2017
        %v2371 = vunpack.c.l.b16 %v2018
        %v2372 = vunpack.c.h.b16 %v2018
        %v2373 = vunpack.c.l.b16 %v2019
        %v2374 = vunpack.c.h.b16 %v2019
        %v2375 = vunpack.c.l.b16 %v2020
        %v2376 = vunpack.c.h.b16 %v2020
        %v2377 = vunpack.c.l.b16 %v2021
        %v2378 = vunpack.c.h.b16 %v2021
        %v2379 = vunpack.c.l.b16 %v2022
        %v2380 = vunpack.c.h.b16 %v2022
        %v2381 = vunpack.c.l.b16 %v2023
        %v2382 = vunpack.c.h.b16 %v2023
        %v2383 = vunpack.c.l.b16 %v2024
        %v2384 = vunpack.c.h.b16 %v2024
        %v2385 = vpack.c.b16 %v2323, %v2321
        %v2386 = vpack.c.b16 %v2324, %v2322
        %v2387 = vpack.c.b16 %v2327, %v2325
        %v2388 = vpack.c.b16 %v2328, %v2326
        %v2389 = vpack.c.b16 %v2331, %v2329
        %v2390 = vpack.c.b16 %v2332, %v2330
        %v2391 = vpack.c.b16 %v2335, %v2333
        %v2392 = vpack.c.b16 %v2336, %v2334
        %v2393 = vpack.c.b16 %v2339, %v2337
        %v2394 = vpack.c.b16 %v2340, %v2338
        %v2395 = vpack.c.b16 %v2343, %v2341
        %v2396 = vpack.c.b16 %v2344, %v2342
        %v2397 = vpack.c.b16 %v2347, %v2345
        %v2398 = vpack.c.b16 %v2348, %v2346
        %v2399 = vpack.c.b16 %v2351, %v2349
        %v2400 = vpack.c.b16 %v2352, %v2350
        %v2401 = vpack.c.b16 %v2355, %v2353
        %v2402 = vpack.c.b16 %v2356, %v2354
        %v2403 = vpack.c.b16 %v2359, %v2357
        %v2404 = vpack.c.b16 %v2360, %v2358
        %v2405 = vpack.c.b16 %v2363, %v2361
        %v2406 = vpack.c.b16 %v2364, %v2362
        %v2407 = vpack.c.b16 %v2367, %v2365
        %v2408 = vpack.c.b16 %v2368, %v2366
        %v2409 = vpack.c.b16 %v2371, %v2369
        %v2410 = vpack.c.b16 %v2372, %v2370
        %v2411 = vpack.c.b16 %v2375, %v2373
        %v2412 = vpack.c.b16 %v2376, %v2374
        %v2413 = vpack.c.b16 %v2379, %v2377
        %v2414 = vpack.c.b16 %v2380, %v2378
        %v2415 = vpack.c.b16 %v2383, %v2381
        %v2416 = vpack.c.b16 %v2384, %v2382
        %2449 = vmatprep.subr.bf16.mxu0 %v2386
        %2450 = vmatpush1.bf16.msra.mxu0 %v2385
        %2451 = vmatprep.subr.bf16.mxu0 %v2388
        %2452 = vmatpush1.bf16.msra.mxu0 %v2387
        %2453 = vmatprep.subr.bf16.mxu0 %v2390
        %2454 = vmatpush1.bf16.msra.mxu0 %v2389
        %2455 = vmatprep.subr.bf16.mxu0 %v2392
        %2456 = vmatpush1.bf16.msra.mxu0 %v2391
        %2457 = vmatprep.subr.bf16.mxu0 %v2394
        %2458 = vmatpush1.bf16.msra.mxu0 %v2393
        %2459 = vmatprep.subr.bf16.mxu0 %v2396
        %2460 = vmatpush1.bf16.msra.mxu0 %v2395
        %2461 = vmatprep.subr.bf16.mxu0 %v2398
        %2462 = vmatpush1.bf16.msra.mxu0 %v2397
        %2463 = vmatprep.subr.bf16.mxu0 %v2400
        %2464 = vmatpush1.bf16.msra.mxu0 %v2399
        %2465 = vmatprep.subr.bf16.mxu0 %v2402
        %2466 = vmatpush1.bf16.msra.mxu0 %v2401
        %2467 = vmatprep.subr.bf16.mxu0 %v2404
        %2468 = vmatpush1.bf16.msra.mxu0 %v2403
        %2469 = vmatprep.subr.bf16.mxu0 %v2406
        %2470 = vmatpush1.bf16.msra.mxu0 %v2405
        %2471 = vmatprep.subr.bf16.mxu0 %v2408
        %2472 = vmatpush1.bf16.msra.mxu0 %v2407
        %2473 = vmatprep.subr.bf16.mxu0 %v2410
        %2474 = vmatpush1.bf16.msra.mxu0 %v2409
        %2475 = vmatprep.subr.bf16.mxu0 %v2412
        %2476 = vmatpush1.bf16.msra.mxu0 %v2411
        %2477 = vmatprep.subr.bf16.mxu0 %v2414
        %2478 = vmatpush1.bf16.msra.mxu0 %v2413
        %2479 = vmatprep.subr.bf16.mxu0 %v2416
        %2480 = vmatpush1.bf16.msra.mxu0 %v2415
        %2481 = vmatprep.mubr.bf16.mxu0 %v1978
        %2482 = vmatmul.mubr.bf16.gmra.mrb[0].mxu0 %v1977
        %v2483 = vpop.f32.mrb[0].mxu0
        %v2484 = vadd.f32 %v2253, %v2483
        %v2485 = vpop.f32.mrb[0].mxu0
        %v2486 = vadd.f32 %v2255, %v2485
        %v2487 = vpop.f32.mrb[0].mxu0
        %v2488 = vadd.f32 %v2257, %v2487
        %v2489 = vpop.f32.mrb[0].mxu0
        %v2490 = vadd.f32 %v2259, %v2489
        %2491 = vmatprep.mubr.bf16.mxu0 %v1980
        %2492 = vmatmul.mubr.bf16.gmra.mrb[0].mxu0 %v1979
        %v2493 = vpop.f32.mrb[0].mxu0
        %v2494 = vadd.f32 %v2263, %v2493
        %v2495 = vpop.f32.mrb[0].mxu0
        %v2496 = vadd.f32 %v2265, %v2495
        %v2497 = vpop.f32.mrb[0].mxu0
        %v2498 = vadd.f32 %v2267, %v2497
        %v2499 = vpop.f32.mrb[0].mxu0
        %v2500 = vadd.f32 %v2269, %v2499
        %2501 = vmatprep.mubr.bf16.mxu0 %v1982
        %2502 = vmatmul.mubr.bf16.gmra.mrb[0].mxu0 %v1981
        %v2503 = vpop.f32.mrb[0].mxu0
        %v2504 = vadd.f32 %v2273, %v2503
        %v2505 = vpop.f32.mrb[0].mxu0
        %v2506 = vadd.f32 %v2275, %v2505
        %v2507 = vpop.f32.mrb[0].mxu0
        %v2508 = vadd.f32 %v2277, %v2507
        %v2509 = vpop.f32.mrb[0].mxu0
        %v2510 = vadd.f32 %v2279, %v2509
        %2511 = vmatprep.mubr.bf16.mxu0 %v1984
        %2512 = vmatmul.mubr.bf16.gmra.mrb[0].mxu0 %v1983
        %v2513 = vpop.f32.mrb[0].mxu0
        %v2514 = vadd.f32 %v2283, %v2513
        %v2515 = vpop.f32.mrb[0].mxu0
        %v2516 = vadd.f32 %v2285, %v2515
        %v2517 = vpop.f32.mrb[0].mxu0
        %v2518 = vpop.f32.mrb[0].mxu0
        %2519 = vdwg.mxu0
        %s2520 = scalar_lea.vmem [#allocation8], 256
        %v2521 = vld [vmem:[%s2520] sm:$0xff]
        %v2522 = vld [vmem:[%s2520 + $0x8] sm:$0xff]
        %v2523 = vld [vmem:[%s2520 + $0x10] sm:$0xff]
        %v2524 = vld [vmem:[%s2520 + $0x18] sm:$0xff]
        %v2525 = vld [vmem:[%s2520 + $0x20] sm:$0xff]
        %v2526 = vld [vmem:[%s2520 + $0x28] sm:$0xff]
        %v2527 = vld [vmem:[%s2520 + $0x30] sm:$0xff]
        %v2528 = vld [vmem:[%s2520 + $0x38] sm:$0xff]
        %v2529 = vld [vmem:[%s2520 + $0x40] sm:$0xff]
        %v2530 = vld [vmem:[%s2520 + $0x48] sm:$0xff]
        %v2531 = vld [vmem:[%s2520 + $0x50] sm:$0xff]
        %v2532 = vld [vmem:[%s2520 + $0x58] sm:$0xff]
        %v2533 = vld [vmem:[%s2520 + $0x60] sm:$0xff]
        %v2534 = vld [vmem:[%s2520 + $0x68] sm:$0xff]
        %v2535 = vld [vmem:[%s2520 + $0x70] sm:$0xff]
        %v2536 = vld [vmem:[%s2520 + $0x78] sm:$0xff]
        %v2537 = vld [vmem:[%s2520 + $0x80] sm:$0xff]
        %v2538 = vld [vmem:[%s2520 + $0x88] sm:$0xff]
        %v2539 = vld [vmem:[%s2520 + $0x90] sm:$0xff]
        %v2540 = vld [vmem:[%s2520 + $0x98] sm:$0xff]
        %v2541 = vld [vmem:[%s2520 + $0xa0] sm:$0xff]
        %v2542 = vld [vmem:[%s2520 + $0xa8] sm:$0xff]
        %v2543 = vld [vmem:[%s2520 + $0xb0] sm:$0xff]
        %v2544 = vld [vmem:[%s2520 + $0xb8] sm:$0xff]
        %v2545 = vld [vmem:[%s2520 + $0xc0] sm:$0xff]
        %v2546 = vld [vmem:[%s2520 + $0xc8] sm:$0xff]
        %v2547 = vld [vmem:[%s2520 + $0xd0] sm:$0xff]
        %v2548 = vld [vmem:[%s2520 + $0xd8] sm:$0xff]
        %v2549 = vld [vmem:[%s2520 + $0xe0] sm:$0xff]
        %v2550 = vld [vmem:[%s2520 + $0xe8] sm:$0xff]
        %v2551 = vld [vmem:[%s2520 + $0xf0] sm:$0xff]
        %v2552 = vld [vmem:[%s2520 + $0xf8] sm:$0xff]
        %s2553 = scalar_lea.vmem [#allocation8], 768
        %v2554 = vld [vmem:[%s2553] sm:$0xff]
        %v2555 = vld [vmem:[%s2553 + $0x8] sm:$0xff]
        %v2556 = vld [vmem:[%s2553 + $0x10] sm:$0xff]
        %v2557 = vld [vmem:[%s2553 + $0x18] sm:$0xff]
        %v2558 = vld [vmem:[%s2553 + $0x20] sm:$0xff]
        %v2559 = vld [vmem:[%s2553 + $0x28] sm:$0xff]
        %v2560 = vld [vmem:[%s2553 + $0x30] sm:$0xff]
        %v2561 = vld [vmem:[%s2553 + $0x38] sm:$0xff]
        %v2562 = vld [vmem:[%s2553 + $0x40] sm:$0xff]
        %v2563 = vld [vmem:[%s2553 + $0x48] sm:$0xff]
        %v2564 = vld [vmem:[%s2553 + $0x50] sm:$0xff]
        %v2565 = vld [vmem:[%s2553 + $0x58] sm:$0xff]
        %v2566 = vld [vmem:[%s2553 + $0x60] sm:$0xff]
        %v2567 = vld [vmem:[%s2553 + $0x68] sm:$0xff]
        %v2568 = vld [vmem:[%s2553 + $0x70] sm:$0xff]
        %v2569 = vld [vmem:[%s2553 + $0x78] sm:$0xff]
        %v2570 = vld [vmem:[%s2553 + $0x80] sm:$0xff]
        %v2571 = vld [vmem:[%s2553 + $0x88] sm:$0xff]
        %v2572 = vld [vmem:[%s2553 + $0x90] sm:$0xff]
        %v2573 = vld [vmem:[%s2553 + $0x98] sm:$0xff]
        %v2574 = vld [vmem:[%s2553 + $0xa0] sm:$0xff]
        %v2575 = vld [vmem:[%s2553 + $0xa8] sm:$0xff]
        %v2576 = vld [vmem:[%s2553 + $0xb0] sm:$0xff]
        %v2577 = vld [vmem:[%s2553 + $0xb8] sm:$0xff]
        %v2578 = vld [vmem:[%s2553 + $0xc0] sm:$0xff]
        %v2579 = vld [vmem:[%s2553 + $0xc8] sm:$0xff]
        %v2580 = vld [vmem:[%s2553 + $0xd0] sm:$0xff]
        %v2581 = vld [vmem:[%s2553 + $0xd8] sm:$0xff]
        %v2582 = vld [vmem:[%s2553 + $0xe0] sm:$0xff]
        %v2583 = vld [vmem:[%s2553 + $0xe8] sm:$0xff]
        %v2584 = vld [vmem:[%s2553 + $0xf0] sm:$0xff]
        %v2585 = vld [vmem:[%s2553 + $0xf8] sm:$0xff]
        %v2618 = vunpack.c.l.b16 %v2554
        %v2619 = vunpack.c.h.b16 %v2554
        %v2620 = vunpack.c.l.b16 %v2555
        %v2621 = vunpack.c.h.b16 %v2555
        %v2622 = vunpack.c.l.b16 %v2556
        %v2623 = vunpack.c.h.b16 %v2556
        %v2624 = vunpack.c.l.b16 %v2557
        %v2625 = vunpack.c.h.b16 %v2557
        %v2626 = vunpack.c.l.b16 %v2558
        %v2627 = vunpack.c.h.b16 %v2558
        %v2628 = vunpack.c.l.b16 %v2559
        %v2629 = vunpack.c.h.b16 %v2559
        %v2630 = vunpack.c.l.b16 %v2560
        %v2631 = vunpack.c.h.b16 %v2560
        %v2632 = vunpack.c.l.b16 %v2561
        %v2633 = vunpack.c.h.b16 %v2561
        %v2634 = vunpack.c.l.b16 %v2562
        %v2635 = vunpack.c.h.b16 %v2562
        %v2636 = vunpack.c.l.b16 %v2563
        %v2637 = vunpack.c.h.b16 %v2563
        %v2638 = vunpack.c.l.b16 %v2564
        %v2639 = vunpack.c.h.b16 %v2564
        %v2640 = vunpack.c.l.b16 %v2565
        %v2641 = vunpack.c.h.b16 %v2565
        %v2642 = vunpack.c.l.b16 %v2566
        %v2643 = vunpack.c.h.b16 %v2566
        %v2644 = vunpack.c.l.b16 %v2567
        %v2645 = vunpack.c.h.b16 %v2567
        %v2646 = vunpack.c.l.b16 %v2568
        %v2647 = vunpack.c.h.b16 %v2568
        %v2648 = vunpack.c.l.b16 %v2569
        %v2649 = vunpack.c.h.b16 %v2569
        %v2650 = vunpack.c.l.b16 %v2570
        %v2651 = vunpack.c.h.b16 %v2570
        %v2652 = vunpack.c.l.b16 %v2571
        %v2653 = vunpack.c.h.b16 %v2571
        %v2654 = vunpack.c.l.b16 %v2572
        %v2655 = vunpack.c.h.b16 %v2572
        %v2656 = vunpack.c.l.b16 %v2573
        %v2657 = vunpack.c.h.b16 %v2573
        %v2658 = vunpack.c.l.b16 %v2574
        %v2659 = vunpack.c.h.b16 %v2574
        %v2660 = vunpack.c.l.b16 %v2575
        %v2661 = vunpack.c.h.b16 %v2575
        %v2662 = vunpack.c.l.b16 %v2576
        %v2663 = vunpack.c.h.b16 %v2576
        %v2664 = vunpack.c.l.b16 %v2577
        %v2665 = vunpack.c.h.b16 %v2577
        %v2666 = vunpack.c.l.b16 %v2578
        %v2667 = vunpack.c.h.b16 %v2578
        %v2668 = vunpack.c.l.b16 %v2579
        %v2669 = vunpack.c.h.b16 %v2579
        %v2670 = vunpack.c.l.b16 %v2580
        %v2671 = vunpack.c.h.b16 %v2580
        %v2672 = vunpack.c.l.b16 %v2581
        %v2673 = vunpack.c.h.b16 %v2581
        %v2674 = vunpack.c.l.b16 %v2582
        %v2675 = vunpack.c.h.b16 %v2582
        %v2676 = vunpack.c.l.b16 %v2583
        %v2677 = vunpack.c.h.b16 %v2583
        %v2678 = vunpack.c.l.b16 %v2584
        %v2679 = vunpack.c.h.b16 %v2584
        %v2680 = vunpack.c.l.b16 %v2585
        %v2681 = vunpack.c.h.b16 %v2585
        %v2682 = vpack.c.b16 %v2620, %v2618
        %v2683 = vpack.c.b16 %v2621, %v2619
        %v2684 = vpack.c.b16 %v2624, %v2622
        %v2685 = vpack.c.b16 %v2625, %v2623
        %v2686 = vpack.c.b16 %v2628, %v2626
        %v2687 = vpack.c.b16 %v2629, %v2627
        %v2688 = vpack.c.b16 %v2632, %v2630
        %v2689 = vpack.c.b16 %v2633, %v2631
        %v2690 = vpack.c.b16 %v2636, %v2634
        %v2691 = vpack.c.b16 %v2637, %v2635
        %v2692 = vpack.c.b16 %v2640, %v2638
        %v2693 = vpack.c.b16 %v2641, %v2639
        %v2694 = vpack.c.b16 %v2644, %v2642
        %v2695 = vpack.c.b16 %v2645, %v2643
        %v2696 = vpack.c.b16 %v2648, %v2646
        %v2697 = vpack.c.b16 %v2649, %v2647
        %v2698 = vpack.c.b16 %v2652, %v2650
        %v2699 = vpack.c.b16 %v2653, %v2651
        %v2700 = vpack.c.b16 %v2656, %v2654
        %v2701 = vpack.c.b16 %v2657, %v2655
        %v2702 = vpack.c.b16 %v2660, %v2658
        %v2703 = vpack.c.b16 %v2661, %v2659
        %v2704 = vpack.c.b16 %v2664, %v2662
        %v2705 = vpack.c.b16 %v2665, %v2663
        %v2706 = vpack.c.b16 %v2668, %v2666
        %v2707 = vpack.c.b16 %v2669, %v2667
        %v2708 = vpack.c.b16 %v2672, %v2670
        %v2709 = vpack.c.b16 %v2673, %v2671
        %v2710 = vpack.c.b16 %v2676, %v2674
        %v2711 = vpack.c.b16 %v2677, %v2675
        %v2712 = vpack.c.b16 %v2680, %v2678
        %v2713 = vpack.c.b16 %v2681, %v2679
        %2746 = vmatprep.subr.bf16.mxu0 %v2683
        %2747 = vmatpush1.bf16.msra.mxu0 %v2682
        %2748 = vmatprep.subr.bf16.mxu0 %v2685
        %2749 = vmatpush1.bf16.msra.mxu0 %v2684
        %2750 = vmatprep.subr.bf16.mxu0 %v2687
        %2751 = vmatpush1.bf16.msra.mxu0 %v2686
        %2752 = vmatprep.subr.bf16.mxu0 %v2689
        %2753 = vmatpush1.bf16.msra.mxu0 %v2688
        %2754 = vmatprep.subr.bf16.mxu0 %v2691
        %2755 = vmatpush1.bf16.msra.mxu0 %v2690
        %2756 = vmatprep.subr.bf16.mxu0 %v2693
        %2757 = vmatpush1.bf16.msra.mxu0 %v2692
        %2758 = vmatprep.subr.bf16.mxu0 %v2695
        %2759 = vmatpush1.bf16.msra.mxu0 %v2694
        %2760 = vmatprep.subr.bf16.mxu0 %v2697
        %2761 = vmatpush1.bf16.msra.mxu0 %v2696
        %2762 = vmatprep.subr.bf16.mxu0 %v2699
        %2763 = vmatpush1.bf16.msra.mxu0 %v2698
        %2764 = vmatprep.subr.bf16.mxu0 %v2701
        %2765 = vmatpush1.bf16.msra.mxu0 %v2700
        %2766 = vmatprep.subr.bf16.mxu0 %v2703
        %2767 = vmatpush1.bf16.msra.mxu0 %v2702
        %2768 = vmatprep.subr.bf16.mxu0 %v2705
        %2769 = vmatpush1.bf16.msra.mxu0 %v2704
        %2770 = vmatprep.subr.bf16.mxu0 %v2707
        %2771 = vmatpush1.bf16.msra.mxu0 %v2706
        %2772 = vmatprep.subr.bf16.mxu0 %v2709
        %2773 = vmatpush1.bf16.msra.mxu0 %v2708
        %2774 = vmatprep.subr.bf16.mxu0 %v2711
        %2775 = vmatpush1.bf16.msra.mxu0 %v2710
        %2776 = vmatprep.subr.bf16.mxu0 %v2713
        %2777 = vmatpush1.bf16.msra.mxu0 %v2712
        %2778 = vmatprep.mubr.bf16.mxu0 %v1986
        %2779 = vmatmul.mubr.bf16.gmra.mrb[0].mxu0 %v1985
        %v2780 = vpop.f32.mrb[0].mxu0
        %v2781 = vadd.f32 0.0, %v2780
        %v2782 = vpop.f32.mrb[0].mxu0
        %v2783 = vadd.f32 0.0, %v2782
        %v2784 = vpop.f32.mrb[0].mxu0
        %v2785 = vadd.f32 0.0, %v2784
        %v2786 = vpop.f32.mrb[0].mxu0
        %v2787 = vadd.f32 0.0, %v2786
        %2788 = vmatprep.mubr.bf16.mxu0 %v1988
        %2789 = vmatmul.mubr.bf16.gmra.mrb[0].mxu0 %v1987
        %v2790 = vpop.f32.mrb[0].mxu0
        %v2791 = vadd.f32 0.0, %v2790
        %v2792 = vpop.f32.mrb[0].mxu0
        %v2793 = vadd.f32 0.0, %v2792
        %v2794 = vpop.f32.mrb[0].mxu0
        %v2795 = vadd.f32 0.0, %v2794
        %v2796 = vpop.f32.mrb[0].mxu0
        %v2797 = vadd.f32 0.0, %v2796
        %2798 = vmatprep.mubr.bf16.mxu0 %v1990
        %2799 = vmatmul.mubr.bf16.gmra.mrb[0].mxu0 %v1989
        %v2800 = vpop.f32.mrb[0].mxu0
        %v2801 = vadd.f32 0.0, %v2800
        %v2802 = vpop.f32.mrb[0].mxu0
        %v2803 = vadd.f32 0.0, %v2802
        %v2804 = vpop.f32.mrb[0].mxu0
        %v2805 = vadd.f32 0.0, %v2804
        %v2806 = vpop.f32.mrb[0].mxu0
        %v2807 = vadd.f32 0.0, %v2806
        %2808 = vmatprep.mubr.bf16.mxu0 %v1992
        %2809 = vmatmul.mubr.bf16.gmra.mrb[0].mxu0 %v1991
        %v2810 = vpop.f32.mrb[0].mxu0
        %v2811 = vadd.f32 0.0, %v2810
        %v2812 = vpop.f32.mrb[0].mxu0
        %v2813 = vadd.f32 0.0, %v2812
        %v2814 = vpop.f32.mrb[0].mxu0
        %v2815 = vpop.f32.mrb[0].mxu0
        %2816 = vdwg.mxu0
        %v2849 = vunpack.c.l.b16 %v2521
        %v2850 = vunpack.c.h.b16 %v2521
        %v2851 = vunpack.c.l.b16 %v2522
        %v2852 = vunpack.c.h.b16 %v2522
        %v2853 = vunpack.c.l.b16 %v2523
        %v2854 = vunpack.c.h.b16 %v2523
        %v2855 = vunpack.c.l.b16 %v2524
        %v2856 = vunpack.c.h.b16 %v2524
        %v2857 = vunpack.c.l.b16 %v2525
        %v2858 = vunpack.c.h.b16 %v2525
        %v2859 = vunpack.c.l.b16 %v2526
        %v2860 = vunpack.c.h.b16 %v2526
        %v2861 = vunpack.c.l.b16 %v2527
        %v2862 = vunpack.c.h.b16 %v2527
        %v2863 = vunpack.c.l.b16 %v2528
        %v2864 = vunpack.c.h.b16 %v2528
        %v2865 = vunpack.c.l.b16 %v2529
        %v2866 = vunpack.c.h.b16 %v2529
        %v2867 = vunpack.c.l.b16 %v2530
        %v2868 = vunpack.c.h.b16 %v2530
        %v2869 = vunpack.c.l.b16 %v2531
        %v2870 = vunpack.c.h.b16 %v2531
        %v2871 = vunpack.c.l.b16 %v2532
        %v2872 = vunpack.c.h.b16 %v2532
        %v2873 = vunpack.c.l.b16 %v2533
        %v2874 = vunpack.c.h.b16 %v2533
        %v2875 = vunpack.c.l.b16 %v2534
        %v2876 = vunpack.c.h.b16 %v2534
        %v2877 = vunpack.c.l.b16 %v2535
        %v2878 = vunpack.c.h.b16 %v2535
        %v2879 = vunpack.c.l.b16 %v2536
        %v2880 = vunpack.c.h.b16 %v2536
        %v2881 = vunpack.c.l.b16 %v2537
        %v2882 = vunpack.c.h.b16 %v2537
        %v2883 = vunpack.c.l.b16 %v2538
        %v2884 = vunpack.c.h.b16 %v2538
        %v2885 = vunpack.c.l.b16 %v2539
        %v2886 = vunpack.c.h.b16 %v2539
        %v2887 = vunpack.c.l.b16 %v2540
        %v2888 = vunpack.c.h.b16 %v2540
        %v2889 = vunpack.c.l.b16 %v2541
        %v2890 = vunpack.c.h.b16 %v2541
        %v2891 = vunpack.c.l.b16 %v2542
        %v2892 = vunpack.c.h.b16 %v2542
        %v2893 = vunpack.c.l.b16 %v2543
        %v2894 = vunpack.c.h.b16 %v2543
        %v2895 = vunpack.c.l.b16 %v2544
        %v2896 = vunpack.c.h.b16 %v2544
        %v2897 = vunpack.c.l.b16 %v2545
        %v2898 = vunpack.c.h.b16 %v2545
        %v2899 = vunpack.c.l.b16 %v2546
        %v2900 = vunpack.c.h.b16 %v2546
        %v2901 = vunpack.c.l.b16 %v2547
        %v2902 = vunpack.c.h.b16 %v2547
        %v2903 = vunpack.c.l.b16 %v2548
        %v2904 = vunpack.c.h.b16 %v2548
        %v2905 = vunpack.c.l.b16 %v2549
        %v2906 = vunpack.c.h.b16 %v2549
        %v2907 = vunpack.c.l.b16 %v2550
        %v2908 = vunpack.c.h.b16 %v2550
        %v2909 = vunpack.c.l.b16 %v2551
        %v2910 = vunpack.c.h.b16 %v2551
        %v2911 = vunpack.c.l.b16 %v2552
        %v2912 = vunpack.c.h.b16 %v2552
        %v2913 = vpack.c.b16 %v2851, %v2849
        %v2914 = vpack.c.b16 %v2852, %v2850
        %v2915 = vpack.c.b16 %v2855, %v2853
        %v2916 = vpack.c.b16 %v2856, %v2854
        %v2917 = vpack.c.b16 %v2859, %v2857
        %v2918 = vpack.c.b16 %v2860, %v2858
        %v2919 = vpack.c.b16 %v2863, %v2861
        %v2920 = vpack.c.b16 %v2864, %v2862
        %v2921 = vpack.c.b16 %v2867, %v2865
        %v2922 = vpack.c.b16 %v2868, %v2866
        %v2923 = vpack.c.b16 %v2871, %v2869
        %v2924 = vpack.c.b16 %v2872, %v2870
        %v2925 = vpack.c.b16 %v2875, %v2873
        %v2926 = vpack.c.b16 %v2876, %v2874
        %v2927 = vpack.c.b16 %v2879, %v2877
        %v2928 = vpack.c.b16 %v2880, %v2878
        %v2929 = vpack.c.b16 %v2883, %v2881
        %v2930 = vpack.c.b16 %v2884, %v2882
        %v2931 = vpack.c.b16 %v2887, %v2885
        %v2932 = vpack.c.b16 %v2888, %v2886
        %v2933 = vpack.c.b16 %v2891, %v2889
        %v2934 = vpack.c.b16 %v2892, %v2890
        %v2935 = vpack.c.b16 %v2895, %v2893
        %v2936 = vpack.c.b16 %v2896, %v2894
        %v2937 = vpack.c.b16 %v2899, %v2897
        %v2938 = vpack.c.b16 %v2900, %v2898
        %v2939 = vpack.c.b16 %v2903, %v2901
        %v2940 = vpack.c.b16 %v2904, %v2902
        %v2941 = vpack.c.b16 %v2907, %v2905
        %v2942 = vpack.c.b16 %v2908, %v2906
        %v2943 = vpack.c.b16 %v2911, %v2909
        %v2944 = vpack.c.b16 %v2912, %v2910
        %2977 = vmatprep.subr.bf16.mxu0 %v2914
        %2978 = vmatpush1.bf16.msra.mxu0 %v2913
        %2979 = vmatprep.subr.bf16.mxu0 %v2916
        %2980 = vmatpush1.bf16.msra.mxu0 %v2915
        %2981 = vmatprep.subr.bf16.mxu0 %v2918
        %2982 = vmatpush1.bf16.msra.mxu0 %v2917
        %2983 = vmatprep.subr.bf16.mxu0 %v2920
        %2984 = vmatpush1.bf16.msra.mxu0 %v2919
        %2985 = vmatprep.subr.bf16.mxu0 %v2922
        %2986 = vmatpush1.bf16.msra.mxu0 %v2921
        %2987 = vmatprep.subr.bf16.mxu0 %v2924
        %2988 = vmatpush1.bf16.msra.mxu0 %v2923
        %2989 = vmatprep.subr.bf16.mxu0 %v2926
        %2990 = vmatpush1.bf16.msra.mxu0 %v2925
        %2991 = vmatprep.subr.bf16.mxu0 %v2928
        %2992 = vmatpush1.bf16.msra.mxu0 %v2927
        %2993 = vmatprep.subr.bf16.mxu0 %v2930
        %2994 = vmatpush1.bf16.msra.mxu0 %v2929
        %2995 = vmatprep.subr.bf16.mxu0 %v2932
        %2996 = vmatpush1.bf16.msra.mxu0 %v2931
        %2997 = vmatprep.subr.bf16.mxu0 %v2934
        %2998 = vmatpush1.bf16.msra.mxu0 %v2933
        %2999 = vmatprep.subr.bf16.mxu0 %v2936
        %3000 = vmatpush1.bf16.msra.mxu0 %v2935
        %3001 = vmatprep.subr.bf16.mxu0 %v2938
        %3002 = vmatpush1.bf16.msra.mxu0 %v2937
        %3003 = vmatprep.subr.bf16.mxu0 %v2940
        %3004 = vmatpush1.bf16.msra.mxu0 %v2939
        %3005 = vmatprep.subr.bf16.mxu0 %v2942
        %3006 = vmatpush1.bf16.msra.mxu0 %v2941
        %3007 = vmatprep.subr.bf16.mxu0 %v2944
        %3008 = vmatpush1.bf16.msra.mxu0 %v2943
        %3009 = vmatprep.mubr.bf16.mxu0 %v1978
        %3010 = vmatmul.mubr.bf16.gmra.mrb[0].mxu0 %v1977
        %v3011 = vpop.f32.mrb[0].mxu0
        %v3012 = vadd.f32 %v2781, %v3011
        %v3013 = vpop.f32.mrb[0].mxu0
        %v3014 = vadd.f32 %v2783, %v3013
        %v3015 = vpop.f32.mrb[0].mxu0
        %v3016 = vadd.f32 %v2785, %v3015
        %v3017 = vpop.f32.mrb[0].mxu0
        %v3018 = vadd.f32 %v2787, %v3017
        %3019 = vmatprep.mubr.bf16.mxu0 %v1980
        %3020 = vmatmul.mubr.bf16.gmra.mrb[0].mxu0 %v1979
        %v3021 = vpop.f32.mrb[0].mxu0
        %v3022 = vadd.f32 %v2791, %v3021
        %v3023 = vpop.f32.mrb[0].mxu0
        %v3024 = vadd.f32 %v2793, %v3023
        %v3025 = vpop.f32.mrb[0].mxu0
        %v3026 = vadd.f32 %v2795, %v3025
        %v3027 = vpop.f32.mrb[0].mxu0
        %v3028 = vadd.f32 %v2797, %v3027
        %3029 = vmatprep.mubr.bf16.mxu0 %v1982
        %3030 = vmatmul.mubr.bf16.gmra.mrb[0].mxu0 %v1981
        %v3031 = vpop.f32.mrb[0].mxu0
        %v3032 = vadd.f32 %v2801, %v3031
        %v3033 = vpop.f32.mrb[0].mxu0
        %v3034 = vadd.f32 %v2803, %v3033
        %v3035 = vpop.f32.mrb[0].mxu0
        %v3036 = vadd.f32 %v2805, %v3035
        %v3037 = vpop.f32.mrb[0].mxu0
        %v3038 = vadd.f32 %v2807, %v3037
        %3039 = vmatprep.mubr.bf16.mxu0 %v1984
        %3040 = vmatmul.mubr.bf16.gmra.mrb[0].mxu0 %v1983
        %v3041 = vpop.f32.mrb[0].mxu0
        %v3042 = vadd.f32 %v2811, %v3041
        %v3043 = vpop.f32.mrb[0].mxu0
        %v3044 = vadd.f32 %v2813, %v3043
        %v3045 = vpop.f32.mrb[0].mxu0
        %v3046 = vpop.f32.mrb[0].mxu0
        %3047 = vdwg.mxu0
        %v3048 = vmax.f32 %v2484, 0.0
        %v3049 = vmax.f32 %v2486, 0.0
        %v3050 = vmax.f32 %v2488, 0.0
        %v3051 = vmax.f32 %v2490, 0.0
        %v3052 = vmax.f32 %v2494, 0.0
        %v3053 = vmax.f32 %v2496, 0.0
        %v3054 = vmax.f32 %v2498, 0.0
        %v3055 = vmax.f32 %v2500, 0.0
        %v3056 = vmax.f32 %v2504, 0.0
        %v3057 = vmax.f32 %v2506, 0.0
        %v3058 = vmax.f32 %v2508, 0.0
        %v3059 = vmax.f32 %v2510, 0.0
        %v3060 = vmax.f32 %v2514, 0.0
        %v3061 = vmax.f32 %v2516, 0.0
        %v3062 = vpack.c.bf16 %v3050, %v3048
        %v3063 = vpack.c.bf16 %v3051, %v3049
        %v3064 = vpack.c.bf16 %v3054, %v3052
        %v3065 = vpack.c.bf16 %v3055, %v3053
        %v3066 = vpack.c.bf16 %v3058, %v3056
        %v3067 = vpack.c.bf16 %v3059, %v3057
        %v3068 = vpack.c.bf16 %v3060, %v3060
        %v3069 = vpack.c.bf16 %v3061, %v3061
        %v3070 = vmax.f32 %v3012, 0.0
        %v3071 = vmax.f32 %v3014, 0.0
        %v3072 = vmax.f32 %v3016, 0.0
        %v3073 = vmax.f32 %v3018, 0.0
        %v3074 = vmax.f32 %v3022, 0.0
        %v3075 = vmax.f32 %v3024, 0.0
        %v3076 = vmax.f32 %v3026, 0.0
        %v3077 = vmax.f32 %v3028, 0.0
        %v3078 = vmax.f32 %v3032, 0.0
        %v3079 = vmax.f32 %v3034, 0.0
        %v3080 = vmax.f32 %v3036, 0.0
        %v3081 = vmax.f32 %v3038, 0.0
        %v3082 = vmax.f32 %v3042, 0.0
        %v3083 = vmax.f32 %v3044, 0.0
        %v3084 = vpack.c.bf16 %v3072, %v3070
        %v3085 = vpack.c.bf16 %v3073, %v3071
        %v3086 = vpack.c.bf16 %v3076, %v3074
        %v3087 = vpack.c.bf16 %v3077, %v3075
        %v3088 = vpack.c.bf16 %v3080, %v3078
        %v3089 = vpack.c.bf16 %v3081, %v3079
        %v3090 = vpack.c.bf16 %v3082, %v3082
        %v3091 = vpack.c.bf16 %v3083, %v3083
        %v3092 = vld [vmem:[%s5] sm:$0xf]
        %v3093 = vld [vmem:[%s5 + $0x4] sm:$0xf]
        %v3094 = vld [vmem:[%s5 + $0x8] sm:$0xf]
        %v3095 = vld [vmem:[%s5 + $0xc] sm:$0xf]
        %v3096 = vld [vmem:[%s5 + $0x10] sm:$0xf]
        %v3097 = vld [vmem:[%s5 + $0x14] sm:$0xf]
        %v3098 = vld [vmem:[%s5 + $0x18] sm:$0xf]
        %v3099 = vld [vmem:[%s5 + $0x1c] sm:$0xf]
        %v3100 = vld [vmem:[%s5 + $0x20] sm:$0xf]
        %v3101 = vld [vmem:[%s5 + $0x24] sm:$0xf]
        %v3102 = vld [vmem:[%s5 + $0x28] sm:$0xf]
        %v3103 = vld [vmem:[%s5 + $0x2c] sm:$0xf]
        %v3104 = vld [vmem:[%s5 + $0x30] sm:$0xf]
        %v3105 = vld [vmem:[%s5 + $0x34] sm:$0xf]
        %s3106 = scalar_lea.vmem %s5, 56
        %v3107 = vld [vmem:[%s3106] sm:$0xf]
        %v3108 = vld [vmem:[%s3106 + $0x4] sm:$0xf]
        %v3109 = vld [vmem:[%s3106 + $0x8] sm:$0xf]
        %v3110 = vld [vmem:[%s3106 + $0xc] sm:$0xf]
        %v3111 = vld [vmem:[%s3106 + $0x10] sm:$0xf]
        %v3112 = vld [vmem:[%s3106 + $0x14] sm:$0xf]
        %v3113 = vld [vmem:[%s3106 + $0x18] sm:$0xf]
        %v3114 = vld [vmem:[%s3106 + $0x1c] sm:$0xf]
        %v3115 = vld [vmem:[%s3106 + $0x20] sm:$0xf]
        %v3116 = vld [vmem:[%s3106 + $0x24] sm:$0xf]
        %v3117 = vld [vmem:[%s3106 + $0x28] sm:$0xf]
        %v3118 = vld [vmem:[%s3106 + $0x2c] sm:$0xf]
        %v3119 = vld [vmem:[%s3106 + $0x30] sm:$0xf]
        %v3120 = vld [vmem:[%s3106 + $0x34] sm:$0xf]
        %v3135 = vunpack.c.l.b16 %v3107
        %v3136 = vunpack.c.l.b16 %v3108
        %v3137 = vunpack.c.l.b16 %v3109
        %v3138 = vunpack.c.l.b16 %v3110
        %v3139 = vunpack.c.l.b16 %v3111
        %v3140 = vunpack.c.l.b16 %v3112
        %v3141 = vunpack.c.l.b16 %v3113
        %v3142 = vunpack.c.l.b16 %v3114
        %v3143 = vunpack.c.l.b16 %v3115
        %v3144 = vunpack.c.l.b16 %v3116
        %v3145 = vunpack.c.l.b16 %v3117
        %v3146 = vunpack.c.l.b16 %v3118
        %v3147 = vunpack.c.l.b16 %v3119
        %v3148 = vunpack.c.l.b16 %v3120
        %v3149 = vpack.c.b16 %v3136, %v3135
        %v3150 = vpack.c.b16 %v3138, %v3137
        %v3151 = vpack.c.b16 %v3140, %v3139
        %v3152 = vpack.c.b16 %v3142, %v3141
        %v3153 = vpack.c.b16 %v3144, %v3143
        %v3154 = vpack.c.b16 %v3146, %v3145
        %v3155 = vpack.c.b16 %v3148, %v3147
        %vm3156 = vcmask 457728
        %v3158 = vsel %vm3156, %v3149, 0
        %v3161 = vsel %vm3156, %v3150, 0
        %v3164 = vsel %vm3156, %v3151, 0
        %v3167 = vsel %vm3156, %v3152, 0
        %v3170 = vsel %vm3156, %v3153, 0
        %v3173 = vsel %vm3156, %v3154, 0
        %v3176 = vsel %vm3156, %v3155, 0
        %vm3178 = vcmask 1043456
        %v3180 = vsel %vm3178, %v3090, 0
        %v3183 = vsel %vm3178, %v3091, 0
        %3185 = vmatprep.subr.bf16.mxu0 %v3085
        %3186 = vmatpush1.bf16.msra.mxu0 %v3084
        %3187 = vmatprep.subr.bf16.mxu0 %v3087
        %3188 = vmatpush1.bf16.msra.mxu0 %v3086
        %3189 = vmatprep.subr.bf16.mxu0 %v3089
        %3190 = vmatpush1.bf16.msra.mxu0 %v3088
        %3191 = vmatprep.subr.bf16.mxu0 %v3183
        %3192 = vmatpush1.bf16.msra.mxu0 %v3180
        %3193 = vmatprep.subr.bf16.mxu0 0
        %3194 = vmatpush1.bf16.msra.mxu0 0
        %3195 = vmatprep.subr.bf16.mxu0 0
        %3196 = vmatpush1.bf16.msra.mxu0 0
        %3197 = vmatprep.subr.bf16.mxu0 0
        %3198 = vmatpush1.bf16.msra.mxu0 0
        %3199 = vmatprep.subr.bf16.mxu0 0
        %3200 = vmatpush1.bf16.msra.mxu0 0
        %3201 = vmatprep.subr.bf16.mxu0 0
        %3202 = vmatpush1.bf16.msra.mxu0 0
        %3203 = vmatprep.subr.bf16.mxu0 0
        %3204 = vmatpush1.bf16.msra.mxu0 0
        %3205 = vmatprep.subr.bf16.mxu0 0
        %3206 = vmatpush1.bf16.msra.mxu0 0
        %3207 = vmatprep.subr.bf16.mxu0 0
        %3208 = vmatpush1.bf16.msra.mxu0 0
        %3209 = vmatprep.subr.bf16.mxu0 0
        %3210 = vmatpush1.bf16.msra.mxu0 0
        %3211 = vmatprep.subr.bf16.mxu0 0
        %3212 = vmatpush1.bf16.msra.mxu0 0
        %3213 = vmatprep.subr.bf16.mxu0 0
        %3214 = vmatpush1.bf16.msra.mxu0 0
        %3215 = vmatprep.subr.bf16.mxu0 0
        %3216 = vmatpush1.bf16.msra.mxu0 0
        %3217 = vmatprep.mubr.bf16.mxu0 0
        %3218 = vmatmul.mubr.bf16.gmra.mrb[0].mxu0 %v3158
        %v3219 = vpop.f32.mrb[0].mxu0
        %v3220 = vadd.f32 0.0, %v3219
        %v3221 = vpop.f32.mrb[0].mxu0
        %v3222 = vadd.f32 0.0, %v3221
        %v3223 = vpop.f32.mrb[0].mxu0
        %v3224 = vadd.f32 0.0, %v3223
        %v3225 = vpop.f32.mrb[0].mxu0
        %v3226 = vadd.f32 0.0, %v3225
        %3227 = vmatprep.mubr.bf16.mxu0 0
        %3228 = vmatmul.mubr.bf16.gmra.mrb[0].mxu0 %v3161
        %v3229 = vpop.f32.mrb[0].mxu0
        %v3230 = vadd.f32 0.0, %v3229
        %v3231 = vpop.f32.mrb[0].mxu0
        %v3232 = vadd.f32 0.0, %v3231
        %v3233 = vpop.f32.mrb[0].mxu0
        %v3234 = vadd.f32 0.0, %v3233
        %v3235 = vpop.f32.mrb[0].mxu0
        %v3236 = vadd.f32 0.0, %v3235
        %3237 = vmatprep.mubr.bf16.mxu0 0
        %3238 = vmatmul.mubr.bf16.gmra.mrb[0].mxu0 %v3164
        %v3239 = vpop.f32.mrb[0].mxu0
        %v3240 = vadd.f32 0.0, %v3239
        %v3241 = vpop.f32.mrb[0].mxu0
        %v3242 = vadd.f32 0.0, %v3241
        %v3243 = vpop.f32.mrb[0].mxu0
        %v3244 = vadd.f32 0.0, %v3243
        %v3245 = vpop.f32.mrb[0].mxu0
        %v3246 = vadd.f32 0.0, %v3245
        %3247 = vmatprep.mubr.bf16.mxu0 0
        %3248 = vmatmul.mubr.bf16.gmra.mrb[0].mxu0 %v3167
        %v3249 = vpop.f32.mrb[0].mxu0
        %v3250 = vadd.f32 0.0, %v3249
        %v3251 = vpop.f32.mrb[0].mxu0
        %v3252 = vadd.f32 0.0, %v3251
        %v3253 = vpop.f32.mrb[0].mxu0
        %v3254 = vadd.f32 0.0, %v3253
        %v3255 = vpop.f32.mrb[0].mxu0
        %v3256 = vadd.f32 0.0, %v3255
        %3257 = vmatprep.mubr.bf16.mxu0 0
        %3258 = vmatmul.mubr.bf16.gmra.mrb[0].mxu0 %v3170
        %v3259 = vpop.f32.mrb[0].mxu0
        %v3260 = vadd.f32 0.0, %v3259
        %v3261 = vpop.f32.mrb[0].mxu0
        %v3262 = vadd.f32 0.0, %v3261
        %v3263 = vpop.f32.mrb[0].mxu0
        %v3264 = vadd.f32 0.0, %v3263
        %v3265 = vpop.f32.mrb[0].mxu0
        %v3266 = vadd.f32 0.0, %v3265
        %3267 = vmatprep.mubr.bf16.mxu0 0
        %3268 = vmatmul.mubr.bf16.gmra.mrb[0].mxu0 %v3173
        %v3269 = vpop.f32.mrb[0].mxu0
        %v3270 = vadd.f32 0.0, %v3269
        %v3271 = vpop.f32.mrb[0].mxu0
        %v3272 = vadd.f32 0.0, %v3271
        %v3273 = vpop.f32.mrb[0].mxu0
        %v3274 = vadd.f32 0.0, %v3273
        %v3275 = vpop.f32.mrb[0].mxu0
        %v3276 = vadd.f32 0.0, %v3275
        %3277 = vmatprep.mubr.bf16.mxu0 0
        %3278 = vmatmul.mubr.bf16.gmra.mrb[0].mxu0 %v3176
        %v3279 = vpop.f32.mrb[0].mxu0
        %v3280 = vadd.f32 0.0, %v3279
        %v3281 = vpop.f32.mrb[0].mxu0
        %v3282 = vadd.f32 0.0, %v3281
        %v3283 = vpop.f32.mrb[0].mxu0
        %v3284 = vadd.f32 0.0, %v3283
        %v3285 = vpop.f32.mrb[0].mxu0
        %v3286 = vadd.f32 0.0, %v3285
        %3287 = vdwg.mxu0
        %v3302 = vunpack.c.l.b16 %v3092
        %v3303 = vunpack.c.l.b16 %v3093
        %v3304 = vunpack.c.l.b16 %v3094
        %v3305 = vunpack.c.l.b16 %v3095
        %v3306 = vunpack.c.l.b16 %v3096
        %v3307 = vunpack.c.l.b16 %v3097
        %v3308 = vunpack.c.l.b16 %v3098
        %v3309 = vunpack.c.l.b16 %v3099
        %v3310 = vunpack.c.l.b16 %v3100
        %v3311 = vunpack.c.l.b16 %v3101
        %v3312 = vunpack.c.l.b16 %v3102
        %v3313 = vunpack.c.l.b16 %v3103
        %v3314 = vunpack.c.l.b16 %v3104
        %v3315 = vunpack.c.l.b16 %v3105
        %v3316 = vpack.c.b16 %v3303, %v3302
        %v3317 = vpack.c.b16 %v3305, %v3304
        %v3318 = vpack.c.b16 %v3307, %v3306
        %v3319 = vpack.c.b16 %v3309, %v3308
        %v3320 = vpack.c.b16 %v3311, %v3310
        %v3321 = vpack.c.b16 %v3313, %v3312
        %v3322 = vpack.c.b16 %v3315, %v3314
        %v3324 = vsel %vm3156, %v3316, 0
        %v3327 = vsel %vm3156, %v3317, 0
        %v3330 = vsel %vm3156, %v3318, 0
        %v3333 = vsel %vm3156, %v3319, 0
        %v3336 = vsel %vm3156, %v3320, 0
        %v3339 = vsel %vm3156, %v3321, 0
        %v3342 = vsel %vm3156, %v3322, 0
        %v3345 = vsel %vm3178, %v3068, 0
        %v3348 = vsel %vm3178, %v3069, 0
        %3350 = vmatprep.subr.bf16.mxu0 %v3063
        %3351 = vmatpush1.bf16.msra.mxu0 %v3062
        %3352 = vmatprep.subr.bf16.mxu0 %v3065
        %3353 = vmatpush1.bf16.msra.mxu0 %v3064
        %3354 = vmatprep.subr.bf16.mxu0 %v3067
        %3355 = vmatpush1.bf16.msra.mxu0 %v3066
        %3356 = vmatprep.subr.bf16.mxu0 %v3348
        %3357 = vmatpush1.bf16.msra.mxu0 %v3345
        %3358 = vmatprep.subr.bf16.mxu0 0
        %3359 = vmatpush1.bf16.msra.mxu0 0
        %3360 = vmatprep.subr.bf16.mxu0 0
        %3361 = vmatpush1.bf16.msra.mxu0 0
        %3362 = vmatprep.subr.bf16.mxu0 0
        %3363 = vmatpush1.bf16.msra.mxu0 0
        %3364 = vmatprep.subr.bf16.mxu0 0
        %3365 = vmatpush1.bf16.msra.mxu0 0
        %3366 = vmatprep.subr.bf16.mxu0 0
        %3367 = vmatpush1.bf16.msra.mxu0 0
        %3368 = vmatprep.subr.bf16.mxu0 0
        %3369 = vmatpush1.bf16.msra.mxu0 0
        %3370 = vmatprep.subr.bf16.mxu0 0
        %3371 = vmatpush1.bf16.msra.mxu0 0
        %3372 = vmatprep.subr.bf16.mxu0 0
        %3373 = vmatpush1.bf16.msra.mxu0 0
        %3374 = vmatprep.subr.bf16.mxu0 0
        %3375 = vmatpush1.bf16.msra.mxu0 0
        %3376 = vmatprep.subr.bf16.mxu0 0
        %3377 = vmatpush1.bf16.msra.mxu0 0
        %3378 = vmatprep.subr.bf16.mxu0 0
        %3379 = vmatpush1.bf16.msra.mxu0 0
        %3380 = vmatprep.subr.bf16.mxu0 0
        %3381 = vmatpush1.bf16.msra.mxu0 0
        %3382 = vmatprep.mubr.bf16.mxu0 0
        %3383 = vmatmul.mubr.bf16.gmra.mrb[0].mxu0 %v3324
        %v3384 = vpop.f32.mrb[0].mxu0
        %v3385 = vadd.f32 %v3220, %v3384
        %v3386 = vpop.f32.mrb[0].mxu0
        %v3387 = vadd.f32 %v3222, %v3386
        %v3388 = vpop.f32.mrb[0].mxu0
        %v3389 = vadd.f32 %v3224, %v3388
        %v3390 = vpop.f32.mrb[0].mxu0
        %v3391 = vadd.f32 %v3226, %v3390
        %3392 = vmatprep.mubr.bf16.mxu0 0
        %3393 = vmatmul.mubr.bf16.gmra.mrb[0].mxu0 %v3327
        %v3394 = vpop.f32.mrb[0].mxu0
        %v3395 = vadd.f32 %v3230, %v3394
        %v3396 = vpop.f32.mrb[0].mxu0
        %v3397 = vadd.f32 %v3232, %v3396
        %v3398 = vpop.f32.mrb[0].mxu0
        %v3399 = vadd.f32 %v3234, %v3398
        %v3400 = vpop.f32.mrb[0].mxu0
        %v3401 = vadd.f32 %v3236, %v3400
        %3402 = vmatprep.mubr.bf16.mxu0 0
        %3403 = vmatmul.mubr.bf16.gmra.mrb[0].mxu0 %v3330
        %v3404 = vpop.f32.mrb[0].mxu0
        %v3405 = vadd.f32 %v3240, %v3404
        %v3406 = vpop.f32.mrb[0].mxu0
        %v3407 = vadd.f32 %v3242, %v3406
        %v3408 = vpop.f32.mrb[0].mxu0
        %v3409 = vadd.f32 %v3244, %v3408
        %v3410 = vpop.f32.mrb[0].mxu0
        %v3411 = vadd.f32 %v3246, %v3410
        %3412 = vmatprep.mubr.bf16.mxu0 0
        %3413 = vmatmul.mubr.bf16.gmra.mrb[0].mxu0 %v3333
        %v3414 = vpop.f32.mrb[0].mxu0
        %v3415 = vadd.f32 %v3250, %v3414
        %v3416 = vpop.f32.mrb[0].mxu0
        %v3417 = vadd.f32 %v3252, %v3416
        %v3418 = vpop.f32.mrb[0].mxu0
        %v3419 = vadd.f32 %v3254, %v3418
        %v3420 = vpop.f32.mrb[0].mxu0
        %v3421 = vadd.f32 %v3256, %v3420
        %3422 = vmatprep.mubr.bf16.mxu0 0
        %3423 = vmatmul.mubr.bf16.gmra.mrb[0].mxu0 %v3336
        %v3424 = vpop.f32.mrb[0].mxu0
        %v3425 = vadd.f32 %v3260, %v3424
        %v3426 = vpop.f32.mrb[0].mxu0
        %v3427 = vadd.f32 %v3262, %v3426
        %v3428 = vpop.f32.mrb[0].mxu0
        %v3429 = vadd.f32 %v3264, %v3428
        %v3430 = vpop.f32.mrb[0].mxu0
        %v3431 = vadd.f32 %v3266, %v3430
        %3432 = vmatprep.mubr.bf16.mxu0 0
        %3433 = vmatmul.mubr.bf16.gmra.mrb[0].mxu0 %v3339
        %v3434 = vpop.f32.mrb[0].mxu0
        %v3435 = vadd.f32 %v3270, %v3434
        %v3436 = vpop.f32.mrb[0].mxu0
        %v3437 = vadd.f32 %v3272, %v3436
        %v3438 = vpop.f32.mrb[0].mxu0
        %v3439 = vadd.f32 %v3274, %v3438
        %v3440 = vpop.f32.mrb[0].mxu0
        %v3441 = vadd.f32 %v3276, %v3440
        %3442 = vmatprep.mubr.bf16.mxu0 0
        %3443 = vmatmul.mubr.bf16.gmra.mrb[0].mxu0 %v3342
        %v3444 = vpop.f32.mrb[0].mxu0
        %v3445 = vadd.f32 %v3280, %v3444
        %v3446 = vpop.f32.mrb[0].mxu0
        %v3447 = vadd.f32 %v3282, %v3446
        %v3448 = vpop.f32.mrb[0].mxu0
        %v3449 = vadd.f32 %v3284, %v3448
        %v3450 = vpop.f32.mrb[0].mxu0
        %v3451 = vadd.f32 %v3286, %v3450
        %3452 = vdwg.mxu0
        %v3453 = vpack.c.bf16 %v3389, %v3385
        %v3454 = vpack.c.bf16 %v3391, %v3387
        %v3455 = vpack.c.bf16 %v3399, %v3395
        %v3456 = vpack.c.bf16 %v3401, %v3397
        %v3457 = vpack.c.bf16 %v3409, %v3405
        %v3458 = vpack.c.bf16 %v3411, %v3407
        %v3459 = vpack.c.bf16 %v3419, %v3415
        %v3460 = vpack.c.bf16 %v3421, %v3417
        %v3461 = vpack.c.bf16 %v3429, %v3425
        %v3462 = vpack.c.bf16 %v3431, %v3427
        %v3463 = vpack.c.bf16 %v3439, %v3435
        %v3464 = vpack.c.bf16 %v3441, %v3437
        %v3465 = vpack.c.bf16 %v3449, %v3445
        %v3466 = vpack.c.bf16 %v3451, %v3447
        %v3467 = vld [vmem:[#allocation10] sm:$0xff]
        %v3468 = vld [vmem:[#allocation10 + $0x8] sm:$0xf]
        %v3469 = vld [vmem:[#allocation10 + $0xc] sm:$0xff]
        %v3470 = vld [vmem:[#allocation10 + $0x14] sm:$0xf]
        %v3471 = vld [vmem:[#allocation10 + $0x18] sm:$0xff]
        %v3472 = vld [vmem:[#allocation10 + $0x20] sm:$0xf]
        %v3473 = vld [vmem:[#allocation10 + $0x24] sm:$0xff]
        %v3474 = vld [vmem:[#allocation10 + $0x2c] sm:$0xf]
        %v3475 = vld [vmem:[#allocation10 + $0x30] sm:$0xff]
        %v3476 = vld [vmem:[#allocation10 + $0x38] sm:$0xf]
        %v3477 = vld [vmem:[#allocation10 + $0x3c] sm:$0xff]
        %v3478 = vld [vmem:[#allocation10 + $0x44] sm:$0xf]
        %v3479 = vld [vmem:[#allocation10 + $0x48] sm:$0xff]
        %v3480 = vld [vmem:[#allocation10 + $0x50] sm:$0xf]
        %v3481 = vld [vmem:[#allocation10 + $0x54] sm:$0xff]
        %v3482 = vld [vmem:[#allocation10 + $0x5c] sm:$0xf]
        %v3483 = vld [vmem:[#allocation10 + $0x60] sm:$0xff]
        %v3484 = vld [vmem:[#allocation10 + $0x68] sm:$0xf]
        %v3485 = vld [vmem:[#allocation10 + $0x6c] sm:$0xff]
        %v3486 = vld [vmem:[#allocation10 + $0x74] sm:$0xf]
        %v3487 = vld [vmem:[#allocation10 + $0x78] sm:$0xff]
        %v3488 = vld [vmem:[#allocation10 + $0x80] sm:$0xf]
        %v3489 = vld [vmem:[#allocation10 + $0x84] sm:$0xff]
        %v3490 = vld [vmem:[#allocation10 + $0x8c] sm:$0xf]
        %v3491 = vld [vmem:[#allocation10 + $0x90] sm:$0xff]
        %v3492 = vld [vmem:[#allocation10 + $0x98] sm:$0xf]
        %v3493 = vld [vmem:[#allocation10 + $0x9c] sm:$0xff]
        %v3494 = vld [vmem:[#allocation10 + $0xa4] sm:$0xf]
        %v3495 = vld [vmem:[#allocation10 + $0xa8] sm:$0xff]
        %v3496 = vld [vmem:[#allocation10 + $0xb0] sm:$0xf]
        %v3497 = vld [vmem:[#allocation10 + $0xb4] sm:$0xff]
        %v3498 = vld [vmem:[#allocation10 + $0xbc] sm:$0xf]
        %v3499 = vld [vmem:[#allocation10 + $0xc0] sm:$0xff]
        %v3500 = vld [vmem:[#allocation10 + $0xc8] sm:$0xf]
        %v3501 = vld [vmem:[#allocation10 + $0xcc] sm:$0xff]
        %v3502 = vld [vmem:[#allocation10 + $0xd4] sm:$0xf]
        %v3503 = vld [vmem:[#allocation10 + $0xd8] sm:$0xff]
        %v3504 = vld [vmem:[#allocation10 + $0xe0] sm:$0xf]
        %v3505 = vld [vmem:[#allocation10 + $0xe4] sm:$0xff]
        %v3506 = vld [vmem:[#allocation10 + $0xec] sm:$0xf]
        %v3507 = vld [vmem:[#allocation10 + $0xf0] sm:$0xff]
        %v3508 = vld [vmem:[#allocation10 + $0xf8] sm:$0xf]
        %v3509 = vld [vmem:[#allocation10 + $0xfc] sm:$0xff]
        %v3510 = vld [vmem:[#allocation10 + $0x104] sm:$0xf]
        %v3511 = vld [vmem:[#allocation10 + $0x108] sm:$0xff]
        %v3512 = vld [vmem:[#allocation10 + $0x110] sm:$0xf]
        %v3513 = vld [vmem:[#allocation10 + $0x114] sm:$0xff]
        %v3514 = vld [vmem:[#allocation10 + $0x11c] sm:$0xf]
        %v3515 = vld [vmem:[#allocation10 + $0x120] sm:$0xff]
        %v3516 = vld [vmem:[#allocation10 + $0x128] sm:$0xf]
        %v3517 = vld [vmem:[#allocation10 + $0x12c] sm:$0xff]
        %v3518 = vld [vmem:[#allocation10 + $0x134] sm:$0xf]
        %v3519 = vld [vmem:[#allocation10 + $0x138] sm:$0xff]
        %v3520 = vld [vmem:[#allocation10 + $0x140] sm:$0xf]
        %v3521 = vld [vmem:[#allocation10 + $0x144] sm:$0xff]
        %v3522 = vld [vmem:[#allocation10 + $0x14c] sm:$0xf]
        %v3523 = vld [vmem:[#allocation10 + $0x150] sm:$0xff]
        %v3524 = vld [vmem:[#allocation10 + $0x158] sm:$0xf]
        %v3525 = vld [vmem:[#allocation10 + $0x15c] sm:$0xff]
        %v3526 = vld [vmem:[#allocation10 + $0x164] sm:$0xf]
        %v3527 = vld [vmem:[#allocation10 + $0x168] sm:$0xff]
        %v3528 = vld [vmem:[#allocation10 + $0x170] sm:$0xf]
        %v3529 = vld [vmem:[#allocation10 + $0x174] sm:$0xff]
        %v3530 = vld [vmem:[#allocation10 + $0x17c] sm:$0xf]
        %v3595 = vunpack.c.l.b16 %v3467
        %v3596 = vunpack.c.h.b16 %v3467
        %v3597 = vunpack.c.l.b16 %v3468
        %v3598 = vunpack.c.l.b16 %v3469
        %v3599 = vunpack.c.h.b16 %v3469
        %v3600 = vunpack.c.l.b16 %v3470
        %v3601 = vunpack.c.l.b16 %v3471
        %v3602 = vunpack.c.h.b16 %v3471
        %v3603 = vunpack.c.l.b16 %v3472
        %v3604 = vunpack.c.l.b16 %v3473
        %v3605 = vunpack.c.h.b16 %v3473
        %v3606 = vunpack.c.l.b16 %v3474
        %v3607 = vunpack.c.l.b16 %v3475
        %v3608 = vunpack.c.h.b16 %v3475
        %v3609 = vunpack.c.l.b16 %v3476
        %v3610 = vunpack.c.l.b16 %v3477
        %v3611 = vunpack.c.h.b16 %v3477
        %v3612 = vunpack.c.l.b16 %v3478
        %v3613 = vunpack.c.l.b16 %v3479
        %v3614 = vunpack.c.h.b16 %v3479
        %v3615 = vunpack.c.l.b16 %v3480
        %v3616 = vunpack.c.l.b16 %v3481
        %v3617 = vunpack.c.h.b16 %v3481
        %v3618 = vunpack.c.l.b16 %v3482
        %v3619 = vunpack.c.l.b16 %v3483
        %v3620 = vunpack.c.h.b16 %v3483
        %v3621 = vunpack.c.l.b16 %v3484
        %v3622 = vunpack.c.l.b16 %v3485
        %v3623 = vunpack.c.h.b16 %v3485
        %v3624 = vunpack.c.l.b16 %v3486
        %v3625 = vunpack.c.l.b16 %v3487
        %v3626 = vunpack.c.h.b16 %v3487
        %v3627 = vunpack.c.l.b16 %v3488
        %v3628 = vunpack.c.l.b16 %v3489
        %v3629 = vunpack.c.h.b16 %v3489
        %v3630 = vunpack.c.l.b16 %v3490
        %v3631 = vunpack.c.l.b16 %v3491
        %v3632 = vunpack.c.h.b16 %v3491
        %v3633 = vunpack.c.l.b16 %v3492
        %v3634 = vunpack.c.l.b16 %v3493
        %v3635 = vunpack.c.h.b16 %v3493
        %v3636 = vunpack.c.l.b16 %v3494
        %v3637 = vunpack.c.l.b16 %v3495
        %v3638 = vunpack.c.h.b16 %v3495
        %v3639 = vunpack.c.l.b16 %v3496
        %v3640 = vunpack.c.l.b16 %v3497
        %v3641 = vunpack.c.h.b16 %v3497
        %v3642 = vunpack.c.l.b16 %v3498
        %v3643 = vunpack.c.l.b16 %v3499
        %v3644 = vunpack.c.h.b16 %v3499
        %v3645 = vunpack.c.l.b16 %v3500
        %v3646 = vunpack.c.l.b16 %v3501
        %v3647 = vunpack.c.h.b16 %v3501
        %v3648 = vunpack.c.l.b16 %v3502
        %v3649 = vunpack.c.l.b16 %v3503
        %v3650 = vunpack.c.h.b16 %v3503
        %v3651 = vunpack.c.l.b16 %v3504
        %v3652 = vunpack.c.l.b16 %v3505
        %v3653 = vunpack.c.h.b16 %v3505
        %v3654 = vunpack.c.l.b16 %v3506
        %v3655 = vunpack.c.l.b16 %v3507
        %v3656 = vunpack.c.h.b16 %v3507
        %v3657 = vunpack.c.l.b16 %v3508
        %v3658 = vunpack.c.l.b16 %v3509
        %v3659 = vunpack.c.h.b16 %v3509
        %v3660 = vunpack.c.l.b16 %v3510
        %v3661 = vunpack.c.l.b16 %v3511
        %v3662 = vunpack.c.h.b16 %v3511
        %v3663 = vunpack.c.l.b16 %v3512
        %v3664 = vunpack.c.l.b16 %v3513
        %v3665 = vunpack.c.h.b16 %v3513
        %v3666 = vunpack.c.l.b16 %v3514
        %v3667 = vunpack.c.l.b16 %v3515
        %v3668 = vunpack.c.h.b16 %v3515
        %v3669 = vunpack.c.l.b16 %v3516
        %v3670 = vunpack.c.l.b16 %v3517
        %v3671 = vunpack.c.h.b16 %v3517
        %v3672 = vunpack.c.l.b16 %v3518
        %v3673 = vunpack.c.l.b16 %v3519
        %v3674 = vunpack.c.h.b16 %v3519
        %v3675 = vunpack.c.l.b16 %v3520
        %v3676 = vunpack.c.l.b16 %v3521
        %v3677 = vunpack.c.h.b16 %v3521
        %v3678 = vunpack.c.l.b16 %v3522
        %v3679 = vunpack.c.l.b16 %v3523
        %v3680 = vunpack.c.h.b16 %v3523
        %v3681 = vunpack.c.l.b16 %v3524
        %v3682 = vunpack.c.l.b16 %v3525
        %v3683 = vunpack.c.h.b16 %v3525
        %v3684 = vunpack.c.l.b16 %v3526
        %v3685 = vunpack.c.l.b16 %v3527
        %v3686 = vunpack.c.h.b16 %v3527
        %v3687 = vunpack.c.l.b16 %v3528
        %v3688 = vunpack.c.l.b16 %v3529
        %v3689 = vunpack.c.h.b16 %v3529
        %v3690 = vunpack.c.l.b16 %v3530
        %v3691 = vpack.c.b16 %v3598, %v3595
        %v3692 = vpack.c.b16 %v3599, %v3596
        %v3693 = vpack.c.b16 %v3600, %v3597
        %v3694 = vpack.c.b16 %v3604, %v3601
        %v3695 = vpack.c.b16 %v3605, %v3602
        %v3696 = vpack.c.b16 %v3606, %v3603
        %v3697 = vpack.c.b16 %v3610, %v3607
        %v3698 = vpack.c.b16 %v3611, %v3608
        %v3699 = vpack.c.b16 %v3612, %v3609
        %v3700 = vpack.c.b16 %v3616, %v3613
        %v3701 = vpack.c.b16 %v3617, %v3614
        %v3702 = vpack.c.b16 %v3618, %v3615
        %v3703 = vpack.c.b16 %v3622, %v3619
        %v3704 = vpack.c.b16 %v3623, %v3620
        %v3705 = vpack.c.b16 %v3624, %v3621
        %v3706 = vpack.c.b16 %v3628, %v3625
        %v3707 = vpack.c.b16 %v3629, %v3626
        %v3708 = vpack.c.b16 %v3630, %v3627
        %v3709 = vpack.c.b16 %v3634, %v3631
        %v3710 = vpack.c.b16 %v3635, %v3632
        %v3711 = vpack.c.b16 %v3636, %v3633
        %v3712 = vpack.c.b16 %v3640, %v3637
        %v3713 = vpack.c.b16 %v3641, %v3638
        %v3714 = vpack.c.b16 %v3642, %v3639
        %v3715 = vpack.c.b16 %v3646, %v3643
        %v3716 = vpack.c.b16 %v3647, %v3644
        %v3717 = vpack.c.b16 %v3648, %v3645
        %v3718 = vpack.c.b16 %v3652, %v3649
        %v3719 = vpack.c.b16 %v3653, %v3650
        %v3720 = vpack.c.b16 %v3654, %v3651
        %v3721 = vpack.c.b16 %v3658, %v3655
        %v3722 = vpack.c.b16 %v3659, %v3656
        %v3723 = vpack.c.b16 %v3660, %v3657
        %v3724 = vpack.c.b16 %v3664, %v3661
        %v3725 = vpack.c.b16 %v3665, %v3662
        %v3726 = vpack.c.b16 %v3666, %v3663
        %v3727 = vpack.c.b16 %v3670, %v3667
        %v3728 = vpack.c.b16 %v3671, %v3668
        %v3729 = vpack.c.b16 %v3672, %v3669
        %v3730 = vpack.c.b16 %v3676, %v3673
        %v3731 = vpack.c.b16 %v3677, %v3674
        %v3732 = vpack.c.b16 %v3678, %v3675
        %v3733 = vpack.c.b16 %v3682, %v3679
        %v3734 = vpack.c.b16 %v3683, %v3680
        %v3735 = vpack.c.b16 %v3684, %v3681
        %v3736 = vpack.c.b16 %v3688, %v3685
        %v3737 = vpack.c.b16 %v3689, %v3686
        %v3738 = vpack.c.b16 %v3690, %v3687
        %3787 = vmatprep.subr.bf16.mxu0 %v3692
        %3788 = vmatpush1.bf16.msra.mxu0 %v3691
        %3789 = vmatprep.subr.bf16.mxu0 %v3695
        %3790 = vmatpush1.bf16.msra.mxu0 %v3694
        %3791 = vmatprep.subr.bf16.mxu0 %v3698
        %3792 = vmatpush1.bf16.msra.mxu0 %v3697
        %3793 = vmatprep.subr.bf16.mxu0 %v3701
        %3794 = vmatpush1.bf16.msra.mxu0 %v3700
        %3795 = vmatprep.subr.bf16.mxu0 %v3704
        %3796 = vmatpush1.bf16.msra.mxu0 %v3703
        %3797 = vmatprep.subr.bf16.mxu0 %v3707
        %3798 = vmatpush1.bf16.msra.mxu0 %v3706
        %3799 = vmatprep.subr.bf16.mxu0 %v3710
        %3800 = vmatpush1.bf16.msra.mxu0 %v3709
        %3801 = vmatprep.subr.bf16.mxu0 %v3713
        %3802 = vmatpush1.bf16.msra.mxu0 %v3712
        %3803 = vmatprep.subr.bf16.mxu0 %v3716
        %3804 = vmatpush1.bf16.msra.mxu0 %v3715
        %3805 = vmatprep.subr.bf16.mxu0 %v3719
        %3806 = vmatpush1.bf16.msra.mxu0 %v3718
        %3807 = vmatprep.subr.bf16.mxu0 %v3722
        %3808 = vmatpush1.bf16.msra.mxu0 %v3721
        %3809 = vmatprep.subr.bf16.mxu0 %v3725
        %3810 = vmatpush1.bf16.msra.mxu0 %v3724
        %3811 = vmatprep.subr.bf16.mxu0 %v3728
        %3812 = vmatpush1.bf16.msra.mxu0 %v3727
        %3813 = vmatprep.subr.bf16.mxu0 %v3731
        %3814 = vmatpush1.bf16.msra.mxu0 %v3730
        %3815 = vmatprep.subr.bf16.mxu0 %v3734
        %3816 = vmatpush1.bf16.msra.mxu0 %v3733
        %3817 = vmatprep.subr.bf16.mxu0 %v3737
        %3818 = vmatpush1.bf16.msra.mxu0 %v3736
        %3819 = vmatprep.mubr.bf16.mxu0 %v3454
        %3820 = vmatmul.mubr.bf16.gmra.mrb[0].mxu0 %v3453
        %v3821 = vpop.f32.mrb[0].mxu0
        %v3822 = vadd.f32 0.0, %v3821
        %v3823 = vpop.f32.mrb[0].mxu0
        %v3824 = vadd.f32 0.0, %v3823
        %v3825 = vpop.f32.mrb[0].mxu0
        %v3826 = vadd.f32 0.0, %v3825
        %v3827 = vpop.f32.mrb[0].mxu0
        %v3828 = vadd.f32 0.0, %v3827
        %3829 = vmatprep.mubr.bf16.mxu0 %v3456
        %3830 = vmatmul.mubr.bf16.gmra.mrb[0].mxu0 %v3455
        %v3831 = vpop.f32.mrb[0].mxu0
        %v3832 = vadd.f32 0.0, %v3831
        %v3833 = vpop.f32.mrb[0].mxu0
        %v3834 = vadd.f32 0.0, %v3833
        %v3835 = vpop.f32.mrb[0].mxu0
        %v3836 = vadd.f32 0.0, %v3835
        %v3837 = vpop.f32.mrb[0].mxu0
        %v3838 = vadd.f32 0.0, %v3837
        %3839 = vmatprep.mubr.bf16.mxu0 %v3458
        %3840 = vmatmul.mubr.bf16.gmra.mrb[0].mxu0 %v3457
        %v3841 = vpop.f32.mrb[0].mxu0
        %v3842 = vadd.f32 0.0, %v3841
        %v3843 = vpop.f32.mrb[0].mxu0
        %v3844 = vadd.f32 0.0, %v3843
        %v3845 = vpop.f32.mrb[0].mxu0
        %v3846 = vadd.f32 0.0, %v3845
        %v3847 = vpop.f32.mrb[0].mxu0
        %v3848 = vadd.f32 0.0, %v3847
        %3849 = vmatprep.mubr.bf16.mxu0 %v3460
        %3850 = vmatmul.mubr.bf16.gmra.mrb[0].mxu0 %v3459
        %v3851 = vpop.f32.mrb[0].mxu0
        %v3852 = vadd.f32 0.0, %v3851
        %v3853 = vpop.f32.mrb[0].mxu0
        %v3854 = vadd.f32 0.0, %v3853
        %v3855 = vpop.f32.mrb[0].mxu0
        %v3856 = vadd.f32 0.0, %v3855
        %v3857 = vpop.f32.mrb[0].mxu0
        %v3858 = vadd.f32 0.0, %v3857
        %3859 = vmatprep.mubr.bf16.mxu0 %v3462
        %3860 = vmatmul.mubr.bf16.gmra.mrb[0].mxu0 %v3461
        %v3861 = vpop.f32.mrb[0].mxu0
        %v3862 = vadd.f32 0.0, %v3861
        %v3863 = vpop.f32.mrb[0].mxu0
        %v3864 = vadd.f32 0.0, %v3863
        %v3865 = vpop.f32.mrb[0].mxu0
        %v3866 = vadd.f32 0.0, %v3865
        %v3867 = vpop.f32.mrb[0].mxu0
        %v3868 = vadd.f32 0.0, %v3867
        %3869 = vmatprep.mubr.bf16.mxu0 %v3464
        %3870 = vmatmul.mubr.bf16.gmra.mrb[0].mxu0 %v3463
        %v3871 = vpop.f32.mrb[0].mxu0
        %v3872 = vadd.f32 0.0, %v3871
        %v3873 = vpop.f32.mrb[0].mxu0
        %v3874 = vadd.f32 0.0, %v3873
        %v3875 = vpop.f32.mrb[0].mxu0
        %v3876 = vadd.f32 0.0, %v3875
        %v3877 = vpop.f32.mrb[0].mxu0
        %v3878 = vadd.f32 0.0, %v3877
        %3879 = vmatprep.mubr.bf16.mxu0 %v3466
        %3880 = vmatmul.mubr.bf16.gmra.mrb[0].mxu0 %v3465
        %v3881 = vpop.f32.mrb[0].mxu0
        %v3882 = vadd.f32 0.0, %v3881
        %v3883 = vpop.f32.mrb[0].mxu0
        %v3884 = vadd.f32 0.0, %v3883
        %v3885 = vpop.f32.mrb[0].mxu0
        %v3886 = vadd.f32 0.0, %v3885
        %v3887 = vpop.f32.mrb[0].mxu0
        %v3888 = vadd.f32 0.0, %v3887
        %3889 = vdwg.mxu0
        %3890 = vmatprep.subr.bf16.mxu0 0
        %3891 = vmatpush1.bf16.msra.mxu0 %v3693
        %3892 = vmatprep.subr.bf16.mxu0 0
        %3893 = vmatpush1.bf16.msra.mxu0 %v3696
        %3894 = vmatprep.subr.bf16.mxu0 0
        %3895 = vmatpush1.bf16.msra.mxu0 %v3699
        %3896 = vmatprep.subr.bf16.mxu0 0
        %3897 = vmatpush1.bf16.msra.mxu0 %v3702
        %3898 = vmatprep.subr.bf16.mxu0 0
        %3899 = vmatpush1.bf16.msra.mxu0 %v3705
        %3900 = vmatprep.subr.bf16.mxu0 0
        %3901 = vmatpush1.bf16.msra.mxu0 %v3708
        %3902 = vmatprep.subr.bf16.mxu0 0
        %3903 = vmatpush1.bf16.msra.mxu0 %v3711
        %3904 = vmatprep.subr.bf16.mxu0 0
        %3905 = vmatpush1.bf16.msra.mxu0 %v3714
        %3906 = vmatprep.subr.bf16.mxu0 0
        %3907 = vmatpush1.bf16.msra.mxu0 %v3717
        %3908 = vmatprep.subr.bf16.mxu0 0
        %3909 = vmatpush1.bf16.msra.mxu0 %v3720
        %3910 = vmatprep.subr.bf16.mxu0 0
        %3911 = vmatpush1.bf16.msra.mxu0 %v3723
        %3912 = vmatprep.subr.bf16.mxu0 0
        %3913 = vmatpush1.bf16.msra.mxu0 %v3726
        %3914 = vmatprep.subr.bf16.mxu0 0
        %3915 = vmatpush1.bf16.msra.mxu0 %v3729
        %3916 = vmatprep.subr.bf16.mxu0 0
        %3917 = vmatpush1.bf16.msra.mxu0 %v3732
        %3918 = vmatprep.subr.bf16.mxu0 0
        %3919 = vmatpush1.bf16.msra.mxu0 %v3735
        %3920 = vmatprep.subr.bf16.mxu0 0
        %3921 = vmatpush1.bf16.msra.mxu0 %v3738
        %3922 = vmatprep.mubr.bf16.mxu0 %v3454
        %3923 = vmatmul.mubr.bf16.gmra.mrb[0].mxu0 %v3453
        %v3924 = vpop.f32.mrb[0].mxu0
        %v3925 = vadd.f32 0.0, %v3924
        %v3926 = vpop.f32.mrb[0].mxu0
        %v3927 = vpop.f32.mrb[0].mxu0
        %v3928 = vadd.f32 0.0, %v3927
        %v3929 = vpop.f32.mrb[0].mxu0
        %3930 = vmatprep.mubr.bf16.mxu0 %v3456
        %3931 = vmatmul.mubr.bf16.gmra.mrb[0].mxu0 %v3455
        %v3932 = vpop.f32.mrb[0].mxu0
        %v3933 = vadd.f32 0.0, %v3932
        %v3934 = vpop.f32.mrb[0].mxu0
        %v3935 = vpop.f32.mrb[0].mxu0
        %v3936 = vadd.f32 0.0, %v3935
        %v3937 = vpop.f32.mrb[0].mxu0
        %3938 = vmatprep.mubr.bf16.mxu0 %v3458
        %3939 = vmatmul.mubr.bf16.gmra.mrb[0].mxu0 %v3457
        %v3940 = vpop.f32.mrb[0].mxu0
        %v3941 = vadd.f32 0.0, %v3940
        %v3942 = vpop.f32.mrb[0].mxu0
        %v3943 = vpop.f32.mrb[0].mxu0
        %v3944 = vadd.f32 0.0, %v3943
        %v3945 = vpop.f32.mrb[0].mxu0
        %3946 = vmatprep.mubr.bf16.mxu0 %v3460
        %3947 = vmatmul.mubr.bf16.gmra.mrb[0].mxu0 %v3459
        %v3948 = vpop.f32.mrb[0].mxu0
        %v3949 = vadd.f32 0.0, %v3948
        %v3950 = vpop.f32.mrb[0].mxu0
        %v3951 = vpop.f32.mrb[0].mxu0
        %v3952 = vadd.f32 0.0, %v3951
        %v3953 = vpop.f32.mrb[0].mxu0
        %3954 = vmatprep.mubr.bf16.mxu0 %v3462
        %3955 = vmatmul.mubr.bf16.gmra.mrb[0].mxu0 %v3461
        %v3956 = vpop.f32.mrb[0].mxu0
        %v3957 = vadd.f32 0.0, %v3956
        %v3958 = vpop.f32.mrb[0].mxu0
        %v3959 = vpop.f32.mrb[0].mxu0
        %v3960 = vadd.f32 0.0, %v3959
        %v3961 = vpop.f32.mrb[0].mxu0
        %3962 = vmatprep.mubr.bf16.mxu0 %v3464
        %3963 = vmatmul.mubr.bf16.gmra.mrb[0].mxu0 %v3463
        %v3964 = vpop.f32.mrb[0].mxu0
        %v3965 = vadd.f32 0.0, %v3964
        %v3966 = vpop.f32.mrb[0].mxu0
        %v3967 = vpop.f32.mrb[0].mxu0
        %v3968 = vadd.f32 0.0, %v3967
        %v3969 = vpop.f32.mrb[0].mxu0
        %3970 = vmatprep.mubr.bf16.mxu0 %v3466
        %3971 = vmatmul.mubr.bf16.gmra.mrb[0].mxu0 %v3465
        %v3972 = vpop.f32.mrb[0].mxu0
        %v3973 = vadd.f32 0.0, %v3972
        %v3974 = vpop.f32.mrb[0].mxu0
        %v3975 = vpop.f32.mrb[0].mxu0
        %v3976 = vadd.f32 0.0, %v3975
        %v3977 = vpop.f32.mrb[0].mxu0
        %3978 = vdwg.mxu0
        %vm4021 = vcmask 1040384
        %v4022 = vrot.slane %v3822, 7
        %v4023 = vrot.slane %v3824, 7
        %v4024 = vrot.slane %v3925, 7
        %v4025 = vrot.slane %v3826, 7
        %v4026 = vsel %vm4021, %v4022, %v4025
        %v4027 = vrot.slane %v3828, 7
        %v4028 = vsel %vm4021, %v4023, %v4027
        %v4029 = vrot.slane %v3928, 7
        %v4030 = vsel %vm4021, %v4024, %v4029
        %v4031 = vrot.slane %v3832, 7
        %v4032 = vsel %vm4021, %v4025, %v4031
        %v4033 = vrot.slane %v3834, 7
        %v4034 = vsel %vm4021, %v4027, %v4033
        %v4035 = vrot.slane %v3933, 7
        %v4036 = vsel %vm4021, %v4029, %v4035
        %v4037 = vrot.slane %v3836, 7
        %v4038 = vsel %vm4021, %v4031, %v4037
        %v4039 = vrot.slane %v3838, 7
        %v4040 = vsel %vm4021, %v4033, %v4039
        %v4041 = vrot.slane %v3936, 7
        %v4042 = vsel %vm4021, %v4035, %v4041
        %v4043 = vrot.slane %v3842, 7
        %v4044 = vsel %vm4021, %v4037, %v4043
        %v4045 = vrot.slane %v3844, 7
        %v4046 = vsel %vm4021, %v4039, %v4045
        %v4047 = vrot.slane %v3941, 7
        %v4048 = vsel %vm4021, %v4041, %v4047
        %v4049 = vrot.slane %v3846, 7
        %v4050 = vsel %vm4021, %v4043, %v4049
        %v4051 = vrot.slane %v3848, 7
        %v4052 = vsel %vm4021, %v4045, %v4051
        %v4053 = vrot.slane %v3944, 7
        %v4054 = vsel %vm4021, %v4047, %v4053
        %v4055 = vrot.slane %v3852, 7
        %v4056 = vsel %vm4021, %v4049, %v4055
        %v4057 = vrot.slane %v3854, 7
        %v4058 = vsel %vm4021, %v4051, %v4057
        %v4059 = vrot.slane %v3949, 7
        %v4060 = vsel %vm4021, %v4053, %v4059
        %v4061 = vrot.slane %v3856, 7
        %v4062 = vsel %vm4021, %v4055, %v4061
        %v4063 = vrot.slane %v3858, 7
        %v4064 = vsel %vm4021, %v4057, %v4063
        %v4065 = vrot.slane %v3952, 7
        %v4066 = vsel %vm4021, %v4059, %v4065
        %v4067 = vrot.slane %v3862, 7
        %v4068 = vsel %vm4021, %v4061, %v4067
        %v4069 = vrot.slane %v3864, 7
        %v4070 = vsel %vm4021, %v4063, %v4069
        %v4071 = vrot.slane %v3957, 7
        %v4072 = vsel %vm4021, %v4065, %v4071
        %v4073 = vrot.slane %v3866, 7
        %v4074 = vsel %vm4021, %v4067, %v4073
        %v4075 = vrot.slane %v3868, 7
        %v4076 = vsel %vm4021, %v4069, %v4075
        %v4077 = vrot.slane %v3960, 7
        %v4078 = vsel %vm4021, %v4071, %v4077
        %v4079 = vrot.slane %v3872, 7
        %v4080 = vsel %vm4021, %v4073, %v4079
        %v4081 = vrot.slane %v3874, 7
        %v4082 = vsel %vm4021, %v4075, %v4081
        %v4083 = vrot.slane %v3965, 7
        %v4084 = vsel %vm4021, %v4077, %v4083
        %v4085 = vrot.slane %v3876, 7
        %v4086 = vsel %vm4021, %v4079, %v4085
        %v4087 = vrot.slane %v3878, 7
        %v4088 = vsel %vm4021, %v4081, %v4087
        %v4089 = vrot.slane %v3968, 7
        %v4090 = vsel %vm4021, %v4083, %v4089
        %v4091 = vrot.slane %v3882, 7
        %v4092 = vsel %vm4021, %v4085, %v4091
        %v4093 = vrot.slane %v3884, 7
        %v4094 = vsel %vm4021, %v4087, %v4093
        %v4095 = vrot.slane %v3973, 7
        %v4096 = vsel %vm4021, %v4089, %v4095
        %v4097 = vrot.slane %v3886, 7
        %v4098 = vsel %vm4021, %v4091, %v4097
        %v4099 = vrot.slane %v3888, 7
        %v4100 = vsel %vm4021, %v4093, %v4099
        %v4101 = vrot.slane %v3976, 7
        %v4102 = vsel %vm4021, %v4095, %v4101
        %4148 = vst [vmem:[#allocation4] sm:$0xfe] %v4022
        %4149 = vst [vmem:[#allocation4 + $0x8] sm:$0xfe] %v4023
        %4150 = vst [vmem:[#allocation4 + $0x10] sm:$0xfe] %v4024
        %4151 = vst [vmem:[#allocation4 + $0x18] sm:$0xff] %v4026
        %4152 = vst [vmem:[#allocation4 + $0x20] sm:$0xff] %v4028
        %4153 = vst [vmem:[#allocation4 + $0x28] sm:$0xff] %v4030
        %4154 = vst [vmem:[#allocation4 + $0x30] sm:$0xff] %v4032
        %4155 = vst [vmem:[#allocation4 + $0x38] sm:$0xff] %v4034
        %4156 = vst [vmem:[#allocation4 + $0x40] sm:$0xff] %v4036
        %4157 = vst [vmem:[#allocation4 + $0x48] sm:$0xff] %v4038
        %4158 = vst [vmem:[#allocation4 + $0x50] sm:$0xff] %v4040
        %4159 = vst [vmem:[#allocation4 + $0x58] sm:$0xff] %v4042
        %4160 = vst [vmem:[#allocation4 + $0x60] sm:$0xff] %v4044
        %4161 = vst [vmem:[#allocation4 + $0x68] sm:$0xff] %v4046
        %4162 = vst [vmem:[#allocation4 + $0x70] sm:$0xff] %v4048
        %4163 = vst [vmem:[#allocation4 + $0x78] sm:$0xff] %v4050
        %4164 = vst [vmem:[#allocation4 + $0x80] sm:$0xff] %v4052
        %4165 = vst [vmem:[#allocation4 + $0x88] sm:$0xff] %v4054
        %4166 = vst [vmem:[#allocation4 + $0x90] sm:$0xff] %v4056
        %4167 = vst [vmem:[#allocation4 + $0x98] sm:$0xff] %v4058
        %4168 = vst [vmem:[#allocation4 + $0xa0] sm:$0xff] %v4060
        %4169 = vst [vmem:[#allocation4 + $0xa8] sm:$0xff] %v4062
        %4170 = vst [vmem:[#allocation4 + $0xb0] sm:$0xff] %v4064
        %4171 = vst [vmem:[#allocation4 + $0xb8] sm:$0xff] %v4066
        %4172 = vst [vmem:[#allocation4 + $0xc0] sm:$0xff] %v4068
        %4173 = vst [vmem:[#allocation4 + $0xc8] sm:$0xff] %v4070
        %4174 = vst [vmem:[#allocation4 + $0xd0] sm:$0xff] %v4072
        %4175 = vst [vmem:[#allocation4 + $0xd8] sm:$0xff] %v4074
        %4176 = vst [vmem:[#allocation4 + $0xe0] sm:$0xff] %v4076
        %4177 = vst [vmem:[#allocation4 + $0xe8] sm:$0xff] %v4078
        %4178 = vst [vmem:[#allocation4 + $0xf0] sm:$0xff] %v4080
        %4179 = vst [vmem:[#allocation4 + $0xf8] sm:$0xff] %v4082
        %4180 = vst [vmem:[#allocation4 + $0x100] sm:$0xff] %v4084
        %4181 = vst [vmem:[#allocation4 + $0x108] sm:$0xff] %v4086
        %4182 = vst [vmem:[#allocation4 + $0x110] sm:$0xff] %v4088
        %4183 = vst [vmem:[#allocation4 + $0x118] sm:$0xff] %v4090
        %4184 = vst [vmem:[#allocation4 + $0x120] sm:$0xff] %v4092
        %4185 = vst [vmem:[#allocation4 + $0x128] sm:$0xff] %v4094
        %4186 = vst [vmem:[#allocation4 + $0x130] sm:$0xff] %v4096
        %4187 = vst [vmem:[#allocation4 + $0x138] sm:$0xff] %v4098
        %4188 = vst [vmem:[#allocation4 + $0x140] sm:$0xff] %v4100
        %4189 = vst [vmem:[#allocation4 + $0x148] sm:$0xff] %v4102
        %4190 = vst [vmem:[#allocation4 + $0x150] sm:$0x1] %v4097
        %4191 = vst [vmem:[#allocation4 + $0x158] sm:$0x1] %v4099
        %4192 = vst [vmem:[#allocation4 + $0x160] sm:$0x1] %v4101
        %v4193 = vld [vmem:[#allocation4] sm:$0xff]
        %v4194 = vld [vmem:[#allocation4 + $0x18] sm:$0xff]
        %v4195 = vld [vmem:[#allocation4 + $0x30] sm:$0xff]
        %v4196 = vld [vmem:[#allocation4 + $0x48] sm:$0xff]
        %v4197 = vld [vmem:[#allocation4 + $0x60] sm:$0xff]
        %v4198 = vld [vmem:[#allocation4 + $0x78] sm:$0xff]
        %v4199 = vld [vmem:[#allocation4 + $0x90] sm:$0xff]
        %v4200 = vld [vmem:[#allocation4 + $0xa8] sm:$0xff]
        %v4201 = vld [vmem:[#allocation4 + $0xc0] sm:$0xff]
        %v4202 = vld [vmem:[#allocation4 + $0xd8] sm:$0xff]
        %v4203 = vld [vmem:[#allocation4 + $0xf0] sm:$0xff]
        %v4204 = vld [vmem:[#allocation4 + $0x108] sm:$0xff]
        %v4205 = vld [vmem:[#allocation4 + $0x120] sm:$0xff]
        %v4206 = vld [vmem:[#allocation4 + $0x138] sm:$0xff]
        %v4207 = vld [vmem:[#allocation4 + $0x10] sm:$0xfc]
        %v4208 = vld [vmem:[#allocation4 + $0x28] sm:$0xff]
        %v4209 = vld [vmem:[#allocation4 + $0x40] sm:$0xff]
        %v4210 = vld [vmem:[#allocation4 + $0x58] sm:$0xff]
        %v4211 = vld [vmem:[#allocation4 + $0x70] sm:$0xff]
        %v4212 = vld [vmem:[#allocation4 + $0x88] sm:$0xff]
        %v4213 = vld [vmem:[#allocation4 + $0xa0] sm:$0xff]
        %v4214 = vld [vmem:[#allocation4 + $0xb8] sm:$0xff]
        %v4215 = vld [vmem:[#allocation4 + $0xd0] sm:$0xff]
        %v4216 = vld [vmem:[#allocation4 + $0xe8] sm:$0xff]
        %v4217 = vld [vmem:[#allocation4 + $0x100] sm:$0xff]
        %v4218 = vld [vmem:[#allocation4 + $0x118] sm:$0xff]
        %v4219 = vld [vmem:[#allocation4 + $0x130] sm:$0xff]
        %v4220 = vld [vmem:[#allocation4 + $0x148] sm:$0xff]
        %v4221 = vld [vmem:[#allocation4 + $0x160] sm:$0x3]
        %v4222 = vadd.s32 %v512, 56
        %v4223 = vadd.s32 %v512, 64
        %v4224 = vadd.s32 %v512, 72
        %v4225 = vadd.s32 %v512, 80
        %v4226 = vadd.s32 %v512, 88
        %v4227 = vadd.s32 %v512, 96
        %v4228 = vadd.s32 %v512, 104
        %vm4229 = vcmp.ne.s32.totalorder %v512, 0
        %vm4230 = vcmp.ne.s32.totalorder %v513, 0
        %vm4231 = vcmp.ne.s32.totalorder %v514, 0
        %vm4232 = vcmp.ne.s32.totalorder %v515, 0
        %vm4233 = vcmp.ne.s32.totalorder %v1859, 0
        %vm4234 = vcmp.ne.s32.totalorder %v1860, 0
        %vm4235 = vcmp.ne.s32.totalorder %v1861, 0
        %vm4236 = vcmp.ne.s32.totalorder %v4222, 0
        %vm4237 = vcmp.ne.s32.totalorder %v4223, 0
        %vm4238 = vcmp.ne.s32.totalorder %v4224, 0
        %vm4239 = vcmp.ne.s32.totalorder %v4225, 0
        %vm4240 = vcmp.ne.s32.totalorder %v4226, 0
        %vm4241 = vcmp.ne.s32.totalorder %v4227, 0
        %vm4242 = vcmp.ne.s32.totalorder %v4228, 0
        %vm4243 = vcmp.ne.s32.totalorder %v4222, 27
        %vm4244 = vcmp.ne.s32.totalorder %v4223, 27
        %vm4245 = vcmp.ne.s32.totalorder %v4224, 27
        %vm4246 = vcmp.ne.s32.totalorder %v4225, 27
        %vm4247 = vcmp.ne.s32.totalorder %v4226, 27
        %vm4248 = vcmp.ne.s32.totalorder %v4227, 27
        %vm4249 = vcmp.ne.s32.totalorder %v4228, 27
        %vm4250 = vcmp.ne.s32.totalorder %v512, 28
        %vm4251 = vcmp.ne.s32.totalorder %v513, 28
        %vm4252 = vcmp.ne.s32.totalorder %v514, 28
        %vm4253 = vcmp.ne.s32.totalorder %v515, 28
        %vm4254 = vcmp.ne.s32.totalorder %v1859, 28
        %vm4255 = vcmp.ne.s32.totalorder %v1860, 28
        %vm4256 = vcmp.ne.s32.totalorder %v1861, 28
        %vm4257 = vcmp.ne.s32.totalorder %v4222, 28
        %vm4258 = vcmp.ne.s32.totalorder %v4223, 28
        %vm4259 = vcmp.ne.s32.totalorder %v4224, 28
        %vm4260 = vcmp.ne.s32.totalorder %v4225, 28
        %vm4261 = vcmp.ne.s32.totalorder %v4226, 28
        %vm4262 = vcmp.ne.s32.totalorder %v4227, 28
        %vm4263 = vcmp.ne.s32.totalorder %v4228, 28
        %vm4264 = vmand %vm4229, %vm4250
        %vm4265 = vmand %vm4230, %vm4251
        %vm4266 = vmand %vm4231, %vm4252
        %vm4267 = vmand %vm4232, %vm4253
        %vm4268 = vmand %vm4233, %vm4254
        %vm4269 = vmand %vm4234, %vm4255
        %vm4270 = vmand %vm4235, %vm4256
        %vm4271 = vmand %vm4236, %vm4257
        %vm4272 = vmand %vm4237, %vm4258
        %vm4273 = vmand %vm4238, %vm4259
        %vm4274 = vmand %vm4239, %vm4260
        %vm4275 = vmand %vm4240, %vm4261
        %vm4276 = vmand %vm4241, %vm4262
        %vm4277 = vmand %vm4242, %vm4263
        %vm4278 = vcmp.ne.s32.totalorder %v4222, 55
        %vm4279 = vcmp.ne.s32.totalorder %v4223, 55
        %vm4280 = vcmp.ne.s32.totalorder %v4224, 55
        %vm4281 = vcmp.ne.s32.totalorder %v4225, 55
        %vm4282 = vcmp.ne.s32.totalorder %v4226, 55
        %vm4283 = vcmp.ne.s32.totalorder %v4227, 55
        %vm4284 = vcmp.ne.s32.totalorder %v4228, 55
        %vm4285 = vmand %vm536, %vm1889
        %vm4286 = vmand %vm537, %vm1890
        %vm4287 = vmand %vm538, %vm1891
        %vm4288 = vmand %vm539, %vm1892
        %vm4289 = vmand %vm1865, %vm1893
        %vm4290 = vmand %vm1866, %vm1894
        %vm4291 = vmand %vm1867, %vm1895
        %vm4292 = vmand %vm4243, %vm4278
        %vm4293 = vmand %vm4244, %vm4279
        %vm4294 = vmand %vm4245, %vm4280
        %vm4295 = vmand %vm4246, %vm4281
        %vm4296 = vmand %vm4247, %vm4282
        %vm4297 = vmand %vm4248, %vm4283
        %vm4298 = vmand %vm4249, %vm4284
        %vm4299 = vcmp.ne.s32.totalorder %v512, 56
        %vm4300 = vcmp.ne.s32.totalorder %v513, 56
        %vm4301 = vcmp.ne.s32.totalorder %v514, 56
        %vm4302 = vcmp.ne.s32.totalorder %v515, 56
        %vm4303 = vcmp.ne.s32.totalorder %v1859, 56
        %vm4304 = vcmp.ne.s32.totalorder %v1860, 56
        %vm4305 = vcmp.ne.s32.totalorder %v1861, 56
        %vm4306 = vcmp.ne.s32.totalorder %v4222, 56
        %vm4307 = vcmp.ne.s32.totalorder %v4223, 56
        %vm4308 = vcmp.ne.s32.totalorder %v4224, 56
        %vm4309 = vcmp.ne.s32.totalorder %v4225, 56
        %vm4310 = vcmp.ne.s32.totalorder %v4226, 56
        %vm4311 = vcmp.ne.s32.totalorder %v4227, 56
        %vm4312 = vcmp.ne.s32.totalorder %v4228, 56
        %vm4313 = vmand %vm4264, %vm4299
        %vm4314 = vmand %vm4265, %vm4300
        %vm4315 = vmand %vm4266, %vm4301
        %vm4316 = vmand %vm4267, %vm4302
        %vm4317 = vmand %vm4268, %vm4303
        %vm4318 = vmand %vm4269, %vm4304
        %vm4319 = vmand %vm4270, %vm4305
        %vm4320 = vmand %vm4271, %vm4306
        %vm4321 = vmand %vm4272, %vm4307
        %vm4322 = vmand %vm4273, %vm4308
        %vm4323 = vmand %vm4274, %vm4309
        %vm4324 = vmand %vm4275, %vm4310
        %vm4325 = vmand %vm4276, %vm4311
        %vm4326 = vmand %vm4277, %vm4312
        %vm4327 = vcmp.ne.s32.totalorder %v512, 83
        %vm4328 = vcmp.ne.s32.totalorder %v513, 83
        %vm4329 = vcmp.ne.s32.totalorder %v514, 83
        %vm4330 = vcmp.ne.s32.totalorder %v515, 83
        %vm4331 = vcmp.ne.s32.totalorder %v1859, 83
        %vm4332 = vcmp.ne.s32.totalorder %v1860, 83
        %vm4333 = vcmp.ne.s32.totalorder %v1861, 83
        %vm4334 = vcmp.ne.s32.totalorder %v4222, 83
        %vm4335 = vcmp.ne.s32.totalorder %v4223, 83
        %vm4336 = vcmp.ne.s32.totalorder %v4224, 83
        %vm4337 = vcmp.ne.s32.totalorder %v4225, 83
        %vm4338 = vcmp.ne.s32.totalorder %v4226, 83
        %vm4339 = vcmp.ne.s32.totalorder %v4227, 83
        %vm4340 = vcmp.ne.s32.totalorder %v4228, 83
        %vm4341 = vmand %vm4285, %vm4327
        %vm4342 = vmand %vm4286, %vm4328
        %vm4343 = vmand %vm4287, %vm4329
        %vm4344 = vmand %vm4288, %vm4330
        %vm4345 = vmand %vm4289, %vm4331
        %vm4346 = vmand %vm4290, %vm4332
        %vm4347 = vmand %vm4291, %vm4333
        %vm4348 = vmand %vm4292, %vm4334
        %vm4349 = vmand %vm4293, %vm4335
        %vm4350 = vmand %vm4294, %vm4336
        %vm4351 = vmand %vm4295, %vm4337
        %vm4352 = vmand %vm4296, %vm4338
        %vm4353 = vmand %vm4297, %vm4339
        %vm4354 = vmand %vm4298, %vm4340
        %vm4355 = vcmp.ne.s32.totalorder %v512, 84
        %vm4356 = vcmp.ne.s32.totalorder %v513, 84
        %vm4357 = vcmp.ne.s32.totalorder %v514, 84
        %vm4358 = vcmp.ne.s32.totalorder %v515, 84
        %vm4359 = vcmp.ne.s32.totalorder %v1859, 84
        %vm4360 = vcmp.ne.s32.totalorder %v1860, 84
        %vm4361 = vcmp.ne.s32.totalorder %v1861, 84
        %vm4362 = vcmp.ne.s32.totalorder %v4222, 84
        %vm4363 = vcmp.ne.s32.totalorder %v4223, 84
        %vm4364 = vcmp.ne.s32.totalorder %v4224, 84
        %vm4365 = vcmp.ne.s32.totalorder %v4225, 84
        %vm4366 = vcmp.ne.s32.totalorder %v4226, 84
        %vm4367 = vcmp.ne.s32.totalorder %v4227, 84
        %vm4368 = vcmp.ne.s32.totalorder %v4228, 84
        %vm4369 = vmand %vm4313, %vm4355
        %vm4370 = vmand %vm4314, %vm4356
        %vm4371 = vmand %vm4315, %vm4357
        %vm4372 = vmand %vm4316, %vm4358
        %vm4373 = vmand %vm4317, %vm4359
        %vm4374 = vmand %vm4318, %vm4360
        %vm4375 = vmand %vm4319, %vm4361
        %vm4376 = vmand %vm4320, %vm4362
        %vm4377 = vmand %vm4321, %vm4363
        %vm4378 = vmand %vm4322, %vm4364
        %vm4379 = vmand %vm4323, %vm4365
        %vm4380 = vmand %vm4324, %vm4366
        %vm4381 = vmand %vm4325, %vm4367
        %vm4382 = vmand %vm4326, %vm4368
        %vm4383 = vcmp.ne.s32.totalorder %v512, 111
        %vm4384 = vcmp.ne.s32.totalorder %v513, 111
        %vm4385 = vcmp.ne.s32.totalorder %v514, 111
        %vm4386 = vcmp.ne.s32.totalorder %v515, 111
        %vm4387 = vcmp.ne.s32.totalorder %v1859, 111
        %vm4388 = vcmp.ne.s32.totalorder %v1860, 111
        %vm4389 = vcmp.ne.s32.totalorder %v1861, 111
        %vm4390 = vcmp.ne.s32.totalorder %v4222, 111
        %vm4391 = vcmp.ne.s32.totalorder %v4223, 111
        %vm4392 = vcmp.ne.s32.totalorder %v4224, 111
        %vm4393 = vcmp.ne.s32.totalorder %v4225, 111
        %vm4394 = vcmp.ne.s32.totalorder %v4226, 111
        %vm4395 = vcmp.ne.s32.totalorder %v4227, 111
        %vm4396 = vcmp.ne.s32.totalorder %v4228, 111
        %vm4397 = vmand %vm4341, %vm4383
        %vm4398 = vmand %vm4342, %vm4384
        %vm4399 = vmand %vm4343, %vm4385
        %vm4400 = vmand %vm4344, %vm4386
        %vm4401 = vmand %vm4345, %vm4387
        %vm4402 = vmand %vm4346, %vm4388
        %vm4403 = vmand %vm4347, %vm4389
        %vm4404 = vmand %vm4348, %vm4390
        %vm4405 = vmand %vm4349, %vm4391
        %vm4406 = vmand %vm4350, %vm4392
        %vm4407 = vmand %vm4351, %vm4393
        %vm4408 = vmand %vm4352, %vm4394
        %vm4409 = vmand %vm4353, %vm4395
        %vm4410 = vmand %vm4354, %vm4396
        %v4411 = vsel %vm4369, %v4193, 0.0
        %v4412 = vsel %vm4370, %v4194, 0.0
        %v4413 = vsel %vm4371, %v4195, 0.0
        %v4414 = vsel %vm4372, %v4196, 0.0
        %v4415 = vsel %vm4373, %v4197, 0.0
        %v4416 = vsel %vm4374, %v4198, 0.0
        %v4417 = vsel %vm4375, %v4199, 0.0
        %v4418 = vsel %vm4376, %v4200, 0.0
        %v4419 = vsel %vm4377, %v4201, 0.0
        %v4420 = vsel %vm4378, %v4202, 0.0
        %v4421 = vsel %vm4379, %v4203, 0.0
        %v4422 = vsel %vm4380, %v4204, 0.0
        %v4423 = vsel %vm4381, %v4205, 0.0
        %v4424 = vsel %vm4382, %v4206, 0.0
        %v4425 = vadd.f32 %v4411, %v3824
        %v4426 = vadd.f32 %v4412, %v3828
        %v4427 = vadd.f32 %v4413, %v3834
        %v4428 = vadd.f32 %v4414, %v3838
        %v4429 = vadd.f32 %v4415, %v3844
        %v4430 = vadd.f32 %v4416, %v3848
        %v4431 = vadd.f32 %v4417, %v3854
        %v4432 = vadd.f32 %v4418, %v3858
        %v4433 = vadd.f32 %v4419, %v3864
        %v4434 = vadd.f32 %v4420, %v3868
        %v4435 = vadd.f32 %v4421, %v3874
        %v4436 = vadd.f32 %v4422, %v3878
        %v4437 = vadd.f32 %v4423, %v3884
        %v4438 = vadd.f32 %v4424, %v3888
        %v4454 = vrot.slane %v4207, 2
        %v4455 = vrot.slane %v4208, 2
        %v4456 = vsel %vm1644, %v4454, %v4455
        %v4457 = vrot.slane %v4209, 2
        %v4458 = vsel %vm1644, %v4455, %v4457
        %v4459 = vrot.slane %v4210, 2
        %v4460 = vsel %vm1644, %v4457, %v4459
        %v4461 = vrot.slane %v4211, 2
        %v4462 = vsel %vm1644, %v4459, %v4461
        %v4463 = vrot.slane %v4212, 2
        %v4464 = vsel %vm1644, %v4461, %v4463
        %v4465 = vrot.slane %v4213, 2
        %v4466 = vsel %vm1644, %v4463, %v4465
        %v4467 = vrot.slane %v4214, 2
        %v4468 = vsel %vm1644, %v4465, %v4467
        %v4469 = vrot.slane %v4215, 2
        %v4470 = vsel %vm1644, %v4467, %v4469
        %v4471 = vrot.slane %v4216, 2
        %v4472 = vsel %vm1644, %v4469, %v4471
        %v4473 = vrot.slane %v4217, 2
        %v4474 = vsel %vm1644, %v4471, %v4473
        %v4475 = vrot.slane %v4218, 2
        %v4476 = vsel %vm1644, %v4473, %v4475
        %v4477 = vrot.slane %v4219, 2
        %v4478 = vsel %vm1644, %v4475, %v4477
        %v4479 = vrot.slane %v4220, 2
        %v4480 = vsel %vm1644, %v4477, %v4479
        %v4481 = vrot.slane %v4221, 2
        %v4482 = vsel %vm1644, %v4479, %v4481
        %v4497 = vsel %vm4397, %v4456, 0.0
        %v4498 = vsel %vm4398, %v4458, 0.0
        %v4499 = vsel %vm4399, %v4460, 0.0
        %v4500 = vsel %vm4400, %v4462, 0.0
        %v4501 = vsel %vm4401, %v4464, 0.0
        %v4502 = vsel %vm4402, %v4466, 0.0
        %v4503 = vsel %vm4403, %v4468, 0.0
        %v4504 = vsel %vm4404, %v4470, 0.0
        %v4505 = vsel %vm4405, %v4472, 0.0
        %v4506 = vsel %vm4406, %v4474, 0.0
        %v4507 = vsel %vm4407, %v4476, 0.0
        %v4508 = vsel %vm4408, %v4478, 0.0
        %v4509 = vsel %vm4409, %v4480, 0.0
        %v4510 = vsel %vm4410, %v4482, 0.0
        %v4511 = vadd.f32 %v4425, %v4497
        %v4512 = vadd.f32 %v4426, %v4498
        %v4513 = vadd.f32 %v4427, %v4499
        %v4514 = vadd.f32 %v4428, %v4500
        %v4515 = vadd.f32 %v4429, %v4501
        %v4516 = vadd.f32 %v4430, %v4502
        %v4517 = vadd.f32 %v4431, %v4503
        %v4518 = vadd.f32 %v4432, %v4504
        %v4519 = vadd.f32 %v4433, %v4505
        %v4520 = vadd.f32 %v4434, %v4506
        %v4521 = vadd.f32 %v4435, %v4507
        %v4522 = vadd.f32 %v4436, %v4508
        %v4523 = vadd.f32 %v4437, %v4509
        %v4524 = vadd.f32 %v4438, %v4510
        %v4525 = vtanh.pop %v4511
        %v4526 = vtanh.pop %v4512
        %v4527 = vtanh.pop %v4513
        %v4528 = vtanh.pop %v4514
        %v4529 = vtanh.pop %v4515
        %v4530 = vtanh.pop %v4516
        %v4531 = vtanh.pop %v4517
        %v4532 = vtanh.pop %v4518
        %v4533 = vtanh.pop %v4519
        %v4534 = vtanh.pop %v4520
        %v4535 = vtanh.pop %v4521
        %v4536 = vtanh.pop %v4522
        %v4537 = vtanh.pop %v4523
        %v4538 = vtanh.pop %v4524
        %4539 = vst [vmem:[%s315] sm:$0xff] %v4525
        %4540 = vst [vmem:[%s315 + $0x8] sm:$0xff] %v4526
        %4541 = vst [vmem:[%s315 + $0x10] sm:$0xff] %v4527
        %4542 = vst [vmem:[%s315 + $0x18] sm:$0xff] %v4528
        %4543 = vst [vmem:[%s315 + $0x20] sm:$0xff] %v4529
        %4544 = vst [vmem:[%s315 + $0x28] sm:$0xff] %v4530
        %4545 = vst [vmem:[%s315 + $0x30] sm:$0xff] %v4531
        %4546 = vst [vmem:[%s315 + $0x38] sm:$0xff] %v4532
        %4547 = vst [vmem:[%s315 + $0x40] sm:$0xff] %v4533
        %4548 = vst [vmem:[%s315 + $0x48] sm:$0xff] %v4534
        %4549 = vst [vmem:[%s315 + $0x50] sm:$0xff] %v4535
        %4550 = vst [vmem:[%s315 + $0x58] sm:$0xff] %v4536
        %4551 = vst [vmem:[%s315 + $0x60] sm:$0xff] %v4537
        %4552 = vst [vmem:[%s315 + $0x68] sm:$0xff] %v4538
        %s4553 = sand.u32 %s183, 1
        %s4554 = scalar_lea.sflag [#allocation7], %s4553
        %s4555 = sand.u32 %s183, 1
        %s4556 = smul.addr %s4555, 112
        %s4557 = scalar_lea.vmem [#allocation11], %s4556
        // Predicated region
        $region61: #{tpu_custom_call.1} parent=47 // pred_check
          %p4558 = pneg %p193
        $region62: #{tpu_custom_call.1} parent=47 // pred_check_branch
          %4560 = sbr.rel (%p4558) target = $region64
        $region63: #{tpu_custom_call.1} parent=47 // pred_region
          %s4562 = ssub.s32 1792, 1792
          %4563 = vsyncadd %s4554, %s4562
          %s4564 = smul.addr %s23, 14
          %s4565 = smul.addr %s4564, 128
          %s4566 = scalar_lea.hbm %s7, %s4565
          %s4567 = sshll.u32 %s4557, 4
          %s4568 = int_to_ptr.vmem [resolvable:$true] %s4567
          %4573 = dma.vmem_to_hbm [thread:$0]  %s4568, 1792, %s4566, %s4554, 128, 128, 8
        $region64: #{tpu_custom_call.1} parent=47 // pred_fallthru
          _
      $region48: #{tpu_custom_call.1} parent=5 // pred_fallthru
        _
      %p4574 = scmp.le.s32.totalorder 2, %s18
      // Predicated region
      $region65: #{tpu_custom_call.1} parent=5 // pred_check
        %p4575 = pneg %p4574
      $region66: #{tpu_custom_call.1} parent=5 // pred_check_branch
        %4577 = sbr.rel (%p4575) target = $region68
      $region67: #{tpu_custom_call.1} parent=5 // pred_region
        %s4578 = ssub.s32 %s18, 2
        // Predicated region
        $region69: #{tpu_custom_call.1} parent=67 // pred_check
          %p4579 = pneg %p199
        $region70: #{tpu_custom_call.1} parent=67 // pred_check_branch
          %4581 = sbr.rel (%p4579) target = $region72
        $region71: #{tpu_custom_call.1} parent=67 // pred_region
          %s4582 = sand.u32 %s184, 1
          %s4583 = scalar_lea.sflag [#allocation7], %s4582
          %s4584 = sand.u32 %s184, 1
          %s4585 = smul.addr %s4584, 112
          %s4586 = scalar_lea.vmem [#allocation11], %s4585
          %4587 = dma.done %s4583, 1792
        $region72: #{tpu_custom_call.1} parent=67 // pred_fallthru
          _
      $region68: #{tpu_custom_call.1} parent=5 // pred_fallthru
        _
    $region6: #{tpu_custom_call.1} parent=1 // loop_footer
      %s22 = sadd.s32 1, %s18
    $region7: #{tpu_custom_call.1} parent=1 // loop_footer_branch
      %17 = sbr.rel target = $region3
    $region8: #{tpu_custom_call.1} parent=1 // loop_exit
      _
    %4588 = vsyncpa [#allocation6], 1
    %s4589 = scalar_lea.sflag [#allocation6], 1
    %4590 = vsyncpa %s4589, 1
    %4591 = vsyncpa [#allocation9], 1
    %4592 = vsyncpa [#allocation7], 1
    %s4593 = scalar_lea.sflag [#allocation7], 1
    %4594 = vsyncpa %s4593, 1

</llo_original>
